<compile_context>
chip_gen: v7x
topology: tpu7x:2x2x1
jax: 0.10.0
libtpu: 0.0.40
codegen_flags: <defaults>
</compile_context>

<pallas_src>
import math
import functools

import jax
import jax.numpy as jnp
from jax import lax
from jax.experimental import pallas as pl
from jax.experimental.pallas import tpu as pltpu


# ------------------------------ fused kernel -------------------------------- #

def _encoder_kernel(x_ref, sel_ref, colp_ref,
                    wqkv_ref, bqkv_ref, w1_ref, b1_ref, w2_ref, b2_ref,
                    gamma_ref, beta_ref, o_ref, *,
                    num_layers, num_heads, head_dim, eps):
    # x_ref:    (1, S, D)      activation block for one batch element
    # sel_ref:  (H, S, H*S)    row-selection matrices for the torch reshape
    # colp_ref: (H, hd, D)     column-placement matrices for the torch reshape
    # weights:  stacked along a leading layer axis, fully VMEM-resident
    S = x_ref.shape[1]
    D = x_ref.shape[2]
    inv_sqrt_hd = 1.0 / math.sqrt(head_dim)

    x = x_ref[0].astype(jnp.float32)                       # (S, D)

    for l in range(num_layers):                            # unrolled, static
        wqkv = wqkv_ref[l]                                 # (D, 3D)
        bqkv = bqkv_ref[l]                                 # (1, 3D)
        w1 = w1_ref[l]                                     # (D, Hf)
        b1 = b1_ref[l]                                     # (1, Hf)
        w2 = w2_ref[l]                                     # (Hf, D)
        b2 = b2_ref[l]                                     # (1, D)
        gamma = gamma_ref[l]                               # (1, D)
        beta = beta_ref[l]                                 # (1, D)

        resid = x

        # ---- multi-head self-attention (no mask on the Encoder path) ----
        qkv = jnp.dot(x, wqkv, preferred_element_type=jnp.float32) + bqkv  # (S, 3D)

        heads = []
        for h in range(num_heads):                         # unrolled, static slices
            base = 3 * head_dim * h
            q = qkv[:, base:base + head_dim] * inv_sqrt_hd
            k = qkv[:, base + head_dim:base + 2 * head_dim]
            v = qkv[:, base + 2 * head_dim:base + 3 * head_dim]

            # contract last dims of q and k -> (S, S); no transpose materialized
            s = lax.dot_general(q, k, (((1,), (1,)), ((), ())),
                                preferred_element_type=jnp.float32)
            s = s - jnp.max(s, axis=-1, keepdims=True)
            p = jnp.exp(s)
            den = jnp.sum(p, axis=-1, keepdims=True)
            inv = pl.reciprocal(den, approx=True)          # EUP
            inv = inv * (2.0 - den * inv)                  # one Newton step (accuracy)
            p = p * inv
            heads.append(jnp.dot(p, v, preferred_element_type=jnp.float32))  # (S, hd)

        vals_flat = jnp.concatenate(heads, axis=0)         # (H*S, hd), head-major

        # torch-faithful reshape (H,S,hd) -> (S, H*hd) done as MXU permutation
        # matmuls:  vals = sum_j  sel[j] @ vals_flat @ colp[j]
        vals = jnp.zeros((S, D), jnp.float32)
        for j in range(num_heads):
            blk = jnp.dot(sel_ref[j], vals_flat,
                          preferred_element_type=jnp.float32)            # (S, hd)
            vals = vals + jnp.dot(blk, colp_ref[j],
                                  preferred_element_type=jnp.float32)    # (S, D)

        # ---- residual add + LayerNorm 1 ----
        z = resid + vals
        mu = jnp.mean(z, axis=-1, keepdims=True)
        var = jnp.mean((z - mu) ** 2, axis=-1, keepdims=True)
        x1 = gamma * ((z - mu) * lax.rsqrt(var + eps)) + beta

        # ---- FFN + residual add + LayerNorm 2 ----
        hmid = jnp.dot(x1, w1, preferred_element_type=jnp.float32) + b1
        hmid = jnp.maximum(hmid, 0.0)                                     # ReLU
        f = jnp.dot(hmid, w2, preferred_element_type=jnp.float32) + b2
        z2 = f + x1
        mu2 = jnp.mean(z2, axis=-1, keepdims=True)
        var2 = jnp.mean((z2 - mu2) ** 2, axis=-1, keepdims=True)
        x = gamma * ((z2 - mu2) * lax.rsqrt(var2 + eps)) + beta

    o_ref[0] = x.astype(o_ref.dtype)


# ----------------------------- encoder wrapper ------------------------------ #

def encoder_forward(x, params, num_heads, eps=1e-5):
    B, S, D = x.shape
    assert D % num_heads == 0
    hd = D // num_heads
    L = len(params)
    Hf = params[0]["w1"].shape[1]

    # Stack per-layer weights along a leading layer axis (all VMEM-resident).
    wqkv = jnp.stack([p["wqkv"] for p in params])      # (L, D, 3D)
    bqkv = jnp.stack([p["bqkv"] for p in params])      # (L, 1, 3D)
    w1 = jnp.stack([p["w1"] for p in params])          # (L, D, Hf)
    b1 = jnp.stack([p["b1"] for p in params])          # (L, 1, Hf)
    w2 = jnp.stack([p["w2"] for p in params])          # (L, Hf, D)
    b2 = jnp.stack([p["b2"] for p in params])          # (L, 1, D)
    gamma = jnp.stack([p["gamma"] for p in params])    # (L, 1, D)
    beta = jnp.stack([p["beta"] for p in params])      # (L, 1, D)

    # Permutation constants implementing torch's (B,H,S,hd)->(B,S,D) reshape.
    sel = jax.nn.one_hot(
        jnp.arange(S)[None, :] * num_heads + jnp.arange(num_heads)[:, None],
        num_heads * S, dtype=jnp.float32)               # (H, S, H*S)
    colp = jax.nn.one_hot(
        jnp.arange(hd)[None, :] + hd * jnp.arange(num_heads)[:, None],
        D, dtype=jnp.float32)                           # (H, hd, D)

    kernel = functools.partial(_encoder_kernel, num_layers=L,
                               num_heads=num_heads, head_dim=hd, eps=eps)

    def rep_spec(arr):
        n = arr.ndim
        return pl.BlockSpec(arr.shape, lambda b, _n=n: (0,) * _n)

    return pl.pallas_call(
        kernel,
        out_shape=jax.ShapeDtypeStruct((B, S, D), x.dtype),
        grid_spec=pltpu.PrefetchScalarGridSpec(
            num_scalar_prefetch=0,
            grid=(B,),
            in_specs=[
                pl.BlockSpec((1, S, D), lambda b: (b, 0, 0)),
                rep_spec(sel), rep_spec(colp),
                rep_spec(wqkv), rep_spec(bqkv),
                rep_spec(w1), rep_spec(b1), rep_spec(w2), rep_spec(b2),
                rep_spec(gamma), rep_spec(beta),
            ],
            out_specs=pl.BlockSpec((1, S, D), lambda b: (b, 0, 0)),
        ),
        compiler_params=pltpu.CompilerParams(
            dimension_semantics=("parallel",)),   # v7x: one batch per TensorCore
    )(x, sel, colp, wqkv, bqkv, w1, b1, w2, b2, gamma, beta)


# -------------------------------- reference --------------------------------- #

def ref_encoder(x, params, num_heads):
    for p in params:
        B, S, D = x.shape
        hd = D // num_heads
        resid = x
        qkv = x @ p["wqkv"] + p["bqkv"][0]
        qkv = qkv.reshape(B, S, num_heads, 3 * hd).transpose(0, 2, 1, 3)
        q, k, v = qkv[..., :hd], qkv[..., hd:2 * hd], qkv[..., 2 * hd:]
        s = jnp.einsum("bhqd,bhkd->bhqk", q, k) / math.sqrt(hd)
        a = jax.nn.softmax(s, axis=-1)
        # torch-style reshape (no transpose back) -> scrambled layout
        vals = jnp.einsum("bhqk,bhkd->bhqd", a, v).reshape(B, S, D)

        def ln(z):
            m = z.mean(-1, keepdims=True)
            var = ((z - m) ** 2).mean(-1, keepdims=True)
            return p["gamma"][0] * (z - m) / jnp.sqrt(var + 1e-5) + p["beta"][0]

        x1 = ln(resid + vals)
        h = jax.nn.relu(x1 @ p["w1"] + p["b1"][0])
        f = h @ p["w2"] + p["b2"][0]
        x = ln(f + x1)
    return x


# ---------------------------------- main ------------------------------------ #

def init_params(key, d_model, ffn_hidden, num_layers):
    params = []
    for _ in range(num_layers):
        key, k1, k2, k3, k4, k5, k6 = jax.random.split(key, 7)
        params.append({
            "wqkv": jax.random.normal(k1, (d_model, 3 * d_model), jnp.float32)
                    / math.sqrt(d_model),
            "bqkv": jax.random.normal(k2, (1, 3 * d_model), jnp.float32) * 0.01,
            "w1": jax.random.normal(k3, (d_model, ffn_hidden), jnp.float32)
                  / math.sqrt(d_model),
            "b1": jax.random.normal(k4, (1, ffn_hidden), jnp.float32) * 0.01,
            "w2": jax.random.normal(k5, (ffn_hidden, d_model), jnp.float32)
                  / math.sqrt(ffn_hidden),
            "b2": jax.random.normal(k6, (1, d_model), jnp.float32) * 0.01,
            "gamma": jnp.ones((1, d_model), jnp.float32),
            "beta": jnp.zeros((1, d_model), jnp.float32),
        })
    return params


if __name__ == "__main__":
    # Small shapes consistent with the module (d_model divisible by num_heads).
    batch, seq, d_model, num_heads, ffn_hidden, num_layers = 2, 8, 32, 4, 64, 2

    key = jax.random.PRNGKey(0)
    key, xk = jax.random.split(key)
    x = jax.random.normal(xk, (batch, seq, d_model), jnp.float32)
    params = init_params(key, d_model, ffn_hidden, num_layers)

    out = encoder_forward(x, params, num_heads)
    out = jax.block_until_ready(out)

    ref = ref_encoder(x, params, num_heads)
    assert out.shape == (batch, seq, d_model)
    assert jnp.allclose(out, ref, atol=1e-3, rtol=1e-3), "mismatch vs reference"

    print("KERNEL_OK")
</pallas_src>

<mosaic_0001>
module attributes {stable_mosaic.version = 11 : i64} {
  func.func @_encoder_kernel(%arg0: i32, %arg1: memref<1x8x32xf32, #tpu.memory_space<vmem>>, %arg2: memref<4x8x32xf32, #tpu.memory_space<vmem>>, %arg3: memref<4x8x32xf32, #tpu.memory_space<vmem>>, %arg4: memref<2x32x96xf32, #tpu.memory_space<vmem>>, %arg5: memref<2x1x96xf32, #tpu.memory_space<vmem>>, %arg6: memref<2x32x64xf32, #tpu.memory_space<vmem>>, %arg7: memref<2x1x64xf32, #tpu.memory_space<vmem>>, %arg8: memref<2x64x32xf32, #tpu.memory_space<vmem>>, %arg9: memref<2x1x32xf32, #tpu.memory_space<vmem>>, %arg10: memref<2x1x32xf32, #tpu.memory_space<vmem>>, %arg11: memref<2x1x32xf32, #tpu.memory_space<vmem>>, %arg12: memref<1x8x32xf32, #tpu.memory_space<vmem>>) attributes {dimension_semantics = [#tpu.dimension_semantics<parallel>], iteration_bounds = array<i64: 2>, scalar_prefetch = 0 : i64, scratch_operands = 0 : i64, tpu.core_type = #tpu.core_type<tc>, window_params = [{transform_indices = @transform_0, window_bounds = array<i64: 1, 8, 32>}, {pipeline_mode = #tpu.pipeline_mode<synchronous>, transform_indices = @transform_1, window_bounds = array<i64: 4, 8, 32>}, {pipeline_mode = #tpu.pipeline_mode<synchronous>, transform_indices = @transform_2, window_bounds = array<i64: 4, 8, 32>}, {pipeline_mode = #tpu.pipeline_mode<synchronous>, transform_indices = @transform_3, window_bounds = array<i64: 2, 32, 96>}, {pipeline_mode = #tpu.pipeline_mode<synchronous>, transform_indices = @transform_4, window_bounds = array<i64: 2, 1, 96>}, {pipeline_mode = #tpu.pipeline_mode<synchronous>, transform_indices = @transform_5, window_bounds = array<i64: 2, 32, 64>}, {pipeline_mode = #tpu.pipeline_mode<synchronous>, transform_indices = @transform_6, window_bounds = array<i64: 2, 1, 64>}, {pipeline_mode = #tpu.pipeline_mode<synchronous>, transform_indices = @transform_7, window_bounds = array<i64: 2, 64, 32>}, {pipeline_mode = #tpu.pipeline_mode<synchronous>, transform_indices = @transform_8, window_bounds = array<i64: 2, 1, 32>}, {pipeline_mode = #tpu.pipeline_mode<synchronous>, transform_indices = @transform_9, window_bounds = array<i64: 2, 1, 32>}, {pipeline_mode = #tpu.pipeline_mode<synchronous>, transform_indices = @transform_10, window_bounds = array<i64: 2, 1, 32>}, {transform_indices = @transform_11, window_bounds = array<i64: 1, 8, 32>}]} {
    %c0 = arith.constant 0 : index
    %c0_0 = arith.constant 0 : index
    %c0_1 = arith.constant 0 : index
    %0 = vector.load %arg1[%c0, %c0_0, %c0_1] : memref<1x8x32xf32, #tpu.memory_space<vmem>>, vector<1x8x32xf32>
    %1 = vector.shape_cast %0 : vector<1x8x32xf32> to vector<8x32xf32>
    %c0_2 = arith.constant 0 : index
    %c0_3 = arith.constant 0 : index
    %c0_4 = arith.constant 0 : index
    %2 = vector.load %arg4[%c0_2, %c0_3, %c0_4] : memref<2x32x96xf32, #tpu.memory_space<vmem>>, vector<1x32x96xf32>
    %3 = vector.shape_cast %2 : vector<1x32x96xf32> to vector<32x96xf32>
    %c0_5 = arith.constant 0 : index
    %c0_6 = arith.constant 0 : index
    %c0_7 = arith.constant 0 : index
    %4 = vector.load %arg5[%c0_5, %c0_6, %c0_7] : memref<2x1x96xf32, #tpu.memory_space<vmem>>, vector<1x1x96xf32>
    %5 = vector.shape_cast %4 : vector<1x1x96xf32> to vector<1x96xf32>
    %c0_8 = arith.constant 0 : index
    %c0_9 = arith.constant 0 : index
    %c0_10 = arith.constant 0 : index
    %6 = vector.load %arg6[%c0_8, %c0_9, %c0_10] : memref<2x32x64xf32, #tpu.memory_space<vmem>>, vector<1x32x64xf32>
    %7 = vector.shape_cast %6 : vector<1x32x64xf32> to vector<32x64xf32>
    %c0_11 = arith.constant 0 : index
    %c0_12 = arith.constant 0 : index
    %c0_13 = arith.constant 0 : index
    %8 = vector.load %arg7[%c0_11, %c0_12, %c0_13] : memref<2x1x64xf32, #tpu.memory_space<vmem>>, vector<1x1x64xf32>
    %9 = vector.shape_cast %8 : vector<1x1x64xf32> to vector<1x64xf32>
    %c0_14 = arith.constant 0 : index
    %c0_15 = arith.constant 0 : index
    %c0_16 = arith.constant 0 : index
    %10 = vector.load %arg8[%c0_14, %c0_15, %c0_16] : memref<2x64x32xf32, #tpu.memory_space<vmem>>, vector<1x64x32xf32>
    %11 = vector.shape_cast %10 : vector<1x64x32xf32> to vector<64x32xf32>
    %c0_17 = arith.constant 0 : index
    %c0_18 = arith.constant 0 : index
    %c0_19 = arith.constant 0 : index
    %12 = vector.load %arg9[%c0_17, %c0_18, %c0_19] : memref<2x1x32xf32, #tpu.memory_space<vmem>>, vector<1x1x32xf32>
    %13 = vector.shape_cast %12 : vector<1x1x32xf32> to vector<1x32xf32>
    %c0_20 = arith.constant 0 : index
    %c0_21 = arith.constant 0 : index
    %c0_22 = arith.constant 0 : index
    %14 = vector.load %arg10[%c0_20, %c0_21, %c0_22] : memref<2x1x32xf32, #tpu.memory_space<vmem>>, vector<1x1x32xf32>
    %15 = vector.shape_cast %14 : vector<1x1x32xf32> to vector<1x32xf32>
    %c0_23 = arith.constant 0 : index
    %c0_24 = arith.constant 0 : index
    %c0_25 = arith.constant 0 : index
    %16 = vector.load %arg11[%c0_23, %c0_24, %c0_25] : memref<2x1x32xf32, #tpu.memory_space<vmem>>, vector<1x1x32xf32>
    %17 = vector.shape_cast %16 : vector<1x1x32xf32> to vector<1x32xf32>
    %cst = arith.constant dense<0.000000e+00> : vector<8x96xf32>
    %18 = tpu.matmul %1, %3, %cst {dimension_numbers = #tpu.dot_dimension_numbers<[1], [0], [0], [1], [0, 0, 1, 1], [], []>} : vector<8x32xf32>, vector<32x96xf32>, vector<8x96xf32> -> vector<8x96xf32>
    %19 = vector.broadcast %5 : vector<1x96xf32> to vector<8x96xf32>
    %20 = arith.addf %18, %19 : vector<8x96xf32>
    %21 = vector.extract_strided_slice %20 {offsets = [0, 0], sizes = [8, 8], strides = [1, 1]} : vector<8x96xf32> to vector<8x8xf32>
    %cst_26 = arith.constant 0.353553385 : f32
    %22 = vector.broadcast %cst_26 : f32 to vector<8x8xf32>
    %23 = arith.mulf %21, %22 : vector<8x8xf32>
    %24 = vector.extract_strided_slice %20 {offsets = [0, 8], sizes = [8, 8], strides = [1, 1]} : vector<8x96xf32> to vector<8x8xf32>
    %25 = vector.extract_strided_slice %20 {offsets = [0, 16], sizes = [8, 8], strides = [1, 1]} : vector<8x96xf32> to vector<8x8xf32>
    %cst_27 = arith.constant dense<0.000000e+00> : vector<8x8xf32>
    %26 = tpu.matmul %23, %24, %cst_27 {dimension_numbers = #tpu.dot_dimension_numbers<[1], [1], [0], [0], [0, 0, 1, 0], [], []>} : vector<8x8xf32>, vector<8x8xf32>, vector<8x8xf32> -> vector<8x8xf32>
    %cst_28 = arith.constant dense<0xFF800000> : vector<8xf32>
    %27 = vector.multi_reduction <maximumf>, %26, %cst_28 [1] : vector<8x8xf32> to vector<8xf32>
    %28 = vector.shape_cast %27 : vector<8xf32> to vector<8x1xf32>
    %29 = vector.broadcast %28 : vector<8x1xf32> to vector<8x8xf32>
    %30 = arith.subf %26, %29 : vector<8x8xf32>
    %31 = math.exp %30 : vector<8x8xf32>
    %cst_29 = arith.constant dense<0.000000e+00> : vector<8xf32>
    %32 = vector.multi_reduction <add>, %31, %cst_29 [1] : vector<8x8xf32> to vector<8xf32>
    %33 = vector.shape_cast %32 : vector<8xf32> to vector<8x1xf32>
    %34 = tpu.reciprocal %33 {approx = true} : vector<8x1xf32> -> vector<8x1xf32>
    %35 = arith.mulf %33, %34 : vector<8x1xf32>
    %cst_30 = arith.constant 2.000000e+00 : f32
    %36 = vector.broadcast %cst_30 : f32 to vector<8x1xf32>
    %37 = arith.subf %36, %35 : vector<8x1xf32>
    %38 = arith.mulf %34, %37 : vector<8x1xf32>
    %39 = vector.broadcast %38 : vector<8x1xf32> to vector<8x8xf32>
    %40 = arith.mulf %31, %39 : vector<8x8xf32>
    %cst_31 = arith.constant dense<0.000000e+00> : vector<8x8xf32>
    %41 = tpu.matmul %40, %25, %cst_31 {dimension_numbers = #tpu.dot_dimension_numbers<[1], [0], [0], [1], [0, 0, 1, 1], [], []>} : vector<8x8xf32>, vector<8x8xf32>, vector<8x8xf32> -> vector<8x8xf32>
    %42 = vector.extract_strided_slice %20 {offsets = [0, 24], sizes = [8, 8], strides = [1, 1]} : vector<8x96xf32> to vector<8x8xf32>
    %cst_32 = arith.constant 0.353553385 : f32
    %43 = vector.broadcast %cst_32 : f32 to vector<8x8xf32>
    %44 = arith.mulf %42, %43 : vector<8x8xf32>
    %45 = vector.extract_strided_slice %20 {offsets = [0, 32], sizes = [8, 8], strides = [1, 1]} : vector<8x96xf32> to vector<8x8xf32>
    %46 = vector.extract_strided_slice %20 {offsets = [0, 40], sizes = [8, 8], strides = [1, 1]} : vector<8x96xf32> to vector<8x8xf32>
    %cst_33 = arith.constant dense<0.000000e+00> : vector<8x8xf32>
    %47 = tpu.matmul %44, %45, %cst_33 {dimension_numbers = #tpu.dot_dimension_numbers<[1], [1], [0], [0], [0, 0, 1, 0], [], []>} : vector<8x8xf32>, vector<8x8xf32>, vector<8x8xf32> -> vector<8x8xf32>
    %cst_34 = arith.constant dense<0xFF800000> : vector<8xf32>
    %48 = vector.multi_reduction <maximumf>, %47, %cst_34 [1] : vector<8x8xf32> to vector<8xf32>
    %49 = vector.shape_cast %48 : vector<8xf32> to vector<8x1xf32>
    %50 = vector.broadcast %49 : vector<8x1xf32> to vector<8x8xf32>
    %51 = arith.subf %47, %50 : vector<8x8xf32>
    %52 = math.exp %51 : vector<8x8xf32>
    %cst_35 = arith.constant dense<0.000000e+00> : vector<8xf32>
    %53 = vector.multi_reduction <add>, %52, %cst_35 [1] : vector<8x8xf32> to vector<8xf32>
    %54 = vector.shape_cast %53 : vector<8xf32> to vector<8x1xf32>
    %55 = tpu.reciprocal %54 {approx = true} : vector<8x1xf32> -> vector<8x1xf32>
    %56 = arith.mulf %54, %55 : vector<8x1xf32>
    %cst_36 = arith.constant 2.000000e+00 : f32
    %57 = vector.broadcast %cst_36 : f32 to vector<8x1xf32>
    %58 = arith.subf %57, %56 : vector<8x1xf32>
    %59 = arith.mulf %55, %58 : vector<8x1xf32>
    %60 = vector.broadcast %59 : vector<8x1xf32> to vector<8x8xf32>
    %61 = arith.mulf %52, %60 : vector<8x8xf32>
    %cst_37 = arith.constant dense<0.000000e+00> : vector<8x8xf32>
    %62 = tpu.matmul %61, %46, %cst_37 {dimension_numbers = #tpu.dot_dimension_numbers<[1], [0], [0], [1], [0, 0, 1, 1], [], []>} : vector<8x8xf32>, vector<8x8xf32>, vector<8x8xf32> -> vector<8x8xf32>
    %63 = vector.extract_strided_slice %20 {offsets = [0, 48], sizes = [8, 8], strides = [1, 1]} : vector<8x96xf32> to vector<8x8xf32>
    %cst_38 = arith.constant 0.353553385 : f32
    %64 = vector.broadcast %cst_38 : f32 to vector<8x8xf32>
    %65 = arith.mulf %63, %64 : vector<8x8xf32>
    %66 = vector.extract_strided_slice %20 {offsets = [0, 56], sizes = [8, 8], strides = [1, 1]} : vector<8x96xf32> to vector<8x8xf32>
    %67 = vector.extract_strided_slice %20 {offsets = [0, 64], sizes = [8, 8], strides = [1, 1]} : vector<8x96xf32> to vector<8x8xf32>
    %cst_39 = arith.constant dense<0.000000e+00> : vector<8x8xf32>
    %68 = tpu.matmul %65, %66, %cst_39 {dimension_numbers = #tpu.dot_dimension_numbers<[1], [1], [0], [0], [0, 0, 1, 0], [], []>} : vector<8x8xf32>, vector<8x8xf32>, vector<8x8xf32> -> vector<8x8xf32>
    %cst_40 = arith.constant dense<0xFF800000> : vector<8xf32>
    %69 = vector.multi_reduction <maximumf>, %68, %cst_40 [1] : vector<8x8xf32> to vector<8xf32>
    %70 = vector.shape_cast %69 : vector<8xf32> to vector<8x1xf32>
    %71 = vector.broadcast %70 : vector<8x1xf32> to vector<8x8xf32>
    %72 = arith.subf %68, %71 : vector<8x8xf32>
    %73 = math.exp %72 : vector<8x8xf32>
    %cst_41 = arith.constant dense<0.000000e+00> : vector<8xf32>
    %74 = vector.multi_reduction <add>, %73, %cst_41 [1] : vector<8x8xf32> to vector<8xf32>
    %75 = vector.shape_cast %74 : vector<8xf32> to vector<8x1xf32>
    %76 = tpu.reciprocal %75 {approx = true} : vector<8x1xf32> -> vector<8x1xf32>
    %77 = arith.mulf %75, %76 : vector<8x1xf32>
    %cst_42 = arith.constant 2.000000e+00 : f32
    %78 = vector.broadcast %cst_42 : f32 to vector<8x1xf32>
    %79 = arith.subf %78, %77 : vector<8x1xf32>
    %80 = arith.mulf %76, %79 : vector<8x1xf32>
    %81 = vector.broadcast %80 : vector<8x1xf32> to vector<8x8xf32>
    %82 = arith.mulf %73, %81 : vector<8x8xf32>
    %cst_43 = arith.constant dense<0.000000e+00> : vector<8x8xf32>
    %83 = tpu.matmul %82, %67, %cst_43 {dimension_numbers = #tpu.dot_dimension_numbers<[1], [0], [0], [1], [0, 0, 1, 1], [], []>} : vector<8x8xf32>, vector<8x8xf32>, vector<8x8xf32> -> vector<8x8xf32>
    %84 = vector.extract_strided_slice %20 {offsets = [0, 72], sizes = [8, 8], strides = [1, 1]} : vector<8x96xf32> to vector<8x8xf32>
    %cst_44 = arith.constant 0.353553385 : f32
    %85 = vector.broadcast %cst_44 : f32 to vector<8x8xf32>
    %86 = arith.mulf %84, %85 : vector<8x8xf32>
    %87 = vector.extract_strided_slice %20 {offsets = [0, 80], sizes = [8, 8], strides = [1, 1]} : vector<8x96xf32> to vector<8x8xf32>
    %88 = vector.extract_strided_slice %20 {offsets = [0, 88], sizes = [8, 8], strides = [1, 1]} : vector<8x96xf32> to vector<8x8xf32>
    %cst_45 = arith.constant dense<0.000000e+00> : vector<8x8xf32>
    %89 = tpu.matmul %86, %87, %cst_45 {dimension_numbers = #tpu.dot_dimension_numbers<[1], [1], [0], [0], [0, 0, 1, 0], [], []>} : vector<8x8xf32>, vector<8x8xf32>, vector<8x8xf32> -> vector<8x8xf32>
    %cst_46 = arith.constant dense<0xFF800000> : vector<8xf32>
    %90 = vector.multi_reduction <maximumf>, %89, %cst_46 [1] : vector<8x8xf32> to vector<8xf32>
    %91 = vector.shape_cast %90 : vector<8xf32> to vector<8x1xf32>
    %92 = vector.broadcast %91 : vector<8x1xf32> to vector<8x8xf32>
    %93 = arith.subf %89, %92 : vector<8x8xf32>
    %94 = math.exp %93 : vector<8x8xf32>
    %cst_47 = arith.constant dense<0.000000e+00> : vector<8xf32>
    %95 = vector.multi_reduction <add>, %94, %cst_47 [1] : vector<8x8xf32> to vector<8xf32>
    %96 = vector.shape_cast %95 : vector<8xf32> to vector<8x1xf32>
    %97 = tpu.reciprocal %96 {approx = true} : vector<8x1xf32> -> vector<8x1xf32>
    %98 = arith.mulf %96, %97 : vector<8x1xf32>
    %cst_48 = arith.constant 2.000000e+00 : f32
    %99 = vector.broadcast %cst_48 : f32 to vector<8x1xf32>
    %100 = arith.subf %99, %98 : vector<8x1xf32>
    %101 = arith.mulf %97, %100 : vector<8x1xf32>
    %102 = vector.broadcast %101 : vector<8x1xf32> to vector<8x8xf32>
    %103 = arith.mulf %94, %102 : vector<8x8xf32>
    %cst_49 = arith.constant dense<0.000000e+00> : vector<8x8xf32>
    %104 = tpu.matmul %103, %88, %cst_49 {dimension_numbers = #tpu.dot_dimension_numbers<[1], [0], [0], [1], [0, 0, 1, 1], [], []>} : vector<8x8xf32>, vector<8x8xf32>, vector<8x8xf32> -> vector<8x8xf32>
    %105 = tpu.concatenate %41, %62, %83, %104 in 0 : vector<8x8xf32>, vector<8x8xf32>, vector<8x8xf32>, vector<8x8xf32> -> vector<32x8xf32>
    %cst_50 = arith.constant 0.000000e+00 : f32
    %106 = vector.broadcast %cst_50 : f32 to vector<8x32xf32>
    %c0_51 = arith.constant 0 : index
    %c0_52 = arith.constant 0 : index
    %c0_53 = arith.constant 0 : index
    %107 = vector.load %arg2[%c0_51, %c0_52, %c0_53] : memref<4x8x32xf32, #tpu.memory_space<vmem>>, vector<1x8x32xf32>
    %108 = vector.shape_cast %107 : vector<1x8x32xf32> to vector<8x32xf32>
    %cst_54 = arith.constant dense<0.000000e+00> : vector<8x8xf32>
    %109 = tpu.matmul %108, %105, %cst_54 {dimension_numbers = #tpu.dot_dimension_numbers<[1], [0], [0], [1], [0, 0, 1, 1], [], []>} : vector<8x32xf32>, vector<32x8xf32>, vector<8x8xf32> -> vector<8x8xf32>
    %c0_55 = arith.constant 0 : index
    %c0_56 = arith.constant 0 : index
    %c0_57 = arith.constant 0 : index
    %110 = vector.load %arg3[%c0_55, %c0_56, %c0_57] : memref<4x8x32xf32, #tpu.memory_space<vmem>>, vector<1x8x32xf32>
    %111 = vector.shape_cast %110 : vector<1x8x32xf32> to vector<8x32xf32>
    %cst_58 = arith.constant dense<0.000000e+00> : vector<8x32xf32>
    %112 = tpu.matmul %109, %111, %cst_58 {dimension_numbers = #tpu.dot_dimension_numbers<[1], [0], [0], [1], [0, 0, 1, 1], [], []>} : vector<8x8xf32>, vector<8x32xf32>, vector<8x32xf32> -> vector<8x32xf32>
    %113 = arith.addf %106, %112 : vector<8x32xf32>
    %c1 = arith.constant 1 : index
    %c0_59 = arith.constant 0 : index
    %c0_60 = arith.constant 0 : index
    %114 = vector.load %arg2[%c1, %c0_59, %c0_60] : memref<4x8x32xf32, #tpu.memory_space<vmem>>, vector<1x8x32xf32>
    %115 = vector.shape_cast %114 : vector<1x8x32xf32> to vector<8x32xf32>
    %cst_61 = arith.constant dense<0.000000e+00> : vector<8x8xf32>
    %116 = tpu.matmul %115, %105, %cst_61 {dimension_numbers = #tpu.dot_dimension_numbers<[1], [0], [0], [1], [0, 0, 1, 1], [], []>} : vector<8x32xf32>, vector<32x8xf32>, vector<8x8xf32> -> vector<8x8xf32>
    %c1_62 = arith.constant 1 : index
    %c0_63 = arith.constant 0 : index
    %c0_64 = arith.constant 0 : index
    %117 = vector.load %arg3[%c1_62, %c0_63, %c0_64] : memref<4x8x32xf32, #tpu.memory_space<vmem>>, vector<1x8x32xf32>
    %118 = vector.shape_cast %117 : vector<1x8x32xf32> to vector<8x32xf32>
    %cst_65 = arith.constant dense<0.000000e+00> : vector<8x32xf32>
    %119 = tpu.matmul %116, %118, %cst_65 {dimension_numbers = #tpu.dot_dimension_numbers<[1], [0], [0], [1], [0, 0, 1, 1], [], []>} : vector<8x8xf32>, vector<8x32xf32>, vector<8x32xf32> -> vector<8x32xf32>
    %120 = arith.addf %113, %119 : vector<8x32xf32>
    %c2 = arith.constant 2 : index
    %c0_66 = arith.constant 0 : index
    %c0_67 = arith.constant 0 : index
    %121 = vector.load %arg2[%c2, %c0_66, %c0_67] : memref<4x8x32xf32, #tpu.memory_space<vmem>>, vector<1x8x32xf32>
    %122 = vector.shape_cast %121 : vector<1x8x32xf32> to vector<8x32xf32>
    %cst_68 = arith.constant dense<0.000000e+00> : vector<8x8xf32>
    %123 = tpu.matmul %122, %105, %cst_68 {dimension_numbers = #tpu.dot_dimension_numbers<[1], [0], [0], [1], [0, 0, 1, 1], [], []>} : vector<8x32xf32>, vector<32x8xf32>, vector<8x8xf32> -> vector<8x8xf32>
    %c2_69 = arith.constant 2 : index
    %c0_70 = arith.constant 0 : index
    %c0_71 = arith.constant 0 : index
    %124 = vector.load %arg3[%c2_69, %c0_70, %c0_71] : memref<4x8x32xf32, #tpu.memory_space<vmem>>, vector<1x8x32xf32>
    %125 = vector.shape_cast %124 : vector<1x8x32xf32> to vector<8x32xf32>
    %cst_72 = arith.constant dense<0.000000e+00> : vector<8x32xf32>
    %126 = tpu.matmul %123, %125, %cst_72 {dimension_numbers = #tpu.dot_dimension_numbers<[1], [0], [0], [1], [0, 0, 1, 1], [], []>} : vector<8x8xf32>, vector<8x32xf32>, vector<8x32xf32> -> vector<8x32xf32>
    %127 = arith.addf %120, %126 : vector<8x32xf32>
    %c3 = arith.constant 3 : index
    %c0_73 = arith.constant 0 : index
    %c0_74 = arith.constant 0 : index
    %128 = vector.load %arg2[%c3, %c0_73, %c0_74] : memref<4x8x32xf32, #tpu.memory_space<vmem>>, vector<1x8x32xf32>
    %129 = vector.shape_cast %128 : vector<1x8x32xf32> to vector<8x32xf32>
    %cst_75 = arith.constant dense<0.000000e+00> : vector<8x8xf32>
    %130 = tpu.matmul %129, %105, %cst_75 {dimension_numbers = #tpu.dot_dimension_numbers<[1], [0], [0], [1], [0, 0, 1, 1], [], []>} : vector<8x32xf32>, vector<32x8xf32>, vector<8x8xf32> -> vector<8x8xf32>
    %c3_76 = arith.constant 3 : index
    %c0_77 = arith.constant 0 : index
    %c0_78 = arith.constant 0 : index
    %131 = vector.load %arg3[%c3_76, %c0_77, %c0_78] : memref<4x8x32xf32, #tpu.memory_space<vmem>>, vector<1x8x32xf32>
    %132 = vector.shape_cast %131 : vector<1x8x32xf32> to vector<8x32xf32>
    %cst_79 = arith.constant dense<0.000000e+00> : vector<8x32xf32>
    %133 = tpu.matmul %130, %132, %cst_79 {dimension_numbers = #tpu.dot_dimension_numbers<[1], [0], [0], [1], [0, 0, 1, 1], [], []>} : vector<8x8xf32>, vector<8x32xf32>, vector<8x32xf32> -> vector<8x32xf32>
    %134 = arith.addf %127, %133 : vector<8x32xf32>
    %135 = arith.addf %1, %134 : vector<8x32xf32>
    %cst_80 = arith.constant dense<0.000000e+00> : vector<8xf32>
    %136 = vector.multi_reduction <add>, %135, %cst_80 [1] : vector<8x32xf32> to vector<8xf32>
    %137 = vector.shape_cast %136 : vector<8xf32> to vector<8x1xf32>
    %cst_81 = arith.constant 3.200000e+01 : f32
    %138 = vector.broadcast %cst_81 : f32 to vector<8x1xf32>
    %139 = arith.divf %137, %138 : vector<8x1xf32>
    %140 = vector.broadcast %139 : vector<8x1xf32> to vector<8x32xf32>
    %141 = arith.subf %135, %140 : vector<8x32xf32>
    %142 = arith.mulf %141, %141 : vector<8x32xf32>
    %cst_82 = arith.constant dense<0.000000e+00> : vector<8xf32>
    %143 = vector.multi_reduction <add>, %142, %cst_82 [1] : vector<8x32xf32> to vector<8xf32>
    %144 = vector.shape_cast %143 : vector<8xf32> to vector<8x1xf32>
    %cst_83 = arith.constant 3.200000e+01 : f32
    %145 = vector.broadcast %cst_83 : f32 to vector<8x1xf32>
    %146 = arith.divf %144, %145 : vector<8x1xf32>
    %147 = vector.broadcast %139 : vector<8x1xf32> to vector<8x32xf32>
    %148 = arith.subf %135, %147 : vector<8x32xf32>
    %cst_84 = arith.constant 9.99999974E-6 : f32
    %149 = vector.broadcast %cst_84 : f32 to vector<8x1xf32>
    %150 = arith.addf %146, %149 : vector<8x1xf32>
    %151 = math.rsqrt %150 : vector<8x1xf32>
    %152 = vector.broadcast %151 : vector<8x1xf32> to vector<8x32xf32>
    %153 = arith.mulf %148, %152 : vector<8x32xf32>
    %154 = vector.broadcast %15 : vector<1x32xf32> to vector<8x32xf32>
    %155 = arith.mulf %154, %153 : vector<8x32xf32>
    %156 = vector.broadcast %17 : vector<1x32xf32> to vector<8x32xf32>
    %157 = arith.addf %155, %156 : vector<8x32xf32>
    %cst_85 = arith.constant dense<0.000000e+00> : vector<8x64xf32>
    %158 = tpu.matmul %157, %7, %cst_85 {dimension_numbers = #tpu.dot_dimension_numbers<[1], [0], [0], [1], [0, 0, 1, 1], [], []>} : vector<8x32xf32>, vector<32x64xf32>, vector<8x64xf32> -> vector<8x64xf32>
    %159 = vector.broadcast %9 : vector<1x64xf32> to vector<8x64xf32>
    %160 = arith.addf %158, %159 : vector<8x64xf32>
    %cst_86 = arith.constant 0.000000e+00 : f32
    %161 = vector.broadcast %cst_86 : f32 to vector<8x64xf32>
    %162 = arith.maximumf %160, %161 : vector<8x64xf32>
    %cst_87 = arith.constant dense<0.000000e+00> : vector<8x32xf32>
    %163 = tpu.matmul %162, %11, %cst_87 {dimension_numbers = #tpu.dot_dimension_numbers<[1], [0], [0], [1], [0, 0, 1, 1], [], []>} : vector<8x64xf32>, vector<64x32xf32>, vector<8x32xf32> -> vector<8x32xf32>
    %164 = vector.broadcast %13 : vector<1x32xf32> to vector<8x32xf32>
    %165 = arith.addf %163, %164 : vector<8x32xf32>
    %166 = arith.addf %165, %157 : vector<8x32xf32>
    %cst_88 = arith.constant dense<0.000000e+00> : vector<8xf32>
    %167 = vector.multi_reduction <add>, %166, %cst_88 [1] : vector<8x32xf32> to vector<8xf32>
    %168 = vector.shape_cast %167 : vector<8xf32> to vector<8x1xf32>
    %cst_89 = arith.constant 3.200000e+01 : f32
    %169 = vector.broadcast %cst_89 : f32 to vector<8x1xf32>
    %170 = arith.divf %168, %169 : vector<8x1xf32>
    %171 = vector.broadcast %170 : vector<8x1xf32> to vector<8x32xf32>
    %172 = arith.subf %166, %171 : vector<8x32xf32>
    %173 = arith.mulf %172, %172 : vector<8x32xf32>
    %cst_90 = arith.constant dense<0.000000e+00> : vector<8xf32>
    %174 = vector.multi_reduction <add>, %173, %cst_90 [1] : vector<8x32xf32> to vector<8xf32>
    %175 = vector.shape_cast %174 : vector<8xf32> to vector<8x1xf32>
    %cst_91 = arith.constant 3.200000e+01 : f32
    %176 = vector.broadcast %cst_91 : f32 to vector<8x1xf32>
    %177 = arith.divf %175, %176 : vector<8x1xf32>
    %178 = vector.broadcast %170 : vector<8x1xf32> to vector<8x32xf32>
    %179 = arith.subf %166, %178 : vector<8x32xf32>
    %cst_92 = arith.constant 9.99999974E-6 : f32
    %180 = vector.broadcast %cst_92 : f32 to vector<8x1xf32>
    %181 = arith.addf %177, %180 : vector<8x1xf32>
    %182 = math.rsqrt %181 : vector<8x1xf32>
    %183 = vector.broadcast %182 : vector<8x1xf32> to vector<8x32xf32>
    %184 = arith.mulf %179, %183 : vector<8x32xf32>
    %185 = vector.broadcast %15 : vector<1x32xf32> to vector<8x32xf32>
    %186 = arith.mulf %185, %184 : vector<8x32xf32>
    %187 = vector.broadcast %17 : vector<1x32xf32> to vector<8x32xf32>
    %188 = arith.addf %186, %187 : vector<8x32xf32>
    %c1_93 = arith.constant 1 : index
    %c0_94 = arith.constant 0 : index
    %c0_95 = arith.constant 0 : index
    %189 = vector.load %arg4[%c1_93, %c0_94, %c0_95] : memref<2x32x96xf32, #tpu.memory_space<vmem>>, vector<1x32x96xf32>
    %190 = vector.shape_cast %189 : vector<1x32x96xf32> to vector<32x96xf32>
    %c1_96 = arith.constant 1 : index
    %c0_97 = arith.constant 0 : index
    %c0_98 = arith.constant 0 : index
    %191 = vector.load %arg5[%c1_96, %c0_97, %c0_98] : memref<2x1x96xf32, #tpu.memory_space<vmem>>, vector<1x1x96xf32>
    %192 = vector.shape_cast %191 : vector<1x1x96xf32> to vector<1x96xf32>
    %c1_99 = arith.constant 1 : index
    %c0_100 = arith.constant 0 : index
    %c0_101 = arith.constant 0 : index
    %193 = vector.load %arg6[%c1_99, %c0_100, %c0_101] : memref<2x32x64xf32, #tpu.memory_space<vmem>>, vector<1x32x64xf32>
    %194 = vector.shape_cast %193 : vector<1x32x64xf32> to vector<32x64xf32>
    %c1_102 = arith.constant 1 : index
    %c0_103 = arith.constant 0 : index
    %c0_104 = arith.constant 0 : index
    %195 = vector.load %arg7[%c1_102, %c0_103, %c0_104] : memref<2x1x64xf32, #tpu.memory_space<vmem>>, vector<1x1x64xf32>
    %196 = vector.shape_cast %195 : vector<1x1x64xf32> to vector<1x64xf32>
    %c1_105 = arith.constant 1 : index
    %c0_106 = arith.constant 0 : index
    %c0_107 = arith.constant 0 : index
    %197 = vector.load %arg8[%c1_105, %c0_106, %c0_107] : memref<2x64x32xf32, #tpu.memory_space<vmem>>, vector<1x64x32xf32>
    %198 = vector.shape_cast %197 : vector<1x64x32xf32> to vector<64x32xf32>
    %c1_108 = arith.constant 1 : index
    %c0_109 = arith.constant 0 : index
    %c0_110 = arith.constant 0 : index
    %199 = vector.load %arg9[%c1_108, %c0_109, %c0_110] : memref<2x1x32xf32, #tpu.memory_space<vmem>>, vector<1x1x32xf32>
    %200 = vector.shape_cast %199 : vector<1x1x32xf32> to vector<1x32xf32>
    %c1_111 = arith.constant 1 : index
    %c0_112 = arith.constant 0 : index
    %c0_113 = arith.constant 0 : index
    %201 = vector.load %arg10[%c1_111, %c0_112, %c0_113] : memref<2x1x32xf32, #tpu.memory_space<vmem>>, vector<1x1x32xf32>
    %202 = vector.shape_cast %201 : vector<1x1x32xf32> to vector<1x32xf32>
    %c1_114 = arith.constant 1 : index
    %c0_115 = arith.constant 0 : index
    %c0_116 = arith.constant 0 : index
    %203 = vector.load %arg11[%c1_114, %c0_115, %c0_116] : memref<2x1x32xf32, #tpu.memory_space<vmem>>, vector<1x1x32xf32>
    %204 = vector.shape_cast %203 : vector<1x1x32xf32> to vector<1x32xf32>
    %cst_117 = arith.constant dense<0.000000e+00> : vector<8x96xf32>
    %205 = tpu.matmul %188, %190, %cst_117 {dimension_numbers = #tpu.dot_dimension_numbers<[1], [0], [0], [1], [0, 0, 1, 1], [], []>} : vector<8x32xf32>, vector<32x96xf32>, vector<8x96xf32> -> vector<8x96xf32>
    %206 = vector.broadcast %192 : vector<1x96xf32> to vector<8x96xf32>
    %207 = arith.addf %205, %206 : vector<8x96xf32>
    %208 = vector.extract_strided_slice %207 {offsets = [0, 0], sizes = [8, 8], strides = [1, 1]} : vector<8x96xf32> to vector<8x8xf32>
    %cst_118 = arith.constant 0.353553385 : f32
    %209 = vector.broadcast %cst_118 : f32 to vector<8x8xf32>
    %210 = arith.mulf %208, %209 : vector<8x8xf32>
    %211 = vector.extract_strided_slice %207 {offsets = [0, 8], sizes = [8, 8], strides = [1, 1]} : vector<8x96xf32> to vector<8x8xf32>
    %212 = vector.extract_strided_slice %207 {offsets = [0, 16], sizes = [8, 8], strides = [1, 1]} : vector<8x96xf32> to vector<8x8xf32>
    %cst_119 = arith.constant dense<0.000000e+00> : vector<8x8xf32>
    %213 = tpu.matmul %210, %211, %cst_119 {dimension_numbers = #tpu.dot_dimension_numbers<[1], [1], [0], [0], [0, 0, 1, 0], [], []>} : vector<8x8xf32>, vector<8x8xf32>, vector<8x8xf32> -> vector<8x8xf32>
    %cst_120 = arith.constant dense<0xFF800000> : vector<8xf32>
    %214 = vector.multi_reduction <maximumf>, %213, %cst_120 [1] : vector<8x8xf32> to vector<8xf32>
    %215 = vector.shape_cast %214 : vector<8xf32> to vector<8x1xf32>
    %216 = vector.broadcast %215 : vector<8x1xf32> to vector<8x8xf32>
    %217 = arith.subf %213, %216 : vector<8x8xf32>
    %218 = math.exp %217 : vector<8x8xf32>
    %cst_121 = arith.constant dense<0.000000e+00> : vector<8xf32>
    %219 = vector.multi_reduction <add>, %218, %cst_121 [1] : vector<8x8xf32> to vector<8xf32>
    %220 = vector.shape_cast %219 : vector<8xf32> to vector<8x1xf32>
    %221 = tpu.reciprocal %220 {approx = true} : vector<8x1xf32> -> vector<8x1xf32>
    %222 = arith.mulf %220, %221 : vector<8x1xf32>
    %cst_122 = arith.constant 2.000000e+00 : f32
    %223 = vector.broadcast %cst_122 : f32 to vector<8x1xf32>
    %224 = arith.subf %223, %222 : vector<8x1xf32>
    %225 = arith.mulf %221, %224 : vector<8x1xf32>
    %226 = vector.broadcast %225 : vector<8x1xf32> to vector<8x8xf32>
    %227 = arith.mulf %218, %226 : vector<8x8xf32>
    %cst_123 = arith.constant dense<0.000000e+00> : vector<8x8xf32>
    %228 = tpu.matmul %227, %212, %cst_123 {dimension_numbers = #tpu.dot_dimension_numbers<[1], [0], [0], [1], [0, 0, 1, 1], [], []>} : vector<8x8xf32>, vector<8x8xf32>, vector<8x8xf32> -> vector<8x8xf32>
    %229 = vector.extract_strided_slice %207 {offsets = [0, 24], sizes = [8, 8], strides = [1, 1]} : vector<8x96xf32> to vector<8x8xf32>
    %cst_124 = arith.constant 0.353553385 : f32
    %230 = vector.broadcast %cst_124 : f32 to vector<8x8xf32>
    %231 = arith.mulf %229, %230 : vector<8x8xf32>
    %232 = vector.extract_strided_slice %207 {offsets = [0, 32], sizes = [8, 8], strides = [1, 1]} : vector<8x96xf32> to vector<8x8xf32>
    %233 = vector.extract_strided_slice %207 {offsets = [0, 40], sizes = [8, 8], strides = [1, 1]} : vector<8x96xf32> to vector<8x8xf32>
    %cst_125 = arith.constant dense<0.000000e+00> : vector<8x8xf32>
    %234 = tpu.matmul %231, %232, %cst_125 {dimension_numbers = #tpu.dot_dimension_numbers<[1], [1], [0], [0], [0, 0, 1, 0], [], []>} : vector<8x8xf32>, vector<8x8xf32>, vector<8x8xf32> -> vector<8x8xf32>
    %cst_126 = arith.constant dense<0xFF800000> : vector<8xf32>
    %235 = vector.multi_reduction <maximumf>, %234, %cst_126 [1] : vector<8x8xf32> to vector<8xf32>
    %236 = vector.shape_cast %235 : vector<8xf32> to vector<8x1xf32>
    %237 = vector.broadcast %236 : vector<8x1xf32> to vector<8x8xf32>
    %238 = arith.subf %234, %237 : vector<8x8xf32>
    %239 = math.exp %238 : vector<8x8xf32>
    %cst_127 = arith.constant dense<0.000000e+00> : vector<8xf32>
    %240 = vector.multi_reduction <add>, %239, %cst_127 [1] : vector<8x8xf32> to vector<8xf32>
    %241 = vector.shape_cast %240 : vector<8xf32> to vector<8x1xf32>
    %242 = tpu.reciprocal %241 {approx = true} : vector<8x1xf32> -> vector<8x1xf32>
    %243 = arith.mulf %241, %242 : vector<8x1xf32>
    %cst_128 = arith.constant 2.000000e+00 : f32
    %244 = vector.broadcast %cst_128 : f32 to vector<8x1xf32>
    %245 = arith.subf %244, %243 : vector<8x1xf32>
    %246 = arith.mulf %242, %245 : vector<8x1xf32>
    %247 = vector.broadcast %246 : vector<8x1xf32> to vector<8x8xf32>
    %248 = arith.mulf %239, %247 : vector<8x8xf32>
    %cst_129 = arith.constant dense<0.000000e+00> : vector<8x8xf32>
    %249 = tpu.matmul %248, %233, %cst_129 {dimension_numbers = #tpu.dot_dimension_numbers<[1], [0], [0], [1], [0, 0, 1, 1], [], []>} : vector<8x8xf32>, vector<8x8xf32>, vector<8x8xf32> -> vector<8x8xf32>
    %250 = vector.extract_strided_slice %207 {offsets = [0, 48], sizes = [8, 8], strides = [1, 1]} : vector<8x96xf32> to vector<8x8xf32>
    %cst_130 = arith.constant 0.353553385 : f32
    %251 = vector.broadcast %cst_130 : f32 to vector<8x8xf32>
    %252 = arith.mulf %250, %251 : vector<8x8xf32>
    %253 = vector.extract_strided_slice %207 {offsets = [0, 56], sizes = [8, 8], strides = [1, 1]} : vector<8x96xf32> to vector<8x8xf32>
    %254 = vector.extract_strided_slice %207 {offsets = [0, 64], sizes = [8, 8], strides = [1, 1]} : vector<8x96xf32> to vector<8x8xf32>
    %cst_131 = arith.constant dense<0.000000e+00> : vector<8x8xf32>
    %255 = tpu.matmul %252, %253, %cst_131 {dimension_numbers = #tpu.dot_dimension_numbers<[1], [1], [0], [0], [0, 0, 1, 0], [], []>} : vector<8x8xf32>, vector<8x8xf32>, vector<8x8xf32> -> vector<8x8xf32>
    %cst_132 = arith.constant dense<0xFF800000> : vector<8xf32>
    %256 = vector.multi_reduction <maximumf>, %255, %cst_132 [1] : vector<8x8xf32> to vector<8xf32>
    %257 = vector.shape_cast %256 : vector<8xf32> to vector<8x1xf32>
    %258 = vector.broadcast %257 : vector<8x1xf32> to vector<8x8xf32>
    %259 = arith.subf %255, %258 : vector<8x8xf32>
    %260 = math.exp %259 : vector<8x8xf32>
    %cst_133 = arith.constant dense<0.000000e+00> : vector<8xf32>
    %261 = vector.multi_reduction <add>, %260, %cst_133 [1] : vector<8x8xf32> to vector<8xf32>
    %262 = vector.shape_cast %261 : vector<8xf32> to vector<8x1xf32>
    %263 = tpu.reciprocal %262 {approx = true} : vector<8x1xf32> -> vector<8x1xf32>
    %264 = arith.mulf %262, %263 : vector<8x1xf32>
    %cst_134 = arith.constant 2.000000e+00 : f32
    %265 = vector.broadcast %cst_134 : f32 to vector<8x1xf32>
    %266 = arith.subf %265, %264 : vector<8x1xf32>
    %267 = arith.mulf %263, %266 : vector<8x1xf32>
    %268 = vector.broadcast %267 : vector<8x1xf32> to vector<8x8xf32>
    %269 = arith.mulf %260, %268 : vector<8x8xf32>
    %cst_135 = arith.constant dense<0.000000e+00> : vector<8x8xf32>
    %270 = tpu.matmul %269, %254, %cst_135 {dimension_numbers = #tpu.dot_dimension_numbers<[1], [0], [0], [1], [0, 0, 1, 1], [], []>} : vector<8x8xf32>, vector<8x8xf32>, vector<8x8xf32> -> vector<8x8xf32>
    %271 = vector.extract_strided_slice %207 {offsets = [0, 72], sizes = [8, 8], strides = [1, 1]} : vector<8x96xf32> to vector<8x8xf32>
    %cst_136 = arith.constant 0.353553385 : f32
    %272 = vector.broadcast %cst_136 : f32 to vector<8x8xf32>
    %273 = arith.mulf %271, %272 : vector<8x8xf32>
    %274 = vector.extract_strided_slice %207 {offsets = [0, 80], sizes = [8, 8], strides = [1, 1]} : vector<8x96xf32> to vector<8x8xf32>
    %275 = vector.extract_strided_slice %207 {offsets = [0, 88], sizes = [8, 8], strides = [1, 1]} : vector<8x96xf32> to vector<8x8xf32>
    %cst_137 = arith.constant dense<0.000000e+00> : vector<8x8xf32>
    %276 = tpu.matmul %273, %274, %cst_137 {dimension_numbers = #tpu.dot_dimension_numbers<[1], [1], [0], [0], [0, 0, 1, 0], [], []>} : vector<8x8xf32>, vector<8x8xf32>, vector<8x8xf32> -> vector<8x8xf32>
    %cst_138 = arith.constant dense<0xFF800000> : vector<8xf32>
    %277 = vector.multi_reduction <maximumf>, %276, %cst_138 [1] : vector<8x8xf32> to vector<8xf32>
    %278 = vector.shape_cast %277 : vector<8xf32> to vector<8x1xf32>
    %279 = vector.broadcast %278 : vector<8x1xf32> to vector<8x8xf32>
    %280 = arith.subf %276, %279 : vector<8x8xf32>
    %281 = math.exp %280 : vector<8x8xf32>
    %cst_139 = arith.constant dense<0.000000e+00> : vector<8xf32>
    %282 = vector.multi_reduction <add>, %281, %cst_139 [1] : vector<8x8xf32> to vector<8xf32>
    %283 = vector.shape_cast %282 : vector<8xf32> to vector<8x1xf32>
    %284 = tpu.reciprocal %283 {approx = true} : vector<8x1xf32> -> vector<8x1xf32>
    %285 = arith.mulf %283, %284 : vector<8x1xf32>
    %cst_140 = arith.constant 2.000000e+00 : f32
    %286 = vector.broadcast %cst_140 : f32 to vector<8x1xf32>
    %287 = arith.subf %286, %285 : vector<8x1xf32>
    %288 = arith.mulf %284, %287 : vector<8x1xf32>
    %289 = vector.broadcast %288 : vector<8x1xf32> to vector<8x8xf32>
    %290 = arith.mulf %281, %289 : vector<8x8xf32>
    %cst_141 = arith.constant dense<0.000000e+00> : vector<8x8xf32>
    %291 = tpu.matmul %290, %275, %cst_141 {dimension_numbers = #tpu.dot_dimension_numbers<[1], [0], [0], [1], [0, 0, 1, 1], [], []>} : vector<8x8xf32>, vector<8x8xf32>, vector<8x8xf32> -> vector<8x8xf32>
    %292 = tpu.concatenate %228, %249, %270, %291 in 0 : vector<8x8xf32>, vector<8x8xf32>, vector<8x8xf32>, vector<8x8xf32> -> vector<32x8xf32>
    %cst_142 = arith.constant 0.000000e+00 : f32
    %293 = vector.broadcast %cst_142 : f32 to vector<8x32xf32>
    %c0_143 = arith.constant 0 : index
    %c0_144 = arith.constant 0 : index
    %c0_145 = arith.constant 0 : index
    %294 = vector.load %arg2[%c0_143, %c0_144, %c0_145] : memref<4x8x32xf32, #tpu.memory_space<vmem>>, vector<1x8x32xf32>
    %295 = vector.shape_cast %294 : vector<1x8x32xf32> to vector<8x32xf32>
    %cst_146 = arith.constant dense<0.000000e+00> : vector<8x8xf32>
    %296 = tpu.matmul %295, %292, %cst_146 {dimension_numbers = #tpu.dot_dimension_numbers<[1], [0], [0], [1], [0, 0, 1, 1], [], []>} : vector<8x32xf32>, vector<32x8xf32>, vector<8x8xf32> -> vector<8x8xf32>
    %c0_147 = arith.constant 0 : index
    %c0_148 = arith.constant 0 : index
    %c0_149 = arith.constant 0 : index
    %297 = vector.load %arg3[%c0_147, %c0_148, %c0_149] : memref<4x8x32xf32, #tpu.memory_space<vmem>>, vector<1x8x32xf32>
    %298 = vector.shape_cast %297 : vector<1x8x32xf32> to vector<8x32xf32>
    %cst_150 = arith.constant dense<0.000000e+00> : vector<8x32xf32>
    %299 = tpu.matmul %296, %298, %cst_150 {dimension_numbers = #tpu.dot_dimension_numbers<[1], [0], [0], [1], [0, 0, 1, 1], [], []>} : vector<8x8xf32>, vector<8x32xf32>, vector<8x32xf32> -> vector<8x32xf32>
    %300 = arith.addf %293, %299 : vector<8x32xf32>
    %c1_151 = arith.constant 1 : index
    %c0_152 = arith.constant 0 : index
    %c0_153 = arith.constant 0 : index
    %301 = vector.load %arg2[%c1_151, %c0_152, %c0_153] : memref<4x8x32xf32, #tpu.memory_space<vmem>>, vector<1x8x32xf32>
    %302 = vector.shape_cast %301 : vector<1x8x32xf32> to vector<8x32xf32>
    %cst_154 = arith.constant dense<0.000000e+00> : vector<8x8xf32>
    %303 = tpu.matmul %302, %292, %cst_154 {dimension_numbers = #tpu.dot_dimension_numbers<[1], [0], [0], [1], [0, 0, 1, 1], [], []>} : vector<8x32xf32>, vector<32x8xf32>, vector<8x8xf32> -> vector<8x8xf32>
    %c1_155 = arith.constant 1 : index
    %c0_156 = arith.constant 0 : index
    %c0_157 = arith.constant 0 : index
    %304 = vector.load %arg3[%c1_155, %c0_156, %c0_157] : memref<4x8x32xf32, #tpu.memory_space<vmem>>, vector<1x8x32xf32>
    %305 = vector.shape_cast %304 : vector<1x8x32xf32> to vector<8x32xf32>
    %cst_158 = arith.constant dense<0.000000e+00> : vector<8x32xf32>
    %306 = tpu.matmul %303, %305, %cst_158 {dimension_numbers = #tpu.dot_dimension_numbers<[1], [0], [0], [1], [0, 0, 1, 1], [], []>} : vector<8x8xf32>, vector<8x32xf32>, vector<8x32xf32> -> vector<8x32xf32>
    %307 = arith.addf %300, %306 : vector<8x32xf32>
    %c2_159 = arith.constant 2 : index
    %c0_160 = arith.constant 0 : index
    %c0_161 = arith.constant 0 : index
    %308 = vector.load %arg2[%c2_159, %c0_160, %c0_161] : memref<4x8x32xf32, #tpu.memory_space<vmem>>, vector<1x8x32xf32>
    %309 = vector.shape_cast %308 : vector<1x8x32xf32> to vector<8x32xf32>
    %cst_162 = arith.constant dense<0.000000e+00> : vector<8x8xf32>
    %310 = tpu.matmul %309, %292, %cst_162 {dimension_numbers = #tpu.dot_dimension_numbers<[1], [0], [0], [1], [0, 0, 1, 1], [], []>} : vector<8x32xf32>, vector<32x8xf32>, vector<8x8xf32> -> vector<8x8xf32>
    %c2_163 = arith.constant 2 : index
    %c0_164 = arith.constant 0 : index
    %c0_165 = arith.constant 0 : index
    %311 = vector.load %arg3[%c2_163, %c0_164, %c0_165] : memref<4x8x32xf32, #tpu.memory_space<vmem>>, vector<1x8x32xf32>
    %312 = vector.shape_cast %311 : vector<1x8x32xf32> to vector<8x32xf32>
    %cst_166 = arith.constant dense<0.000000e+00> : vector<8x32xf32>
    %313 = tpu.matmul %310, %312, %cst_166 {dimension_numbers = #tpu.dot_dimension_numbers<[1], [0], [0], [1], [0, 0, 1, 1], [], []>} : vector<8x8xf32>, vector<8x32xf32>, vector<8x32xf32> -> vector<8x32xf32>
    %314 = arith.addf %307, %313 : vector<8x32xf32>
    %c3_167 = arith.constant 3 : index
    %c0_168 = arith.constant 0 : index
    %c0_169 = arith.constant 0 : index
    %315 = vector.load %arg2[%c3_167, %c0_168, %c0_169] : memref<4x8x32xf32, #tpu.memory_space<vmem>>, vector<1x8x32xf32>
    %316 = vector.shape_cast %315 : vector<1x8x32xf32> to vector<8x32xf32>
    %cst_170 = arith.constant dense<0.000000e+00> : vector<8x8xf32>
    %317 = tpu.matmul %316, %292, %cst_170 {dimension_numbers = #tpu.dot_dimension_numbers<[1], [0], [0], [1], [0, 0, 1, 1], [], []>} : vector<8x32xf32>, vector<32x8xf32>, vector<8x8xf32> -> vector<8x8xf32>
    %c3_171 = arith.constant 3 : index
    %c0_172 = arith.constant 0 : index
    %c0_173 = arith.constant 0 : index
    %318 = vector.load %arg3[%c3_171, %c0_172, %c0_173] : memref<4x8x32xf32, #tpu.memory_space<vmem>>, vector<1x8x32xf32>
    %319 = vector.shape_cast %318 : vector<1x8x32xf32> to vector<8x32xf32>
    %cst_174 = arith.constant dense<0.000000e+00> : vector<8x32xf32>
    %320 = tpu.matmul %317, %319, %cst_174 {dimension_numbers = #tpu.dot_dimension_numbers<[1], [0], [0], [1], [0, 0, 1, 1], [], []>} : vector<8x8xf32>, vector<8x32xf32>, vector<8x32xf32> -> vector<8x32xf32>
    %321 = arith.addf %314, %320 : vector<8x32xf32>
    %322 = arith.addf %188, %321 : vector<8x32xf32>
    %cst_175 = arith.constant dense<0.000000e+00> : vector<8xf32>
    %323 = vector.multi_reduction <add>, %322, %cst_175 [1] : vector<8x32xf32> to vector<8xf32>
    %324 = vector.shape_cast %323 : vector<8xf32> to vector<8x1xf32>
    %cst_176 = arith.constant 3.200000e+01 : f32
    %325 = vector.broadcast %cst_176 : f32 to vector<8x1xf32>
    %326 = arith.divf %324, %325 : vector<8x1xf32>
    %327 = vector.broadcast %326 : vector<8x1xf32> to vector<8x32xf32>
    %328 = arith.subf %322, %327 : vector<8x32xf32>
    %329 = arith.mulf %328, %328 : vector<8x32xf32>
    %cst_177 = arith.constant dense<0.000000e+00> : vector<8xf32>
    %330 = vector.multi_reduction <add>, %329, %cst_177 [1] : vector<8x32xf32> to vector<8xf32>
    %331 = vector.shape_cast %330 : vector<8xf32> to vector<8x1xf32>
    %cst_178 = arith.constant 3.200000e+01 : f32
    %332 = vector.broadcast %cst_178 : f32 to vector<8x1xf32>
    %333 = arith.divf %331, %332 : vector<8x1xf32>
    %334 = vector.broadcast %326 : vector<8x1xf32> to vector<8x32xf32>
    %335 = arith.subf %322, %334 : vector<8x32xf32>
    %cst_179 = arith.constant 9.99999974E-6 : f32
    %336 = vector.broadcast %cst_179 : f32 to vector<8x1xf32>
    %337 = arith.addf %333, %336 : vector<8x1xf32>
    %338 = math.rsqrt %337 : vector<8x1xf32>
    %339 = vector.broadcast %338 : vector<8x1xf32> to vector<8x32xf32>
    %340 = arith.mulf %335, %339 : vector<8x32xf32>
    %341 = vector.broadcast %202 : vector<1x32xf32> to vector<8x32xf32>
    %342 = arith.mulf %341, %340 : vector<8x32xf32>
    %343 = vector.broadcast %204 : vector<1x32xf32> to vector<8x32xf32>
    %344 = arith.addf %342, %343 : vector<8x32xf32>
    %cst_180 = arith.constant dense<0.000000e+00> : vector<8x64xf32>
    %345 = tpu.matmul %344, %194, %cst_180 {dimension_numbers = #tpu.dot_dimension_numbers<[1], [0], [0], [1], [0, 0, 1, 1], [], []>} : vector<8x32xf32>, vector<32x64xf32>, vector<8x64xf32> -> vector<8x64xf32>
    %346 = vector.broadcast %196 : vector<1x64xf32> to vector<8x64xf32>
    %347 = arith.addf %345, %346 : vector<8x64xf32>
    %cst_181 = arith.constant 0.000000e+00 : f32
    %348 = vector.broadcast %cst_181 : f32 to vector<8x64xf32>
    %349 = arith.maximumf %347, %348 : vector<8x64xf32>
    %cst_182 = arith.constant dense<0.000000e+00> : vector<8x32xf32>
    %350 = tpu.matmul %349, %198, %cst_182 {dimension_numbers = #tpu.dot_dimension_numbers<[1], [0], [0], [1], [0, 0, 1, 1], [], []>} : vector<8x64xf32>, vector<64x32xf32>, vector<8x32xf32> -> vector<8x32xf32>
    %351 = vector.broadcast %200 : vector<1x32xf32> to vector<8x32xf32>
    %352 = arith.addf %350, %351 : vector<8x32xf32>
    %353 = arith.addf %352, %344 : vector<8x32xf32>
    %cst_183 = arith.constant dense<0.000000e+00> : vector<8xf32>
    %354 = vector.multi_reduction <add>, %353, %cst_183 [1] : vector<8x32xf32> to vector<8xf32>
    %355 = vector.shape_cast %354 : vector<8xf32> to vector<8x1xf32>
    %cst_184 = arith.constant 3.200000e+01 : f32
    %356 = vector.broadcast %cst_184 : f32 to vector<8x1xf32>
    %357 = arith.divf %355, %356 : vector<8x1xf32>
    %358 = vector.broadcast %357 : vector<8x1xf32> to vector<8x32xf32>
    %359 = arith.subf %353, %358 : vector<8x32xf32>
    %360 = arith.mulf %359, %359 : vector<8x32xf32>
    %cst_185 = arith.constant dense<0.000000e+00> : vector<8xf32>
    %361 = vector.multi_reduction <add>, %360, %cst_185 [1] : vector<8x32xf32> to vector<8xf32>
    %362 = vector.shape_cast %361 : vector<8xf32> to vector<8x1xf32>
    %cst_186 = arith.constant 3.200000e+01 : f32
    %363 = vector.broadcast %cst_186 : f32 to vector<8x1xf32>
    %364 = arith.divf %362, %363 : vector<8x1xf32>
    %365 = vector.broadcast %357 : vector<8x1xf32> to vector<8x32xf32>
    %366 = arith.subf %353, %365 : vector<8x32xf32>
    %cst_187 = arith.constant 9.99999974E-6 : f32
    %367 = vector.broadcast %cst_187 : f32 to vector<8x1xf32>
    %368 = arith.addf %364, %367 : vector<8x1xf32>
    %369 = math.rsqrt %368 : vector<8x1xf32>
    %370 = vector.broadcast %369 : vector<8x1xf32> to vector<8x32xf32>
    %371 = arith.mulf %366, %370 : vector<8x32xf32>
    %372 = vector.broadcast %202 : vector<1x32xf32> to vector<8x32xf32>
    %373 = arith.mulf %372, %371 : vector<8x32xf32>
    %374 = vector.broadcast %204 : vector<1x32xf32> to vector<8x32xf32>
    %375 = arith.addf %373, %374 : vector<8x32xf32>
    %c0_188 = arith.constant 0 : index
    %c0_189 = arith.constant 0 : index
    %c0_190 = arith.constant 0 : index
    %376 = vector.load %arg12[%c0_188, %c0_189, %c0_190] : memref<1x8x32xf32, #tpu.memory_space<vmem>>, vector<1x8x32xf32>
    %377 = vector.shape_cast %376 : vector<1x8x32xf32> to vector<8x32xf32>
    %378 = vector.shape_cast %375 : vector<8x32xf32> to vector<1x8x32xf32>
    tpu.vector_store %arg12[%c0_188, %c0_189, %c0_190], %378 {strides = array<i32>} : memref<1x8x32xf32, #tpu.memory_space<vmem>>, vector<1x8x32xf32>,
    return
  }
  func.func @transform_0(%arg0: i32) -> (i32, i32, i32) {
    %c0_i32 = arith.constant 0 : i32
    %c0_i32_0 = arith.constant 0 : i32
    %c0_i32_1 = arith.constant 0 : i32
    return %arg0, %c0_i32, %c0_i32_0 : i32, i32, i32
  }
  func.func @transform_1(%arg0: i32) -> (i32, i32, i32) {
    %c0_i32 = arith.constant 0 : i32
    %c0_i32_0 = arith.constant 0 : i32
    %c0_i32_1 = arith.constant 0 : i32
    %c0_i32_2 = arith.constant 0 : i32
    return %c0_i32, %c0_i32_0, %c0_i32_1 : i32, i32, i32
  }
  func.func @transform_2(%arg0: i32) -> (i32, i32, i32) {
    %c0_i32 = arith.constant 0 : i32
    %c0_i32_0 = arith.constant 0 : i32
    %c0_i32_1 = arith.constant 0 : i32
    %c0_i32_2 = arith.constant 0 : i32
    return %c0_i32, %c0_i32_0, %c0_i32_1 : i32, i32, i32
  }
  func.func @transform_3(%arg0: i32) -> (i32, i32, i32) {
    %c0_i32 = arith.constant 0 : i32
    %c0_i32_0 = arith.constant 0 : i32
    %c0_i32_1 = arith.constant 0 : i32
    %c0_i32_2 = arith.constant 0 : i32
    return %c0_i32, %c0_i32_0, %c0_i32_1 : i32, i32, i32
  }
  func.func @transform_4(%arg0: i32) -> (i32, i32, i32) {
    %c0_i32 = arith.constant 0 : i32
    %c0_i32_0 = arith.constant 0 : i32
    %c0_i32_1 = arith.constant 0 : i32
    %c0_i32_2 = arith.constant 0 : i32
    return %c0_i32, %c0_i32_0, %c0_i32_1 : i32, i32, i32
  }
  func.func @transform_5(%arg0: i32) -> (i32, i32, i32) {
    %c0_i32 = arith.constant 0 : i32
    %c0_i32_0 = arith.constant 0 : i32
    %c0_i32_1 = arith.constant 0 : i32
    %c0_i32_2 = arith.constant 0 : i32
    return %c0_i32, %c0_i32_0, %c0_i32_1 : i32, i32, i32
  }
  func.func @transform_6(%arg0: i32) -> (i32, i32, i32) {
    %c0_i32 = arith.constant 0 : i32
    %c0_i32_0 = arith.constant 0 : i32
    %c0_i32_1 = arith.constant 0 : i32
    %c0_i32_2 = arith.constant 0 : i32
    return %c0_i32, %c0_i32_0, %c0_i32_1 : i32, i32, i32
  }
  func.func @transform_7(%arg0: i32) -> (i32, i32, i32) {
    %c0_i32 = arith.constant 0 : i32
    %c0_i32_0 = arith.constant 0 : i32
    %c0_i32_1 = arith.constant 0 : i32
    %c0_i32_2 = arith.constant 0 : i32
    return %c0_i32, %c0_i32_0, %c0_i32_1 : i32, i32, i32
  }
  func.func @transform_8(%arg0: i32) -> (i32, i32, i32) {
    %c0_i32 = arith.constant 0 : i32
    %c0_i32_0 = arith.constant 0 : i32
    %c0_i32_1 = arith.constant 0 : i32
    %c0_i32_2 = arith.constant 0 : i32
    return %c0_i32, %c0_i32_0, %c0_i32_1 : i32, i32, i32
  }
  func.func @transform_9(%arg0: i32) -> (i32, i32, i32) {
    %c0_i32 = arith.constant 0 : i32
    %c0_i32_0 = arith.constant 0 : i32
    %c0_i32_1 = arith.constant 0 : i32
    %c0_i32_2 = arith.constant 0 : i32
    return %c0_i32, %c0_i32_0, %c0_i32_1 : i32, i32, i32
  }
  func.func @transform_10(%arg0: i32) -> (i32, i32, i32) {
    %c0_i32 = arith.constant 0 : i32
    %c0_i32_0 = arith.constant 0 : i32
    %c0_i32_1 = arith.constant 0 : i32
    %c0_i32_2 = arith.constant 0 : i32
    return %c0_i32, %c0_i32_0, %c0_i32_1 : i32, i32, i32
  }
  func.func @transform_11(%arg0: i32) -> (i32, i32, i32) {
    %c0_i32 = arith.constant 0 : i32
    %c0_i32_0 = arith.constant 0 : i32
    %c0_i32_1 = arith.constant 0 : i32
    return %arg0, %c0_i32, %c0_i32_0 : i32, i32, i32
  }
}

</mosaic_0001>

<llo_original>
// kernel: tpu_custom_call.1
$region0: #{tpu_custom_call.1}
  #allocation0 [shape = 'u32[]', space=smem, size = 0x4, offset = 0x4, fixed_abs, tag = 'smem constant byte address 0x4 - core index']
  #allocation1 [shape = 'u32[144,128]{1,0:T(1,128)}', space=vmem, size = 0x12000, scoped, tag = 'internal scratch']
  %s0 = inlined_call_operand.hbm [shape: f32[2,8,32], index: 0, kind: input, shape index: {}]
  %s1 = inlined_call_operand.vmem [shape: f32[4,8,32], index: 1, kind: input, shape index: {}]
  %s2 = inlined_call_operand.vmem [shape: f32[4,8,32], index: 2, kind: input, shape index: {}]
  %s3 = inlined_call_operand.vmem [shape: f32[2,32,96], index: 3, kind: input, shape index: {}]
  %s4 = inlined_call_operand.vmem [shape: f32[2,1,96], index: 4, kind: input, shape index: {}]
  %s5 = inlined_call_operand.vmem [shape: f32[2,32,64], index: 5, kind: input, shape index: {}]
  %s6 = inlined_call_operand.vmem [shape: f32[2,1,64], index: 6, kind: input, shape index: {}]
  %s7 = inlined_call_operand.vmem [shape: f32[2,64,32], index: 7, kind: input, shape index: {}]
  %s8 = inlined_call_operand.vmem [shape: f32[2,1,32], index: 8, kind: input, shape index: {}]
  %s9 = inlined_call_operand.vmem [shape: f32[2,1,32], index: 9, kind: input, shape index: {}]
  %s10 = inlined_call_operand.vmem [shape: f32[2,1,32], index: 10, kind: input, shape index: {}]
  %s11 = inlined_call_operand.hbm [shape: f32[2,8,32], index: 11, kind: output, shape index: {}]
  %s12 = sld [smem:[#allocation0]]
  $region81: #{tpu_custom_call.1} parent=0
    _
  %s14 = ssub.s32 1, %s12
  %s15 = scalar_select 0, %s14, %s12
  $region1: #{tpu_custom_call.1} parent=0
    #allocation2 [shape = 'u8[8192]{0}', space=vmem, size = 0x2000, scoped, tag = 'input window, operand 0']
    #allocation3 [shape = 's32[2]{0}', space=sflag, size = 0x8, scoped, tag = 'scoped memory for tpu_custom_call.1']
    #allocation4 [shape = 's32[2]{0}', space=sflag, size = 0x8, scoped, tag = 'scoped memory for tpu_custom_call.1']
    #allocation5 [shape = 'u8[8192]{0}', space=vmem, size = 0x2000, scoped, tag = 'output window, operand 0']
    %16 = vsyncpa [#allocation3], 0
    %s17 = scalar_lea.sflag [#allocation3], 1
    %18 = vsyncpa %s17, 0
    %19 = vsyncpa [#allocation4], 0
    %s20 = scalar_lea.sflag [#allocation4], 1
    %21 = vsyncpa %s20, 0
    loop: start=0, step=1, limit=4
    $region2: #{tpu_custom_call.1} parent=1 // loop_pre_header
      _
    $region3: #{tpu_custom_call.1} parent=1 // loop_header
      %s23 = sphi 0, %s27
      %p24 = scmp.ge.s32.totalorder %s23, 4
      %s33 = sphi 0, %s35
      %s36 = sphi 0, %s33
      %s37 = sphi 0, %s36
      %s53 = sphi 0, %s37
      %s57 = sphi 0, %s57
      %s59 = sphi 0, %s57
      %s60 = sphi 0, %s59
      %s74 = sphi 0, %s60
      %s78 = sphi 0, %s78
      %s80 = sphi 0, %s78
      %s81 = sphi 0, %s80
      %s95 = sphi 0, %s81
      %s99 = sphi 0, %s99
      %s101 = sphi 0, %s99
      %s102 = sphi 0, %s101
      %s116 = sphi 0, %s102
      %s120 = sphi 0, %s120
      %s122 = sphi 0, %s120
      %s123 = sphi 0, %s122
      %s137 = sphi 0, %s123
      %s141 = sphi 0, %s141
      %s143 = sphi 0, %s141
      %s144 = sphi 0, %s143
      %s158 = sphi 0, %s144
      %s162 = sphi 0, %s162
      %s164 = sphi 0, %s162
      %s165 = sphi 0, %s164
      %s179 = sphi 0, %s165
      %s183 = sphi 0, %s183
      %s185 = sphi 0, %s183
      %s186 = sphi 0, %s185
      %s200 = sphi 0, %s186
      %s204 = sphi 0, %s204
      %s206 = sphi 0, %s204
      %s207 = sphi 0, %s206
      %s221 = sphi 0, %s207
      %s225 = sphi 0, %s225
      %s227 = sphi 0, %s225
      %s228 = sphi 0, %s227
      %s242 = sphi 0, %s228
      %s246 = sphi 0, %s246
      %s248 = sphi 0, %s246
      %s249 = sphi 0, %s248
      %s263 = sphi 0, %s249
      %s269 = sphi 0, %s271
      %s272 = sphi 0, %s269
      %s273 = sphi 0, %s272
      %s289 = sphi 0, %s273
    $region4: #{tpu_custom_call.1} parent=1 // loop_header_branch
      %26 = sbr.rel (%p24) target = $region8
    $region5: #{tpu_custom_call.1} parent=1 // loop_body
      %s28 = ssub.s32 %s23, 1
      %s29 = ssub.s32 %s23, 2
      %s30 = sadd.s32 %s23, 1
      %s31 = ssub.s32 %s23, %s30
      %p32 = scmp.eq.s32.totalorder %s31, 0
      %s34 = sadd.s32 %s33, 1
      %s35 = scalar_select %p32, %s33, %s34
      %p38 = pneg %p32
      %p39 = scmp.eq.s32.totalorder %s23, 1
      %p40 = por %p38, %p39
      %p41 = scmp.ne.s32.totalorder %s33, %s36
      %p42 = scmp.eq.s32.totalorder %s23, 0
      %p43 = por %p41, %p42
      %p44 = scmp.ne.s32.totalorder %s33, %s36
      %p45 = scmp.eq.s32.totalorder %s28, 1
      %p46 = por %p44, %p45
      %p47 = scmp.ne.s32.totalorder %s36, %s37
      %p48 = scmp.eq.s32.totalorder %s28, 0
      %p49 = por %p47, %p48
      %p50 = scmp.ne.s32.totalorder %s36, %s37
      %p51 = scmp.eq.s32.totalorder %s29, 1
      %p52 = por %p50, %p51
      %p54 = scmp.ne.s32.totalorder %s37, %s53
      %p55 = scmp.eq.s32.totalorder %s29, 0
      %p56 = por %p54, %p55
      %s58 = sadd.s32 %s57, 1
      %p61 = scmp.eq.s32.totalorder %s23, 1
      %p62 = scmp.ne.s32.totalorder %s57, %s59
      %p63 = scmp.eq.s32.totalorder %s23, 0
      %p64 = por %p62, %p63
      %p65 = scmp.ne.s32.totalorder %s57, %s59
      %p66 = scmp.eq.s32.totalorder %s28, 1
      %p67 = por %p65, %p66
      %p68 = scmp.ne.s32.totalorder %s59, %s60
      %p69 = scmp.eq.s32.totalorder %s28, 0
      %p70 = por %p68, %p69
      %p71 = scmp.ne.s32.totalorder %s59, %s60
      %p72 = scmp.eq.s32.totalorder %s29, 1
      %p73 = por %p71, %p72
      %p75 = scmp.ne.s32.totalorder %s60, %s74
      %p76 = scmp.eq.s32.totalorder %s29, 0
      %p77 = por %p75, %p76
      %s79 = sadd.s32 %s78, 1
      %p82 = scmp.eq.s32.totalorder %s23, 1
      %p83 = scmp.ne.s32.totalorder %s78, %s80
      %p84 = scmp.eq.s32.totalorder %s23, 0
      %p85 = por %p83, %p84
      %p86 = scmp.ne.s32.totalorder %s78, %s80
      %p87 = scmp.eq.s32.totalorder %s28, 1
      %p88 = por %p86, %p87
      %p89 = scmp.ne.s32.totalorder %s80, %s81
      %p90 = scmp.eq.s32.totalorder %s28, 0
      %p91 = por %p89, %p90
      %p92 = scmp.ne.s32.totalorder %s80, %s81
      %p93 = scmp.eq.s32.totalorder %s29, 1
      %p94 = por %p92, %p93
      %p96 = scmp.ne.s32.totalorder %s81, %s95
      %p97 = scmp.eq.s32.totalorder %s29, 0
      %p98 = por %p96, %p97
      %s100 = sadd.s32 %s99, 1
      %p103 = scmp.eq.s32.totalorder %s23, 1
      %p104 = scmp.ne.s32.totalorder %s99, %s101
      %p105 = scmp.eq.s32.totalorder %s23, 0
      %p106 = por %p104, %p105
      %p107 = scmp.ne.s32.totalorder %s99, %s101
      %p108 = scmp.eq.s32.totalorder %s28, 1
      %p109 = por %p107, %p108
      %p110 = scmp.ne.s32.totalorder %s101, %s102
      %p111 = scmp.eq.s32.totalorder %s28, 0
      %p112 = por %p110, %p111
      %p113 = scmp.ne.s32.totalorder %s101, %s102
      %p114 = scmp.eq.s32.totalorder %s29, 1
      %p115 = por %p113, %p114
      %p117 = scmp.ne.s32.totalorder %s102, %s116
      %p118 = scmp.eq.s32.totalorder %s29, 0
      %p119 = por %p117, %p118
      %s121 = sadd.s32 %s120, 1
      %p124 = scmp.eq.s32.totalorder %s23, 1
      %p125 = scmp.ne.s32.totalorder %s120, %s122
      %p126 = scmp.eq.s32.totalorder %s23, 0
      %p127 = por %p125, %p126
      %p128 = scmp.ne.s32.totalorder %s120, %s122
      %p129 = scmp.eq.s32.totalorder %s28, 1
      %p130 = por %p128, %p129
      %p131 = scmp.ne.s32.totalorder %s122, %s123
      %p132 = scmp.eq.s32.totalorder %s28, 0
      %p133 = por %p131, %p132
      %p134 = scmp.ne.s32.totalorder %s122, %s123
      %p135 = scmp.eq.s32.totalorder %s29, 1
      %p136 = por %p134, %p135
      %p138 = scmp.ne.s32.totalorder %s123, %s137
      %p139 = scmp.eq.s32.totalorder %s29, 0
      %p140 = por %p138, %p139
      %s142 = sadd.s32 %s141, 1
      %p145 = scmp.eq.s32.totalorder %s23, 1
      %p146 = scmp.ne.s32.totalorder %s141, %s143
      %p147 = scmp.eq.s32.totalorder %s23, 0
      %p148 = por %p146, %p147
      %p149 = scmp.ne.s32.totalorder %s141, %s143
      %p150 = scmp.eq.s32.totalorder %s28, 1
      %p151 = por %p149, %p150
      %p152 = scmp.ne.s32.totalorder %s143, %s144
      %p153 = scmp.eq.s32.totalorder %s28, 0
      %p154 = por %p152, %p153
      %p155 = scmp.ne.s32.totalorder %s143, %s144
      %p156 = scmp.eq.s32.totalorder %s29, 1
      %p157 = por %p155, %p156
      %p159 = scmp.ne.s32.totalorder %s144, %s158
      %p160 = scmp.eq.s32.totalorder %s29, 0
      %p161 = por %p159, %p160
      %s163 = sadd.s32 %s162, 1
      %p166 = scmp.eq.s32.totalorder %s23, 1
      %p167 = scmp.ne.s32.totalorder %s162, %s164
      %p168 = scmp.eq.s32.totalorder %s23, 0
      %p169 = por %p167, %p168
      %p170 = scmp.ne.s32.totalorder %s162, %s164
      %p171 = scmp.eq.s32.totalorder %s28, 1
      %p172 = por %p170, %p171
      %p173 = scmp.ne.s32.totalorder %s164, %s165
      %p174 = scmp.eq.s32.totalorder %s28, 0
      %p175 = por %p173, %p174
      %p176 = scmp.ne.s32.totalorder %s164, %s165
      %p177 = scmp.eq.s32.totalorder %s29, 1
      %p178 = por %p176, %p177
      %p180 = scmp.ne.s32.totalorder %s165, %s179
      %p181 = scmp.eq.s32.totalorder %s29, 0
      %p182 = por %p180, %p181
      %s184 = sadd.s32 %s183, 1
      %p187 = scmp.eq.s32.totalorder %s23, 1
      %p188 = scmp.ne.s32.totalorder %s183, %s185
      %p189 = scmp.eq.s32.totalorder %s23, 0
      %p190 = por %p188, %p189
      %p191 = scmp.ne.s32.totalorder %s183, %s185
      %p192 = scmp.eq.s32.totalorder %s28, 1
      %p193 = por %p191, %p192
      %p194 = scmp.ne.s32.totalorder %s185, %s186
      %p195 = scmp.eq.s32.totalorder %s28, 0
      %p196 = por %p194, %p195
      %p197 = scmp.ne.s32.totalorder %s185, %s186
      %p198 = scmp.eq.s32.totalorder %s29, 1
      %p199 = por %p197, %p198
      %p201 = scmp.ne.s32.totalorder %s186, %s200
      %p202 = scmp.eq.s32.totalorder %s29, 0
      %p203 = por %p201, %p202
      %s205 = sadd.s32 %s204, 1
      %p208 = scmp.eq.s32.totalorder %s23, 1
      %p209 = scmp.ne.s32.totalorder %s204, %s206
      %p210 = scmp.eq.s32.totalorder %s23, 0
      %p211 = por %p209, %p210
      %p212 = scmp.ne.s32.totalorder %s204, %s206
      %p213 = scmp.eq.s32.totalorder %s28, 1
      %p214 = por %p212, %p213
      %p215 = scmp.ne.s32.totalorder %s206, %s207
      %p216 = scmp.eq.s32.totalorder %s28, 0
      %p217 = por %p215, %p216
      %p218 = scmp.ne.s32.totalorder %s206, %s207
      %p219 = scmp.eq.s32.totalorder %s29, 1
      %p220 = por %p218, %p219
      %p222 = scmp.ne.s32.totalorder %s207, %s221
      %p223 = scmp.eq.s32.totalorder %s29, 0
      %p224 = por %p222, %p223
      %s226 = sadd.s32 %s225, 1
      %p229 = scmp.eq.s32.totalorder %s23, 1
      %p230 = scmp.ne.s32.totalorder %s225, %s227
      %p231 = scmp.eq.s32.totalorder %s23, 0
      %p232 = por %p230, %p231
      %p233 = scmp.ne.s32.totalorder %s225, %s227
      %p234 = scmp.eq.s32.totalorder %s28, 1
      %p235 = por %p233, %p234
      %p236 = scmp.ne.s32.totalorder %s227, %s228
      %p237 = scmp.eq.s32.totalorder %s28, 0
      %p238 = por %p236, %p237
      %p239 = scmp.ne.s32.totalorder %s227, %s228
      %p240 = scmp.eq.s32.totalorder %s29, 1
      %p241 = por %p239, %p240
      %p243 = scmp.ne.s32.totalorder %s228, %s242
      %p244 = scmp.eq.s32.totalorder %s29, 0
      %p245 = por %p243, %p244
      %s247 = sadd.s32 %s246, 1
      %p250 = scmp.eq.s32.totalorder %s23, 1
      %p251 = scmp.ne.s32.totalorder %s246, %s248
      %p252 = scmp.eq.s32.totalorder %s23, 0
      %p253 = por %p251, %p252
      %p254 = scmp.ne.s32.totalorder %s246, %s248
      %p255 = scmp.eq.s32.totalorder %s28, 1
      %p256 = por %p254, %p255
      %p257 = scmp.ne.s32.totalorder %s248, %s249
      %p258 = scmp.eq.s32.totalorder %s28, 0
      %p259 = por %p257, %p258
      %p260 = scmp.ne.s32.totalorder %s248, %s249
      %p261 = scmp.eq.s32.totalorder %s29, 1
      %p262 = por %p260, %p261
      %p264 = scmp.ne.s32.totalorder %s249, %s263
      %p265 = scmp.eq.s32.totalorder %s29, 0
      %p266 = por %p264, %p265
      %s267 = ssub.s32 %s23, %s30
      %p268 = scmp.eq.s32.totalorder %s267, 0
      %s270 = sadd.s32 %s269, 1
      %s271 = scalar_select %p268, %s269, %s270
      %p274 = pneg %p268
      %p275 = scmp.eq.s32.totalorder %s23, 1
      %p276 = por %p274, %p275
      %p277 = scmp.ne.s32.totalorder %s269, %s272
      %p278 = scmp.eq.s32.totalorder %s23, 0
      %p279 = por %p277, %p278
      %p280 = scmp.ne.s32.totalorder %s269, %s272
      %p281 = scmp.eq.s32.totalorder %s28, 1
      %p282 = por %p280, %p281
      %p283 = scmp.ne.s32.totalorder %s272, %s273
      %p284 = scmp.eq.s32.totalorder %s28, 0
      %p285 = por %p283, %p284
      %p286 = scmp.ne.s32.totalorder %s272, %s273
      %p287 = scmp.eq.s32.totalorder %s29, 1
      %p288 = por %p286, %p287
      %p290 = scmp.ne.s32.totalorder %s273, %s289
      %p291 = scmp.eq.s32.totalorder %s29, 0
      %p292 = por %p290, %p291
      %p293 = scmp.le.s32.totalorder 1, %s23
      %p294 = scmp.lt.s32.totalorder %s23, 3
      %p295 = pnand %p293, %p294
      %p296 = pneg %p295
      // Predicated region
      $region9: #{tpu_custom_call.1} parent=5 // pred_check
        _
      $region10: #{tpu_custom_call.1} parent=5 // pred_check_branch
        %298 = sbr.rel (%p295) target = $region12
      $region11: #{tpu_custom_call.1} parent=5 // pred_region
        %s299 = ssub.s32 %s23, 1
        // Predicated region
        $region13: #{tpu_custom_call.1} parent=11 // pred_check
          %p300 = pneg %p70
        $region14: #{tpu_custom_call.1} parent=11 // pred_check_branch
          %302 = sbr.rel (%p300) target = $region16
        $region15: #{tpu_custom_call.1} parent=11 // pred_region
          _
        $region16: #{tpu_custom_call.1} parent=11 // pred_fallthru
          _
        // Predicated region
        $region17: #{tpu_custom_call.1} parent=11 // pred_check
          %p303 = pneg %p91
        $region18: #{tpu_custom_call.1} parent=11 // pred_check_branch
          %305 = sbr.rel (%p303) target = $region20
        $region19: #{tpu_custom_call.1} parent=11 // pred_region
          _
        $region20: #{tpu_custom_call.1} parent=11 // pred_fallthru
          _
        // Predicated region
        $region21: #{tpu_custom_call.1} parent=11 // pred_check
          %p306 = pneg %p112
        $region22: #{tpu_custom_call.1} parent=11 // pred_check_branch
          %308 = sbr.rel (%p306) target = $region24
        $region23: #{tpu_custom_call.1} parent=11 // pred_region
          _
        $region24: #{tpu_custom_call.1} parent=11 // pred_fallthru
          _
        // Predicated region
        $region25: #{tpu_custom_call.1} parent=11 // pred_check
          %p309 = pneg %p133
        $region26: #{tpu_custom_call.1} parent=11 // pred_check_branch
          %311 = sbr.rel (%p309) target = $region28
        $region27: #{tpu_custom_call.1} parent=11 // pred_region
          _
        $region28: #{tpu_custom_call.1} parent=11 // pred_fallthru
          _
        // Predicated region
        $region29: #{tpu_custom_call.1} parent=11 // pred_check
          %p312 = pneg %p154
        $region30: #{tpu_custom_call.1} parent=11 // pred_check_branch
          %314 = sbr.rel (%p312) target = $region32
        $region31: #{tpu_custom_call.1} parent=11 // pred_region
          _
        $region32: #{tpu_custom_call.1} parent=11 // pred_fallthru
          _
        // Predicated region
        $region33: #{tpu_custom_call.1} parent=11 // pred_check
          %p315 = pneg %p175
        $region34: #{tpu_custom_call.1} parent=11 // pred_check_branch
          %317 = sbr.rel (%p315) target = $region36
        $region35: #{tpu_custom_call.1} parent=11 // pred_region
          _
        $region36: #{tpu_custom_call.1} parent=11 // pred_fallthru
          _
        // Predicated region
        $region37: #{tpu_custom_call.1} parent=11 // pred_check
          %p318 = pneg %p196
        $region38: #{tpu_custom_call.1} parent=11 // pred_check_branch
          %320 = sbr.rel (%p318) target = $region40
        $region39: #{tpu_custom_call.1} parent=11 // pred_region
          _
        $region40: #{tpu_custom_call.1} parent=11 // pred_fallthru
          _
        // Predicated region
        $region41: #{tpu_custom_call.1} parent=11 // pred_check
          %p321 = pneg %p217
        $region42: #{tpu_custom_call.1} parent=11 // pred_check_branch
          %323 = sbr.rel (%p321) target = $region44
        $region43: #{tpu_custom_call.1} parent=11 // pred_region
          _
        $region44: #{tpu_custom_call.1} parent=11 // pred_fallthru
          _
        // Predicated region
        $region45: #{tpu_custom_call.1} parent=11 // pred_check
          %p324 = pneg %p238
        $region46: #{tpu_custom_call.1} parent=11 // pred_check_branch
          %326 = sbr.rel (%p324) target = $region48
        $region47: #{tpu_custom_call.1} parent=11 // pred_region
          _
        $region48: #{tpu_custom_call.1} parent=11 // pred_fallthru
          _
        // Predicated region
        $region49: #{tpu_custom_call.1} parent=11 // pred_check
          %p327 = pneg %p259
        $region50: #{tpu_custom_call.1} parent=11 // pred_check_branch
          %329 = sbr.rel (%p327) target = $region52
        $region51: #{tpu_custom_call.1} parent=11 // pred_region
          _
        $region52: #{tpu_custom_call.1} parent=11 // pred_fallthru
          _
      $region12: #{tpu_custom_call.1} parent=5 // pred_fallthru
        _
      %p330 = scmp.lt.s32.totalorder %s23, 2
      // Predicated region
      $region53: #{tpu_custom_call.1} parent=5 // pred_check
        %p331 = pneg %p330
      $region54: #{tpu_custom_call.1} parent=5 // pred_check_branch
        %333 = sbr.rel (%p331) target = $region56
      $region55: #{tpu_custom_call.1} parent=5 // pred_region
        // Predicated region
        $region57: #{tpu_custom_call.1} parent=55 // pred_check
          %p334 = pneg %p43
        $region58: #{tpu_custom_call.1} parent=55 // pred_check_branch
          %336 = sbr.rel (%p334) target = $region60
        $region59: #{tpu_custom_call.1} parent=55 // pred_region
          %s337 = sand.u32 %s33, 1
          %s338 = scalar_lea.sflag [#allocation3], %s337
          %s339 = sand.u32 %s33, 1
          %s340 = smul.addr %s339, 8
          %s341 = scalar_lea.vmem [#allocation2], %s340
          %s343 = ssub.s32 128, 128
          %344 = vsyncadd %s338, %s343
          %s345 = smul.addr %s23, 128
          %s346 = scalar_lea.hbm %s0, %s345
          %s348 = sshll.u32 %s341, 4
          %s349 = int_to_ptr.vmem [resolvable:$true] %s348
          %351 = dma.hbm_to_vmem [thread:$0]  %s346, 128, %s349, %s338
        $region60: #{tpu_custom_call.1} parent=55 // pred_fallthru
          _
      $region56: #{tpu_custom_call.1} parent=5 // pred_fallthru
        _
      %p352 = scmp.le.s32.totalorder 1, %s23
      %p353 = scmp.lt.s32.totalorder %s23, 3
      %p354 = pnand %p352, %p353
      %p355 = pneg %p354
      // Predicated region
      $region61: #{tpu_custom_call.1} parent=5 // pred_check
        _
      $region62: #{tpu_custom_call.1} parent=5 // pred_check_branch
        %357 = sbr.rel (%p354) target = $region64
      $region63: #{tpu_custom_call.1} parent=5 // pred_region
        %s358 = ssub.s32 %s23, 1
        %s359 = sand.u32 %s36, 1
        %s360 = scalar_lea.sflag [#allocation3], %s359
        %s361 = sand.u32 %s36, 1
        %s362 = smul.addr %s361, 8
        %s363 = scalar_lea.vmem [#allocation2], %s362
        // Predicated region
        $region65: #{tpu_custom_call.1} parent=63 // pred_check
          %p364 = pneg %p49
        $region66: #{tpu_custom_call.1} parent=63 // pred_check_branch
          %366 = sbr.rel (%p364) target = $region68
        $region67: #{tpu_custom_call.1} parent=63 // pred_region
          %367 = dma.done %s360, 128
        $region68: #{tpu_custom_call.1} parent=63 // pred_fallthru
          _
        %s368 = sand.u32 %s36, 1
        %s369 = scalar_lea.sflag [#allocation3], %s368
        %s370 = sand.u32 %s36, 1
        %s371 = smul.addr %s370, 8
        %s372 = scalar_lea.vmem [#allocation2], %s371
        %p373 = pneg %p49
        %p374 = pneg %p46
        %p375 = pneg %p70
        %p376 = pneg %p67
        %p377 = pneg %p91
        %p378 = pneg %p88
        %p379 = pneg %p112
        %p380 = pneg %p109
        %p381 = pneg %p133
        %p382 = pneg %p130
        %p383 = pneg %p154
        %p384 = pneg %p151
        %p385 = pneg %p175
        %p386 = pneg %p172
        %p387 = pneg %p196
        %p388 = pneg %p193
        %p389 = pneg %p217
        %p390 = pneg %p214
        %p391 = pneg %p238
        %p392 = pneg %p235
        %p393 = pneg %p259
        %p394 = pneg %p256
        %p395 = pneg %p285
        %p396 = pneg %p282
        %s397 = sand.u32 %s272, 1
        %s398 = scalar_lea.sflag [#allocation4], %s397
        %s399 = sand.u32 %s272, 1
        %s400 = smul.addr %s399, 8
        %s401 = scalar_lea.vmem [#allocation5], %s400
        %v402 = vld [vmem:[%s363] sm:$0xff]
        %v403 = vld [vmem:[%s3] sm:$0xff]
        %v404 = vld [vmem:[%s3 + $0x8] sm:$0xff]
        %v405 = vld [vmem:[%s3 + $0x10] sm:$0xff]
        %v406 = vld [vmem:[%s3 + $0x18] sm:$0xff]
        %v407 = vld [vmem:[%s4] sm:$0x1]
        %v408 = vld [vmem:[%s5] sm:$0xff]
        %v409 = vld [vmem:[%s5 + $0x8] sm:$0xff]
        %v410 = vld [vmem:[%s5 + $0x10] sm:$0xff]
        %v411 = vld [vmem:[%s5 + $0x18] sm:$0xff]
        %v412 = vld [vmem:[%s6] sm:$0x1]
        %v413 = vld [vmem:[%s7] sm:$0xff]
        %v414 = vld [vmem:[%s7 + $0x8] sm:$0xff]
        %v415 = vld [vmem:[%s7 + $0x10] sm:$0xff]
        %v416 = vld [vmem:[%s7 + $0x18] sm:$0xff]
        %v417 = vld [vmem:[%s7 + $0x20] sm:$0xff]
        %v418 = vld [vmem:[%s7 + $0x28] sm:$0xff]
        %v419 = vld [vmem:[%s7 + $0x30] sm:$0xff]
        %v420 = vld [vmem:[%s7 + $0x38] sm:$0xff]
        %v421 = vld [vmem:[%s8] sm:$0x1]
        %v422 = vld [vmem:[%s9] sm:$0x1]
        %v423 = vld [vmem:[%s10] sm:$0x1]
        %v425 = vlaneseq
        %v426 = vshrl.u32 %v425, 7
        %v427 = vsub.s32 0, %v426
        %v428 = vrot.slane %v407, %v427
        %vm430 = vcmask 261120
        %v432 = vsel %vm430, %v402, 0
        %434 = vmatprep.subr.mxu0 0.0
        %435 = vmatpush1.msra.mxu0 %v403
        %436 = vmatprep.subr.mxu0 0.0
        %437 = vmatpush1.msra.mxu0 %v404
        %438 = vmatprep.subr.mxu0 0.0
        %439 = vmatpush1.msra.mxu0 %v405
        %440 = vmatprep.subr.mxu0 0.0
        %441 = vmatpush1.msra.mxu0 %v406
        %442 = vmatprep.subr.mxu0 0.0
        %443 = vmatpush1.msra.mxu0 0.0
        %444 = vmatprep.subr.mxu0 0.0
        %445 = vmatpush1.msra.mxu0 0.0
        %446 = vmatprep.subr.mxu0 0.0
        %447 = vmatpush1.msra.mxu0 0.0
        %448 = vmatprep.subr.mxu0 0.0
        %449 = vmatpush1.msra.mxu0 0.0
        %450 = vmatprep.subr.mxu0 0.0
        %451 = vmatpush1.msra.mxu0 0.0
        %452 = vmatprep.subr.mxu0 0.0
        %453 = vmatpush1.msra.mxu0 0.0
        %454 = vmatprep.subr.mxu0 0.0
        %455 = vmatpush1.msra.mxu0 0.0
        %456 = vmatprep.subr.mxu0 0.0
        %457 = vmatpush1.msra.mxu0 0.0
        %458 = vmatprep.subr.mxu0 0.0
        %459 = vmatpush1.msra.mxu0 0.0
        %460 = vmatprep.subr.mxu0 0.0
        %461 = vmatpush1.msra.mxu0 0.0
        %462 = vmatprep.subr.mxu0 0.0
        %463 = vmatpush1.msra.mxu0 0.0
        %464 = vmatprep.subr.mxu0 0.0
        %465 = vmatpush1.msra.mxu0 0.0
        %466 = vmatprep.subr.mxu0 0.0
        %467 = vmatpush1.msra.mxu0 0.0
        %468 = vmatprep.subr.mxu0 0.0
        %469 = vmatpush1.msra.mxu0 0.0
        %470 = vmatprep.subr.mxu0 0.0
        %471 = vmatpush1.msra.mxu0 0.0
        %472 = vmatprep.subr.mxu0 0.0
        %473 = vmatpush1.msra.mxu0 0.0
        %474 = vmatprep.subr.mxu0 0.0
        %475 = vmatpush1.msra.mxu0 0.0
        %476 = vmatprep.subr.mxu0 0.0
        %477 = vmatpush1.msra.mxu0 0.0
        %478 = vmatprep.subr.mxu0 0.0
        %479 = vmatpush1.msra.mxu0 0.0
        %480 = vmatprep.subr.mxu0 0.0
        %481 = vmatpush1.msra.mxu0 0.0
        %482 = vmatprep.subr.mxu0 0.0
        %483 = vmatpush1.msra.mxu0 0.0
        %484 = vmatprep.subr.mxu0 0.0
        %485 = vmatpush1.msra.mxu0 0.0
        %486 = vmatprep.subr.mxu0 0.0
        %487 = vmatpush1.msra.mxu0 0.0
        %488 = vmatprep.subr.mxu0 0.0
        %489 = vmatpush1.msra.mxu0 0.0
        %490 = vmatprep.subr.mxu0 0.0
        %491 = vmatpush1.msra.mxu0 0.0
        %492 = vmatprep.subr.mxu0 0.0
        %493 = vmatpush1.msra.mxu0 0.0
        %494 = vmatprep.subr.mxu0 0.0
        %495 = vmatpush1.msra.mxu0 0.0
        %496 = vmatprep.subr.mxu0 0.0
        %497 = vmatpush1.msra.mxu0 0.0
        %498 = vmatprep.mubr.f32.mxu0 0.0
        %499 = vmatmul.mubr.f32.gmra.mrb[0].mxu0 %v432
        %v500 = vpop.f32.mrb[0].mxu0
        %v501 = vadd.f32 %v428, %v500
        %v502 = vpop.f32.mrb[0].mxu0
        %503 = vdwg.mxu0
        %v504 = vmul.f32 %v501, 0.35355338
        %506 = vrot.lane.b32.xlu0 %v501, 120
        %v507 = vpop.permute.xlu0 %506
        %vm508 = vcmask 64512
        %v510 = vsel %vm508, %v504, 0
        %v512 = vsel %vm508, %v507, 0
        %514 = vmatprep.subr.mxu0 0.0
        %515 = vmatpush1.xpose.msra.mxu0 %v512
        %516 = vmatprep.subr.mxu0 0.0
        %517 = vmatpush1.xpose.msra.mxu0 0.0
        %518 = vmatprep.subr.mxu0 0.0
        %519 = vmatpush1.xpose.msra.mxu0 0.0
        %520 = vmatprep.subr.mxu0 0.0
        %521 = vmatpush1.xpose.msra.mxu0 0.0
        %522 = vmatprep.subr.mxu0 0.0
        %523 = vmatpush1.xpose.msra.mxu0 0.0
        %524 = vmatprep.subr.mxu0 0.0
        %525 = vmatpush1.xpose.msra.mxu0 0.0
        %526 = vmatprep.subr.mxu0 0.0
        %527 = vmatpush1.xpose.msra.mxu0 0.0
        %528 = vmatprep.subr.mxu0 0.0
        %529 = vmatpush1.xpose.msra.mxu0 0.0
        %530 = vmatprep.subr.mxu0 0.0
        %531 = vmatpush1.xpose.msra.mxu0 0.0
        %532 = vmatprep.subr.mxu0 0.0
        %533 = vmatpush1.xpose.msra.mxu0 0.0
        %534 = vmatprep.subr.mxu0 0.0
        %535 = vmatpush1.xpose.msra.mxu0 0.0
        %536 = vmatprep.subr.mxu0 0.0
        %537 = vmatpush1.xpose.msra.mxu0 0.0
        %538 = vmatprep.subr.mxu0 0.0
        %539 = vmatpush1.xpose.msra.mxu0 0.0
        %540 = vmatprep.subr.mxu0 0.0
        %541 = vmatpush1.xpose.msra.mxu0 0.0
        %542 = vmatprep.subr.mxu0 0.0
        %543 = vmatpush1.xpose.msra.mxu0 0.0
        %544 = vmatprep.subr.mxu0 0.0
        %545 = vmatpush1.xpose.msra.mxu0 0.0
        %546 = vmatprep.subr.mxu0 0.0
        %547 = vmatpush1.xpose.msra.mxu0 0.0
        %548 = vmatprep.subr.mxu0 0.0
        %549 = vmatpush1.xpose.msra.mxu0 0.0
        %550 = vmatprep.subr.mxu0 0.0
        %551 = vmatpush1.xpose.msra.mxu0 0.0
        %552 = vmatprep.subr.mxu0 0.0
        %553 = vmatpush1.xpose.msra.mxu0 0.0
        %554 = vmatprep.subr.mxu0 0.0
        %555 = vmatpush1.xpose.msra.mxu0 0.0
        %556 = vmatprep.subr.mxu0 0.0
        %557 = vmatpush1.xpose.msra.mxu0 0.0
        %558 = vmatprep.subr.mxu0 0.0
        %559 = vmatpush1.xpose.msra.mxu0 0.0
        %560 = vmatprep.subr.mxu0 0.0
        %561 = vmatpush1.xpose.msra.mxu0 0.0
        %562 = vmatprep.subr.mxu0 0.0
        %563 = vmatpush1.xpose.msra.mxu0 0.0
        %564 = vmatprep.subr.mxu0 0.0
        %565 = vmatpush1.xpose.msra.mxu0 0.0
        %566 = vmatprep.subr.mxu0 0.0
        %567 = vmatpush1.xpose.msra.mxu0 0.0
        %568 = vmatprep.subr.mxu0 0.0
        %569 = vmatpush1.xpose.msra.mxu0 0.0
        %570 = vmatprep.subr.mxu0 0.0
        %571 = vmatpush1.xpose.msra.mxu0 0.0
        %572 = vmatprep.subr.mxu0 0.0
        %573 = vmatpush1.xpose.msra.mxu0 0.0
        %574 = vmatprep.subr.mxu0 0.0
        %575 = vmatpush1.xpose.msra.mxu0 0.0
        %576 = vmatprep.subr.mxu0 0.0
        %577 = vmatpush1.xpose.msra.mxu0 0.0
        %578 = vmatprep.mubr.f32.mxu0 0.0
        %579 = vmatmul.mubr.f32.gmra.mrb[0].mxu0 %v510
        %v580 = vpop.f32.mrb[0].mxu0
        %v581 = vadd.f32 0.0, %v580
        %v582 = vpop.f32.mrb[0].mxu0
        %583 = vdwg.mxu0
        %v584 = vsel %vm508, %v581, -inf
        %585 = vmax.xlane.f32.xlu0 %v584
        %v586 = vpop.xlane.xlu0 %585
        %v587 = vsub.f32 %v581, %v586
        %v588 = vmul.f32 %v587, 1.442695
        %v589 = vpow.pop %v588
        %v590 = vsel %vm508, %v589, 0.0
        %591 = vadd.xlane.f32.xlu0 %v590
        %v592 = vpop.xlane.xlu0 %591
        %v593 = vrcp.pop %v592
        %v594 = vmul.f32 %v592, %v593
        %v595 = vsub.f32 2.0, %v594
        %v596 = vmul.f32 %v593, %v595
        %v597 = vmul.f32 %v589, %v596
        %598 = vrot.lane.b32.xlu0 %v501, 112
        %v599 = vpop.permute.xlu0 %598
        %v602 = vsel %vm508, %v597, 0
        %604 = vmatprep.subr.mxu0 0.0
        %605 = vmatpush1.msra.mxu0 %v599
        %606 = vmatprep.subr.mxu0 0.0
        %607 = vmatpush1.msra.mxu0 0.0
        %608 = vmatprep.subr.mxu0 0.0
        %609 = vmatpush1.msra.mxu0 0.0
        %610 = vmatprep.subr.mxu0 0.0
        %611 = vmatpush1.msra.mxu0 0.0
        %612 = vmatprep.subr.mxu0 0.0
        %613 = vmatpush1.msra.mxu0 0.0
        %614 = vmatprep.subr.mxu0 0.0
        %615 = vmatpush1.msra.mxu0 0.0
        %616 = vmatprep.subr.mxu0 0.0
        %617 = vmatpush1.msra.mxu0 0.0
        %618 = vmatprep.subr.mxu0 0.0
        %619 = vmatpush1.msra.mxu0 0.0
        %620 = vmatprep.subr.mxu0 0.0
        %621 = vmatpush1.msra.mxu0 0.0
        %622 = vmatprep.subr.mxu0 0.0
        %623 = vmatpush1.msra.mxu0 0.0
        %624 = vmatprep.subr.mxu0 0.0
        %625 = vmatpush1.msra.mxu0 0.0
        %626 = vmatprep.subr.mxu0 0.0
        %627 = vmatpush1.msra.mxu0 0.0
        %628 = vmatprep.subr.mxu0 0.0
        %629 = vmatpush1.msra.mxu0 0.0
        %630 = vmatprep.subr.mxu0 0.0
        %631 = vmatpush1.msra.mxu0 0.0
        %632 = vmatprep.subr.mxu0 0.0
        %633 = vmatpush1.msra.mxu0 0.0
        %634 = vmatprep.subr.mxu0 0.0
        %635 = vmatpush1.msra.mxu0 0.0
        %636 = vmatprep.subr.mxu0 0.0
        %637 = vmatpush1.msra.mxu0 0.0
        %638 = vmatprep.subr.mxu0 0.0
        %639 = vmatpush1.msra.mxu0 0.0
        %640 = vmatprep.subr.mxu0 0.0
        %641 = vmatpush1.msra.mxu0 0.0
        %642 = vmatprep.subr.mxu0 0.0
        %643 = vmatpush1.msra.mxu0 0.0
        %644 = vmatprep.subr.mxu0 0.0
        %645 = vmatpush1.msra.mxu0 0.0
        %646 = vmatprep.subr.mxu0 0.0
        %647 = vmatpush1.msra.mxu0 0.0
        %648 = vmatprep.subr.mxu0 0.0
        %649 = vmatpush1.msra.mxu0 0.0
        %650 = vmatprep.subr.mxu0 0.0
        %651 = vmatpush1.msra.mxu0 0.0
        %652 = vmatprep.subr.mxu0 0.0
        %653 = vmatpush1.msra.mxu0 0.0
        %654 = vmatprep.subr.mxu0 0.0
        %655 = vmatpush1.msra.mxu0 0.0
        %656 = vmatprep.subr.mxu0 0.0
        %657 = vmatpush1.msra.mxu0 0.0
        %658 = vmatprep.subr.mxu0 0.0
        %659 = vmatpush1.msra.mxu0 0.0
        %660 = vmatprep.subr.mxu0 0.0
        %661 = vmatpush1.msra.mxu0 0.0
        %662 = vmatprep.subr.mxu0 0.0
        %663 = vmatpush1.msra.mxu0 0.0
        %664 = vmatprep.subr.mxu0 0.0
        %665 = vmatpush1.msra.mxu0 0.0
        %666 = vmatprep.subr.mxu0 0.0
        %667 = vmatpush1.msra.mxu0 0.0
        %668 = vmatprep.mubr.f32.mxu0 0.0
        %669 = vmatmul.mubr.f32.gmra.mrb[0].mxu0 %v602
        %v670 = vpop.f32.mrb[0].mxu0
        %v671 = vadd.f32 0.0, %v670
        %v672 = vpop.f32.mrb[0].mxu0
        %673 = vdwg.mxu0
        %674 = vrot.lane.b32.xlu0 %v504, 104
        %v675 = vpop.permute.xlu0 %674
        %676 = vrot.lane.b32.xlu0 %v501, 96
        %v677 = vpop.permute.xlu0 %676
        %v678 = vsel %vm508, %v675, 0
        %v680 = vsel %vm508, %v677, 0
        %682 = vmatprep.subr.mxu0 0.0
        %683 = vmatpush1.xpose.msra.mxu0 %v680
        %684 = vmatprep.subr.mxu0 0.0
        %685 = vmatpush1.xpose.msra.mxu0 0.0
        %686 = vmatprep.subr.mxu0 0.0
        %687 = vmatpush1.xpose.msra.mxu0 0.0
        %688 = vmatprep.subr.mxu0 0.0
        %689 = vmatpush1.xpose.msra.mxu0 0.0
        %690 = vmatprep.subr.mxu0 0.0
        %691 = vmatpush1.xpose.msra.mxu0 0.0
        %692 = vmatprep.subr.mxu0 0.0
        %693 = vmatpush1.xpose.msra.mxu0 0.0
        %694 = vmatprep.subr.mxu0 0.0
        %695 = vmatpush1.xpose.msra.mxu0 0.0
        %696 = vmatprep.subr.mxu0 0.0
        %697 = vmatpush1.xpose.msra.mxu0 0.0
        %698 = vmatprep.subr.mxu0 0.0
        %699 = vmatpush1.xpose.msra.mxu0 0.0
        %700 = vmatprep.subr.mxu0 0.0
        %701 = vmatpush1.xpose.msra.mxu0 0.0
        %702 = vmatprep.subr.mxu0 0.0
        %703 = vmatpush1.xpose.msra.mxu0 0.0
        %704 = vmatprep.subr.mxu0 0.0
        %705 = vmatpush1.xpose.msra.mxu0 0.0
        %706 = vmatprep.subr.mxu0 0.0
        %707 = vmatpush1.xpose.msra.mxu0 0.0
        %708 = vmatprep.subr.mxu0 0.0
        %709 = vmatpush1.xpose.msra.mxu0 0.0
        %710 = vmatprep.subr.mxu0 0.0
        %711 = vmatpush1.xpose.msra.mxu0 0.0
        %712 = vmatprep.subr.mxu0 0.0
        %713 = vmatpush1.xpose.msra.mxu0 0.0
        %714 = vmatprep.subr.mxu0 0.0
        %715 = vmatpush1.xpose.msra.mxu0 0.0
        %716 = vmatprep.subr.mxu0 0.0
        %717 = vmatpush1.xpose.msra.mxu0 0.0
        %718 = vmatprep.subr.mxu0 0.0
        %719 = vmatpush1.xpose.msra.mxu0 0.0
        %720 = vmatprep.subr.mxu0 0.0
        %721 = vmatpush1.xpose.msra.mxu0 0.0
        %722 = vmatprep.subr.mxu0 0.0
        %723 = vmatpush1.xpose.msra.mxu0 0.0
        %724 = vmatprep.subr.mxu0 0.0
        %725 = vmatpush1.xpose.msra.mxu0 0.0
        %726 = vmatprep.subr.mxu0 0.0
        %727 = vmatpush1.xpose.msra.mxu0 0.0
        %728 = vmatprep.subr.mxu0 0.0
        %729 = vmatpush1.xpose.msra.mxu0 0.0
        %730 = vmatprep.subr.mxu0 0.0
        %731 = vmatpush1.xpose.msra.mxu0 0.0
        %732 = vmatprep.subr.mxu0 0.0
        %733 = vmatpush1.xpose.msra.mxu0 0.0
        %734 = vmatprep.subr.mxu0 0.0
        %735 = vmatpush1.xpose.msra.mxu0 0.0
        %736 = vmatprep.subr.mxu0 0.0
        %737 = vmatpush1.xpose.msra.mxu0 0.0
        %738 = vmatprep.subr.mxu0 0.0
        %739 = vmatpush1.xpose.msra.mxu0 0.0
        %740 = vmatprep.subr.mxu0 0.0
        %741 = vmatpush1.xpose.msra.mxu0 0.0
        %742 = vmatprep.subr.mxu0 0.0
        %743 = vmatpush1.xpose.msra.mxu0 0.0
        %744 = vmatprep.subr.mxu0 0.0
        %745 = vmatpush1.xpose.msra.mxu0 0.0
        %746 = vmatprep.mubr.f32.mxu0 0.0
        %747 = vmatmul.mubr.f32.gmra.mrb[0].mxu0 %v678
        %v748 = vpop.f32.mrb[0].mxu0
        %v749 = vadd.f32 0.0, %v748
        %v750 = vpop.f32.mrb[0].mxu0
        %751 = vdwg.mxu0
        %v752 = vsel %vm508, %v749, -inf
        %753 = vmax.xlane.f32.xlu0 %v752
        %v754 = vpop.xlane.xlu0 %753
        %v755 = vsub.f32 %v749, %v754
        %v756 = vmul.f32 %v755, 1.442695
        %v757 = vpow.pop %v756
        %v758 = vsel %vm508, %v757, 0.0
        %759 = vadd.xlane.f32.xlu0 %v758
        %v760 = vpop.xlane.xlu0 %759
        %v761 = vrcp.pop %v760
        %v762 = vmul.f32 %v760, %v761
        %v763 = vsub.f32 2.0, %v762
        %v764 = vmul.f32 %v761, %v763
        %v765 = vmul.f32 %v757, %v764
        %766 = vrot.lane.b32.xlu0 %v501, 88
        %v767 = vpop.permute.xlu0 %766
        %v770 = vsel %vm508, %v765, 0
        %772 = vmatprep.subr.mxu0 0.0
        %773 = vmatpush1.msra.mxu0 %v767
        %774 = vmatprep.subr.mxu0 0.0
        %775 = vmatpush1.msra.mxu0 0.0
        %776 = vmatprep.subr.mxu0 0.0
        %777 = vmatpush1.msra.mxu0 0.0
        %778 = vmatprep.subr.mxu0 0.0
        %779 = vmatpush1.msra.mxu0 0.0
        %780 = vmatprep.subr.mxu0 0.0
        %781 = vmatpush1.msra.mxu0 0.0
        %782 = vmatprep.subr.mxu0 0.0
        %783 = vmatpush1.msra.mxu0 0.0
        %784 = vmatprep.subr.mxu0 0.0
        %785 = vmatpush1.msra.mxu0 0.0
        %786 = vmatprep.subr.mxu0 0.0
        %787 = vmatpush1.msra.mxu0 0.0
        %788 = vmatprep.subr.mxu0 0.0
        %789 = vmatpush1.msra.mxu0 0.0
        %790 = vmatprep.subr.mxu0 0.0
        %791 = vmatpush1.msra.mxu0 0.0
        %792 = vmatprep.subr.mxu0 0.0
        %793 = vmatpush1.msra.mxu0 0.0
        %794 = vmatprep.subr.mxu0 0.0
        %795 = vmatpush1.msra.mxu0 0.0
        %796 = vmatprep.subr.mxu0 0.0
        %797 = vmatpush1.msra.mxu0 0.0
        %798 = vmatprep.subr.mxu0 0.0
        %799 = vmatpush1.msra.mxu0 0.0
        %800 = vmatprep.subr.mxu0 0.0
        %801 = vmatpush1.msra.mxu0 0.0
        %802 = vmatprep.subr.mxu0 0.0
        %803 = vmatpush1.msra.mxu0 0.0
        %804 = vmatprep.subr.mxu0 0.0
        %805 = vmatpush1.msra.mxu0 0.0
        %806 = vmatprep.subr.mxu0 0.0
        %807 = vmatpush1.msra.mxu0 0.0
        %808 = vmatprep.subr.mxu0 0.0
        %809 = vmatpush1.msra.mxu0 0.0
        %810 = vmatprep.subr.mxu0 0.0
        %811 = vmatpush1.msra.mxu0 0.0
        %812 = vmatprep.subr.mxu0 0.0
        %813 = vmatpush1.msra.mxu0 0.0
        %814 = vmatprep.subr.mxu0 0.0
        %815 = vmatpush1.msra.mxu0 0.0
        %816 = vmatprep.subr.mxu0 0.0
        %817 = vmatpush1.msra.mxu0 0.0
        %818 = vmatprep.subr.mxu0 0.0
        %819 = vmatpush1.msra.mxu0 0.0
        %820 = vmatprep.subr.mxu0 0.0
        %821 = vmatpush1.msra.mxu0 0.0
        %822 = vmatprep.subr.mxu0 0.0
        %823 = vmatpush1.msra.mxu0 0.0
        %824 = vmatprep.subr.mxu0 0.0
        %825 = vmatpush1.msra.mxu0 0.0
        %826 = vmatprep.subr.mxu0 0.0
        %827 = vmatpush1.msra.mxu0 0.0
        %828 = vmatprep.subr.mxu0 0.0
        %829 = vmatpush1.msra.mxu0 0.0
        %830 = vmatprep.subr.mxu0 0.0
        %831 = vmatpush1.msra.mxu0 0.0
        %832 = vmatprep.subr.mxu0 0.0
        %833 = vmatpush1.msra.mxu0 0.0
        %834 = vmatprep.subr.mxu0 0.0
        %835 = vmatpush1.msra.mxu0 0.0
        %836 = vmatprep.mubr.f32.mxu0 0.0
        %837 = vmatmul.mubr.f32.gmra.mrb[0].mxu0 %v770
        %v838 = vpop.f32.mrb[0].mxu0
        %v839 = vadd.f32 0.0, %v838
        %v840 = vpop.f32.mrb[0].mxu0
        %841 = vdwg.mxu0
        %842 = vrot.lane.b32.xlu0 %v504, 80
        %v843 = vpop.permute.xlu0 %842
        %844 = vrot.lane.b32.xlu0 %v501, 72
        %v845 = vpop.permute.xlu0 %844
        %v846 = vsel %vm508, %v843, 0
        %v848 = vsel %vm508, %v845, 0
        %850 = vmatprep.subr.mxu0 0.0
        %851 = vmatpush1.xpose.msra.mxu0 %v848
        %852 = vmatprep.subr.mxu0 0.0
        %853 = vmatpush1.xpose.msra.mxu0 0.0
        %854 = vmatprep.subr.mxu0 0.0
        %855 = vmatpush1.xpose.msra.mxu0 0.0
        %856 = vmatprep.subr.mxu0 0.0
        %857 = vmatpush1.xpose.msra.mxu0 0.0
        %858 = vmatprep.subr.mxu0 0.0
        %859 = vmatpush1.xpose.msra.mxu0 0.0
        %860 = vmatprep.subr.mxu0 0.0
        %861 = vmatpush1.xpose.msra.mxu0 0.0
        %862 = vmatprep.subr.mxu0 0.0
        %863 = vmatpush1.xpose.msra.mxu0 0.0
        %864 = vmatprep.subr.mxu0 0.0
        %865 = vmatpush1.xpose.msra.mxu0 0.0
        %866 = vmatprep.subr.mxu0 0.0
        %867 = vmatpush1.xpose.msra.mxu0 0.0
        %868 = vmatprep.subr.mxu0 0.0
        %869 = vmatpush1.xpose.msra.mxu0 0.0
        %870 = vmatprep.subr.mxu0 0.0
        %871 = vmatpush1.xpose.msra.mxu0 0.0
        %872 = vmatprep.subr.mxu0 0.0
        %873 = vmatpush1.xpose.msra.mxu0 0.0
        %874 = vmatprep.subr.mxu0 0.0
        %875 = vmatpush1.xpose.msra.mxu0 0.0
        %876 = vmatprep.subr.mxu0 0.0
        %877 = vmatpush1.xpose.msra.mxu0 0.0
        %878 = vmatprep.subr.mxu0 0.0
        %879 = vmatpush1.xpose.msra.mxu0 0.0
        %880 = vmatprep.subr.mxu0 0.0
        %881 = vmatpush1.xpose.msra.mxu0 0.0
        %882 = vmatprep.subr.mxu0 0.0
        %883 = vmatpush1.xpose.msra.mxu0 0.0
        %884 = vmatprep.subr.mxu0 0.0
        %885 = vmatpush1.xpose.msra.mxu0 0.0
        %886 = vmatprep.subr.mxu0 0.0
        %887 = vmatpush1.xpose.msra.mxu0 0.0
        %888 = vmatprep.subr.mxu0 0.0
        %889 = vmatpush1.xpose.msra.mxu0 0.0
        %890 = vmatprep.subr.mxu0 0.0
        %891 = vmatpush1.xpose.msra.mxu0 0.0
        %892 = vmatprep.subr.mxu0 0.0
        %893 = vmatpush1.xpose.msra.mxu0 0.0
        %894 = vmatprep.subr.mxu0 0.0
        %895 = vmatpush1.xpose.msra.mxu0 0.0
        %896 = vmatprep.subr.mxu0 0.0
        %897 = vmatpush1.xpose.msra.mxu0 0.0
        %898 = vmatprep.subr.mxu0 0.0
        %899 = vmatpush1.xpose.msra.mxu0 0.0
        %900 = vmatprep.subr.mxu0 0.0
        %901 = vmatpush1.xpose.msra.mxu0 0.0
        %902 = vmatprep.subr.mxu0 0.0
        %903 = vmatpush1.xpose.msra.mxu0 0.0
        %904 = vmatprep.subr.mxu0 0.0
        %905 = vmatpush1.xpose.msra.mxu0 0.0
        %906 = vmatprep.subr.mxu0 0.0
        %907 = vmatpush1.xpose.msra.mxu0 0.0
        %908 = vmatprep.subr.mxu0 0.0
        %909 = vmatpush1.xpose.msra.mxu0 0.0
        %910 = vmatprep.subr.mxu0 0.0
        %911 = vmatpush1.xpose.msra.mxu0 0.0
        %912 = vmatprep.subr.mxu0 0.0
        %913 = vmatpush1.xpose.msra.mxu0 0.0
        %914 = vmatprep.mubr.f32.mxu0 0.0
        %915 = vmatmul.mubr.f32.gmra.mrb[0].mxu0 %v846
        %v916 = vpop.f32.mrb[0].mxu0
        %v917 = vadd.f32 0.0, %v916
        %v918 = vpop.f32.mrb[0].mxu0
        %919 = vdwg.mxu0
        %v920 = vsel %vm508, %v917, -inf
        %921 = vmax.xlane.f32.xlu0 %v920
        %v922 = vpop.xlane.xlu0 %921
        %v923 = vsub.f32 %v917, %v922
        %v924 = vmul.f32 %v923, 1.442695
        %v925 = vpow.pop %v924
        %v926 = vsel %vm508, %v925, 0.0
        %927 = vadd.xlane.f32.xlu0 %v926
        %v928 = vpop.xlane.xlu0 %927
        %v929 = vrcp.pop %v928
        %v930 = vmul.f32 %v928, %v929
        %v931 = vsub.f32 2.0, %v930
        %v932 = vmul.f32 %v929, %v931
        %v933 = vmul.f32 %v925, %v932
        %934 = vrot.lane.b32.xlu0 %v501, 64
        %v935 = vpop.permute.xlu0 %934
        %v938 = vsel %vm508, %v933, 0
        %940 = vmatprep.subr.mxu0 0.0
        %941 = vmatpush1.msra.mxu0 %v935
        %942 = vmatprep.subr.mxu0 0.0
        %943 = vmatpush1.msra.mxu0 0.0
        %944 = vmatprep.subr.mxu0 0.0
        %945 = vmatpush1.msra.mxu0 0.0
        %946 = vmatprep.subr.mxu0 0.0
        %947 = vmatpush1.msra.mxu0 0.0
        %948 = vmatprep.subr.mxu0 0.0
        %949 = vmatpush1.msra.mxu0 0.0
        %950 = vmatprep.subr.mxu0 0.0
        %951 = vmatpush1.msra.mxu0 0.0
        %952 = vmatprep.subr.mxu0 0.0
        %953 = vmatpush1.msra.mxu0 0.0
        %954 = vmatprep.subr.mxu0 0.0
        %955 = vmatpush1.msra.mxu0 0.0
        %956 = vmatprep.subr.mxu0 0.0
        %957 = vmatpush1.msra.mxu0 0.0
        %958 = vmatprep.subr.mxu0 0.0
        %959 = vmatpush1.msra.mxu0 0.0
        %960 = vmatprep.subr.mxu0 0.0
        %961 = vmatpush1.msra.mxu0 0.0
        %962 = vmatprep.subr.mxu0 0.0
        %963 = vmatpush1.msra.mxu0 0.0
        %964 = vmatprep.subr.mxu0 0.0
        %965 = vmatpush1.msra.mxu0 0.0
        %966 = vmatprep.subr.mxu0 0.0
        %967 = vmatpush1.msra.mxu0 0.0
        %968 = vmatprep.subr.mxu0 0.0
        %969 = vmatpush1.msra.mxu0 0.0
        %970 = vmatprep.subr.mxu0 0.0
        %971 = vmatpush1.msra.mxu0 0.0
        %972 = vmatprep.subr.mxu0 0.0
        %973 = vmatpush1.msra.mxu0 0.0
        %974 = vmatprep.subr.mxu0 0.0
        %975 = vmatpush1.msra.mxu0 0.0
        %976 = vmatprep.subr.mxu0 0.0
        %977 = vmatpush1.msra.mxu0 0.0
        %978 = vmatprep.subr.mxu0 0.0
        %979 = vmatpush1.msra.mxu0 0.0
        %980 = vmatprep.subr.mxu0 0.0
        %981 = vmatpush1.msra.mxu0 0.0
        %982 = vmatprep.subr.mxu0 0.0
        %983 = vmatpush1.msra.mxu0 0.0
        %984 = vmatprep.subr.mxu0 0.0
        %985 = vmatpush1.msra.mxu0 0.0
        %986 = vmatprep.subr.mxu0 0.0
        %987 = vmatpush1.msra.mxu0 0.0
        %988 = vmatprep.subr.mxu0 0.0
        %989 = vmatpush1.msra.mxu0 0.0
        %990 = vmatprep.subr.mxu0 0.0
        %991 = vmatpush1.msra.mxu0 0.0
        %992 = vmatprep.subr.mxu0 0.0
        %993 = vmatpush1.msra.mxu0 0.0
        %994 = vmatprep.subr.mxu0 0.0
        %995 = vmatpush1.msra.mxu0 0.0
        %996 = vmatprep.subr.mxu0 0.0
        %997 = vmatpush1.msra.mxu0 0.0
        %998 = vmatprep.subr.mxu0 0.0
        %999 = vmatpush1.msra.mxu0 0.0
        %1000 = vmatprep.subr.mxu0 0.0
        %1001 = vmatpush1.msra.mxu0 0.0
        %1002 = vmatprep.subr.mxu0 0.0
        %1003 = vmatpush1.msra.mxu0 0.0
        %1004 = vmatprep.mubr.f32.mxu0 0.0
        %1005 = vmatmul.mubr.f32.gmra.mrb[0].mxu0 %v938
        %v1006 = vpop.f32.mrb[0].mxu0
        %v1007 = vadd.f32 0.0, %v1006
        %v1008 = vpop.f32.mrb[0].mxu0
        %1009 = vdwg.mxu0
        %1010 = vrot.lane.b32.xlu0 %v504, 56
        %v1011 = vpop.permute.xlu0 %1010
        %1012 = vrot.lane.b32.xlu0 %v501, 48
        %v1013 = vpop.permute.xlu0 %1012
        %v1014 = vsel %vm508, %v1011, 0
        %v1016 = vsel %vm508, %v1013, 0
        %1018 = vmatprep.subr.mxu0 0.0
        %1019 = vmatpush1.xpose.msra.mxu0 %v1016
        %1020 = vmatprep.subr.mxu0 0.0
        %1021 = vmatpush1.xpose.msra.mxu0 0.0
        %1022 = vmatprep.subr.mxu0 0.0
        %1023 = vmatpush1.xpose.msra.mxu0 0.0
        %1024 = vmatprep.subr.mxu0 0.0
        %1025 = vmatpush1.xpose.msra.mxu0 0.0
        %1026 = vmatprep.subr.mxu0 0.0
        %1027 = vmatpush1.xpose.msra.mxu0 0.0
        %1028 = vmatprep.subr.mxu0 0.0
        %1029 = vmatpush1.xpose.msra.mxu0 0.0
        %1030 = vmatprep.subr.mxu0 0.0
        %1031 = vmatpush1.xpose.msra.mxu0 0.0
        %1032 = vmatprep.subr.mxu0 0.0
        %1033 = vmatpush1.xpose.msra.mxu0 0.0
        %1034 = vmatprep.subr.mxu0 0.0
        %1035 = vmatpush1.xpose.msra.mxu0 0.0
        %1036 = vmatprep.subr.mxu0 0.0
        %1037 = vmatpush1.xpose.msra.mxu0 0.0
        %1038 = vmatprep.subr.mxu0 0.0
        %1039 = vmatpush1.xpose.msra.mxu0 0.0
        %1040 = vmatprep.subr.mxu0 0.0
        %1041 = vmatpush1.xpose.msra.mxu0 0.0
        %1042 = vmatprep.subr.mxu0 0.0
        %1043 = vmatpush1.xpose.msra.mxu0 0.0
        %1044 = vmatprep.subr.mxu0 0.0
        %1045 = vmatpush1.xpose.msra.mxu0 0.0
        %1046 = vmatprep.subr.mxu0 0.0
        %1047 = vmatpush1.xpose.msra.mxu0 0.0
        %1048 = vmatprep.subr.mxu0 0.0
        %1049 = vmatpush1.xpose.msra.mxu0 0.0
        %1050 = vmatprep.subr.mxu0 0.0
        %1051 = vmatpush1.xpose.msra.mxu0 0.0
        %1052 = vmatprep.subr.mxu0 0.0
        %1053 = vmatpush1.xpose.msra.mxu0 0.0
        %1054 = vmatprep.subr.mxu0 0.0
        %1055 = vmatpush1.xpose.msra.mxu0 0.0
        %1056 = vmatprep.subr.mxu0 0.0
        %1057 = vmatpush1.xpose.msra.mxu0 0.0
        %1058 = vmatprep.subr.mxu0 0.0
        %1059 = vmatpush1.xpose.msra.mxu0 0.0
        %1060 = vmatprep.subr.mxu0 0.0
        %1061 = vmatpush1.xpose.msra.mxu0 0.0
        %1062 = vmatprep.subr.mxu0 0.0
        %1063 = vmatpush1.xpose.msra.mxu0 0.0
        %1064 = vmatprep.subr.mxu0 0.0
        %1065 = vmatpush1.xpose.msra.mxu0 0.0
        %1066 = vmatprep.subr.mxu0 0.0
        %1067 = vmatpush1.xpose.msra.mxu0 0.0
        %1068 = vmatprep.subr.mxu0 0.0
        %1069 = vmatpush1.xpose.msra.mxu0 0.0
        %1070 = vmatprep.subr.mxu0 0.0
        %1071 = vmatpush1.xpose.msra.mxu0 0.0
        %1072 = vmatprep.subr.mxu0 0.0
        %1073 = vmatpush1.xpose.msra.mxu0 0.0
        %1074 = vmatprep.subr.mxu0 0.0
        %1075 = vmatpush1.xpose.msra.mxu0 0.0
        %1076 = vmatprep.subr.mxu0 0.0
        %1077 = vmatpush1.xpose.msra.mxu0 0.0
        %1078 = vmatprep.subr.mxu0 0.0
        %1079 = vmatpush1.xpose.msra.mxu0 0.0
        %1080 = vmatprep.subr.mxu0 0.0
        %1081 = vmatpush1.xpose.msra.mxu0 0.0
        %1082 = vmatprep.mubr.f32.mxu0 0.0
        %1083 = vmatmul.mubr.f32.gmra.mrb[0].mxu0 %v1014
        %v1084 = vpop.f32.mrb[0].mxu0
        %v1085 = vadd.f32 0.0, %v1084
        %v1086 = vpop.f32.mrb[0].mxu0
        %1087 = vdwg.mxu0
        %v1088 = vsel %vm508, %v1085, -inf
        %1089 = vmax.xlane.f32.xlu0 %v1088
        %v1090 = vpop.xlane.xlu0 %1089
        %v1091 = vsub.f32 %v1085, %v1090
        %v1092 = vmul.f32 %v1091, 1.442695
        %v1093 = vpow.pop %v1092
        %v1094 = vsel %vm508, %v1093, 0.0
        %1095 = vadd.xlane.f32.xlu0 %v1094
        %v1096 = vpop.xlane.xlu0 %1095
        %v1097 = vrcp.pop %v1096
        %v1098 = vmul.f32 %v1096, %v1097
        %v1099 = vsub.f32 2.0, %v1098
        %v1100 = vmul.f32 %v1097, %v1099
        %v1101 = vmul.f32 %v1093, %v1100
        %1102 = vrot.lane.b32.xlu0 %v501, 40
        %v1103 = vpop.permute.xlu0 %1102
        %v1106 = vsel %vm508, %v1101, 0
        %1108 = vmatprep.subr.mxu0 0.0
        %1109 = vmatpush1.msra.mxu0 %v1103
        %1110 = vmatprep.subr.mxu0 0.0
        %1111 = vmatpush1.msra.mxu0 0.0
        %1112 = vmatprep.subr.mxu0 0.0
        %1113 = vmatpush1.msra.mxu0 0.0
        %1114 = vmatprep.subr.mxu0 0.0
        %1115 = vmatpush1.msra.mxu0 0.0
        %1116 = vmatprep.subr.mxu0 0.0
        %1117 = vmatpush1.msra.mxu0 0.0
        %1118 = vmatprep.subr.mxu0 0.0
        %1119 = vmatpush1.msra.mxu0 0.0
        %1120 = vmatprep.subr.mxu0 0.0
        %1121 = vmatpush1.msra.mxu0 0.0
        %1122 = vmatprep.subr.mxu0 0.0
        %1123 = vmatpush1.msra.mxu0 0.0
        %1124 = vmatprep.subr.mxu0 0.0
        %1125 = vmatpush1.msra.mxu0 0.0
        %1126 = vmatprep.subr.mxu0 0.0
        %1127 = vmatpush1.msra.mxu0 0.0
        %1128 = vmatprep.subr.mxu0 0.0
        %1129 = vmatpush1.msra.mxu0 0.0
        %1130 = vmatprep.subr.mxu0 0.0
        %1131 = vmatpush1.msra.mxu0 0.0
        %1132 = vmatprep.subr.mxu0 0.0
        %1133 = vmatpush1.msra.mxu0 0.0
        %1134 = vmatprep.subr.mxu0 0.0
        %1135 = vmatpush1.msra.mxu0 0.0
        %1136 = vmatprep.subr.mxu0 0.0
        %1137 = vmatpush1.msra.mxu0 0.0
        %1138 = vmatprep.subr.mxu0 0.0
        %1139 = vmatpush1.msra.mxu0 0.0
        %1140 = vmatprep.subr.mxu0 0.0
        %1141 = vmatpush1.msra.mxu0 0.0
        %1142 = vmatprep.subr.mxu0 0.0
        %1143 = vmatpush1.msra.mxu0 0.0
        %1144 = vmatprep.subr.mxu0 0.0
        %1145 = vmatpush1.msra.mxu0 0.0
        %1146 = vmatprep.subr.mxu0 0.0
        %1147 = vmatpush1.msra.mxu0 0.0
        %1148 = vmatprep.subr.mxu0 0.0
        %1149 = vmatpush1.msra.mxu0 0.0
        %1150 = vmatprep.subr.mxu0 0.0
        %1151 = vmatpush1.msra.mxu0 0.0
        %1152 = vmatprep.subr.mxu0 0.0
        %1153 = vmatpush1.msra.mxu0 0.0
        %1154 = vmatprep.subr.mxu0 0.0
        %1155 = vmatpush1.msra.mxu0 0.0
        %1156 = vmatprep.subr.mxu0 0.0
        %1157 = vmatpush1.msra.mxu0 0.0
        %1158 = vmatprep.subr.mxu0 0.0
        %1159 = vmatpush1.msra.mxu0 0.0
        %1160 = vmatprep.subr.mxu0 0.0
        %1161 = vmatpush1.msra.mxu0 0.0
        %1162 = vmatprep.subr.mxu0 0.0
        %1163 = vmatpush1.msra.mxu0 0.0
        %1164 = vmatprep.subr.mxu0 0.0
        %1165 = vmatpush1.msra.mxu0 0.0
        %1166 = vmatprep.subr.mxu0 0.0
        %1167 = vmatpush1.msra.mxu0 0.0
        %1168 = vmatprep.subr.mxu0 0.0
        %1169 = vmatpush1.msra.mxu0 0.0
        %1170 = vmatprep.subr.mxu0 0.0
        %1171 = vmatpush1.msra.mxu0 0.0
        %1172 = vmatprep.mubr.f32.mxu0 0.0
        %1173 = vmatmul.mubr.f32.gmra.mrb[0].mxu0 %v1106
        %v1174 = vpop.f32.mrb[0].mxu0
        %v1175 = vadd.f32 0.0, %v1174
        %v1176 = vpop.f32.mrb[0].mxu0
        %1177 = vdwg.mxu0
        %v1178 = vld [vmem:[%s1] sm:$0xff]
        %v1180 = vsel %vm430, %v1178, 0
        %1182 = vmatprep.subr.mxu0 0.0
        %1183 = vmatpush1.msra.mxu0 %v671
        %1184 = vmatprep.subr.mxu0 0.0
        %1185 = vmatpush1.msra.mxu0 %v839
        %1186 = vmatprep.subr.mxu0 0.0
        %1187 = vmatpush1.msra.mxu0 %v1007
        %1188 = vmatprep.subr.mxu0 0.0
        %1189 = vmatpush1.msra.mxu0 %v1175
        %1190 = vmatprep.subr.mxu0 0.0
        %1191 = vmatpush1.msra.mxu0 0.0
        %1192 = vmatprep.subr.mxu0 0.0
        %1193 = vmatpush1.msra.mxu0 0.0
        %1194 = vmatprep.subr.mxu0 0.0
        %1195 = vmatpush1.msra.mxu0 0.0
        %1196 = vmatprep.subr.mxu0 0.0
        %1197 = vmatpush1.msra.mxu0 0.0
        %1198 = vmatprep.subr.mxu0 0.0
        %1199 = vmatpush1.msra.mxu0 0.0
        %1200 = vmatprep.subr.mxu0 0.0
        %1201 = vmatpush1.msra.mxu0 0.0
        %1202 = vmatprep.subr.mxu0 0.0
        %1203 = vmatpush1.msra.mxu0 0.0
        %1204 = vmatprep.subr.mxu0 0.0
        %1205 = vmatpush1.msra.mxu0 0.0
        %1206 = vmatprep.subr.mxu0 0.0
        %1207 = vmatpush1.msra.mxu0 0.0
        %1208 = vmatprep.subr.mxu0 0.0
        %1209 = vmatpush1.msra.mxu0 0.0
        %1210 = vmatprep.subr.mxu0 0.0
        %1211 = vmatpush1.msra.mxu0 0.0
        %1212 = vmatprep.subr.mxu0 0.0
        %1213 = vmatpush1.msra.mxu0 0.0
        %1214 = vmatprep.subr.mxu0 0.0
        %1215 = vmatpush1.msra.mxu0 0.0
        %1216 = vmatprep.subr.mxu0 0.0
        %1217 = vmatpush1.msra.mxu0 0.0
        %1218 = vmatprep.subr.mxu0 0.0
        %1219 = vmatpush1.msra.mxu0 0.0
        %1220 = vmatprep.subr.mxu0 0.0
        %1221 = vmatpush1.msra.mxu0 0.0
        %1222 = vmatprep.subr.mxu0 0.0
        %1223 = vmatpush1.msra.mxu0 0.0
        %1224 = vmatprep.subr.mxu0 0.0
        %1225 = vmatpush1.msra.mxu0 0.0
        %1226 = vmatprep.subr.mxu0 0.0
        %1227 = vmatpush1.msra.mxu0 0.0
        %1228 = vmatprep.subr.mxu0 0.0
        %1229 = vmatpush1.msra.mxu0 0.0
        %1230 = vmatprep.subr.mxu0 0.0
        %1231 = vmatpush1.msra.mxu0 0.0
        %1232 = vmatprep.subr.mxu0 0.0
        %1233 = vmatpush1.msra.mxu0 0.0
        %1234 = vmatprep.subr.mxu0 0.0
        %1235 = vmatpush1.msra.mxu0 0.0
        %1236 = vmatprep.subr.mxu0 0.0
        %1237 = vmatpush1.msra.mxu0 0.0
        %1238 = vmatprep.subr.mxu0 0.0
        %1239 = vmatpush1.msra.mxu0 0.0
        %1240 = vmatprep.subr.mxu0 0.0
        %1241 = vmatpush1.msra.mxu0 0.0
        %1242 = vmatprep.subr.mxu0 0.0
        %1243 = vmatpush1.msra.mxu0 0.0
        %1244 = vmatprep.subr.mxu0 0.0
        %1245 = vmatpush1.msra.mxu0 0.0
        %1246 = vmatprep.mubr.f32.mxu0 0.0
        %1247 = vmatmul.mubr.f32.gmra.mrb[0].mxu0 %v1180
        %v1248 = vpop.f32.mrb[0].mxu0
        %v1249 = vadd.f32 0.0, %v1248
        %v1250 = vpop.f32.mrb[0].mxu0
        %1251 = vdwg.mxu0
        %v1252 = vld [vmem:[%s2] sm:$0xff]
        %s1253 = scalar_lea.vmem %s1, 8
        %v1254 = vld [vmem:[%s1253] sm:$0xff]
        %v1256 = vsel %vm430, %v1254, 0
        %1258 = vmatprep.subr.mxu0 0.0
        %1259 = vmatpush1.msra.mxu0 %v671
        %1260 = vmatprep.subr.mxu0 0.0
        %1261 = vmatpush1.msra.mxu0 %v839
        %1262 = vmatprep.subr.mxu0 0.0
        %1263 = vmatpush1.msra.mxu0 %v1007
        %1264 = vmatprep.subr.mxu0 0.0
        %1265 = vmatpush1.msra.mxu0 %v1175
        %1266 = vmatprep.subr.mxu0 0.0
        %1267 = vmatpush1.msra.mxu0 0.0
        %1268 = vmatprep.subr.mxu0 0.0
        %1269 = vmatpush1.msra.mxu0 0.0
        %1270 = vmatprep.subr.mxu0 0.0
        %1271 = vmatpush1.msra.mxu0 0.0
        %1272 = vmatprep.subr.mxu0 0.0
        %1273 = vmatpush1.msra.mxu0 0.0
        %1274 = vmatprep.subr.mxu0 0.0
        %1275 = vmatpush1.msra.mxu0 0.0
        %1276 = vmatprep.subr.mxu0 0.0
        %1277 = vmatpush1.msra.mxu0 0.0
        %1278 = vmatprep.subr.mxu0 0.0
        %1279 = vmatpush1.msra.mxu0 0.0
        %1280 = vmatprep.subr.mxu0 0.0
        %1281 = vmatpush1.msra.mxu0 0.0
        %1282 = vmatprep.subr.mxu0 0.0
        %1283 = vmatpush1.msra.mxu0 0.0
        %1284 = vmatprep.subr.mxu0 0.0
        %1285 = vmatpush1.msra.mxu0 0.0
        %1286 = vmatprep.subr.mxu0 0.0
        %1287 = vmatpush1.msra.mxu0 0.0
        %1288 = vmatprep.subr.mxu0 0.0
        %1289 = vmatpush1.msra.mxu0 0.0
        %1290 = vmatprep.subr.mxu0 0.0
        %1291 = vmatpush1.msra.mxu0 0.0
        %1292 = vmatprep.subr.mxu0 0.0
        %1293 = vmatpush1.msra.mxu0 0.0
        %1294 = vmatprep.subr.mxu0 0.0
        %1295 = vmatpush1.msra.mxu0 0.0
        %1296 = vmatprep.subr.mxu0 0.0
        %1297 = vmatpush1.msra.mxu0 0.0
        %1298 = vmatprep.subr.mxu0 0.0
        %1299 = vmatpush1.msra.mxu0 0.0
        %1300 = vmatprep.subr.mxu0 0.0
        %1301 = vmatpush1.msra.mxu0 0.0
        %1302 = vmatprep.subr.mxu0 0.0
        %1303 = vmatpush1.msra.mxu0 0.0
        %1304 = vmatprep.subr.mxu0 0.0
        %1305 = vmatpush1.msra.mxu0 0.0
        %1306 = vmatprep.subr.mxu0 0.0
        %1307 = vmatpush1.msra.mxu0 0.0
        %1308 = vmatprep.subr.mxu0 0.0
        %1309 = vmatpush1.msra.mxu0 0.0
        %1310 = vmatprep.subr.mxu0 0.0
        %1311 = vmatpush1.msra.mxu0 0.0
        %1312 = vmatprep.subr.mxu0 0.0
        %1313 = vmatpush1.msra.mxu0 0.0
        %1314 = vmatprep.subr.mxu0 0.0
        %1315 = vmatpush1.msra.mxu0 0.0
        %1316 = vmatprep.subr.mxu0 0.0
        %1317 = vmatpush1.msra.mxu0 0.0
        %1318 = vmatprep.subr.mxu0 0.0
        %1319 = vmatpush1.msra.mxu0 0.0
        %1320 = vmatprep.subr.mxu0 0.0
        %1321 = vmatpush1.msra.mxu0 0.0
        %1322 = vmatprep.mubr.f32.mxu0 0.0
        %1323 = vmatmul.mubr.f32.gmra.mrb[0].mxu0 %v1256
        %v1324 = vpop.f32.mrb[0].mxu0
        %v1325 = vadd.f32 0.0, %v1324
        %v1326 = vpop.f32.mrb[0].mxu0
        %1327 = vdwg.mxu0
        %s1328 = scalar_lea.vmem %s2, 8
        %v1329 = vld [vmem:[%s1328] sm:$0xff]
        %v1331 = vsel %vm508, %v1325, 0
        %1333 = vmatprep.subr.mxu0 0.0
        %1334 = vmatpush1.msra.mxu0 %v1329
        %1335 = vmatprep.subr.mxu0 0.0
        %1336 = vmatpush1.msra.mxu0 0.0
        %1337 = vmatprep.subr.mxu0 0.0
        %1338 = vmatpush1.msra.mxu0 0.0
        %1339 = vmatprep.subr.mxu0 0.0
        %1340 = vmatpush1.msra.mxu0 0.0
        %1341 = vmatprep.subr.mxu0 0.0
        %1342 = vmatpush1.msra.mxu0 0.0
        %1343 = vmatprep.subr.mxu0 0.0
        %1344 = vmatpush1.msra.mxu0 0.0
        %1345 = vmatprep.subr.mxu0 0.0
        %1346 = vmatpush1.msra.mxu0 0.0
        %1347 = vmatprep.subr.mxu0 0.0
        %1348 = vmatpush1.msra.mxu0 0.0
        %1349 = vmatprep.subr.mxu0 0.0
        %1350 = vmatpush1.msra.mxu0 0.0
        %1351 = vmatprep.subr.mxu0 0.0
        %1352 = vmatpush1.msra.mxu0 0.0
        %1353 = vmatprep.subr.mxu0 0.0
        %1354 = vmatpush1.msra.mxu0 0.0
        %1355 = vmatprep.subr.mxu0 0.0
        %1356 = vmatpush1.msra.mxu0 0.0
        %1357 = vmatprep.subr.mxu0 0.0
        %1358 = vmatpush1.msra.mxu0 0.0
        %1359 = vmatprep.subr.mxu0 0.0
        %1360 = vmatpush1.msra.mxu0 0.0
        %1361 = vmatprep.subr.mxu0 0.0
        %1362 = vmatpush1.msra.mxu0 0.0
        %1363 = vmatprep.subr.mxu0 0.0
        %1364 = vmatpush1.msra.mxu0 0.0
        %1365 = vmatprep.subr.mxu0 0.0
        %1366 = vmatpush1.msra.mxu0 0.0
        %1367 = vmatprep.subr.mxu0 0.0
        %1368 = vmatpush1.msra.mxu0 0.0
        %1369 = vmatprep.subr.mxu0 0.0
        %1370 = vmatpush1.msra.mxu0 0.0
        %1371 = vmatprep.subr.mxu0 0.0
        %1372 = vmatpush1.msra.mxu0 0.0
        %1373 = vmatprep.subr.mxu0 0.0
        %1374 = vmatpush1.msra.mxu0 0.0
        %1375 = vmatprep.subr.mxu0 0.0
        %1376 = vmatpush1.msra.mxu0 0.0
        %1377 = vmatprep.subr.mxu0 0.0
        %1378 = vmatpush1.msra.mxu0 0.0
        %1379 = vmatprep.subr.mxu0 0.0
        %1380 = vmatpush1.msra.mxu0 0.0
        %1381 = vmatprep.subr.mxu0 0.0
        %1382 = vmatpush1.msra.mxu0 0.0
        %1383 = vmatprep.subr.mxu0 0.0
        %1384 = vmatpush1.msra.mxu0 0.0
        %1385 = vmatprep.subr.mxu0 0.0
        %1386 = vmatpush1.msra.mxu0 0.0
        %1387 = vmatprep.subr.mxu0 0.0
        %1388 = vmatpush1.msra.mxu0 0.0
        %1389 = vmatprep.subr.mxu0 0.0
        %1390 = vmatpush1.msra.mxu0 0.0
        %1391 = vmatprep.subr.mxu0 0.0
        %1392 = vmatpush1.msra.mxu0 0.0
        %1393 = vmatprep.subr.mxu0 0.0
        %1394 = vmatpush1.msra.mxu0 0.0
        %1395 = vmatprep.subr.mxu0 0.0
        %1396 = vmatpush1.msra.mxu0 0.0
        %1397 = vmatprep.mubr.f32.mxu0 0.0
        %1398 = vmatmul.mubr.f32.gmra.mrb[0].mxu0 %v1331
        %v1399 = vpop.f32.mrb[0].mxu0
        %v1400 = vadd.f32 0.0, %v1399
        %v1401 = vpop.f32.mrb[0].mxu0
        %1402 = vdwg.mxu0
        %v1404 = vsel %vm508, %v1249, 0
        %1406 = vmatprep.subr.mxu0 0.0
        %1407 = vmatpush1.msra.mxu0 %v1252
        %1408 = vmatprep.subr.mxu0 0.0
        %1409 = vmatpush1.msra.mxu0 0.0
        %1410 = vmatprep.subr.mxu0 0.0
        %1411 = vmatpush1.msra.mxu0 0.0
        %1412 = vmatprep.subr.mxu0 0.0
        %1413 = vmatpush1.msra.mxu0 0.0
        %1414 = vmatprep.subr.mxu0 0.0
        %1415 = vmatpush1.msra.mxu0 0.0
        %1416 = vmatprep.subr.mxu0 0.0
        %1417 = vmatpush1.msra.mxu0 0.0
        %1418 = vmatprep.subr.mxu0 0.0
        %1419 = vmatpush1.msra.mxu0 0.0
        %1420 = vmatprep.subr.mxu0 0.0
        %1421 = vmatpush1.msra.mxu0 0.0
        %1422 = vmatprep.subr.mxu0 0.0
        %1423 = vmatpush1.msra.mxu0 0.0
        %1424 = vmatprep.subr.mxu0 0.0
        %1425 = vmatpush1.msra.mxu0 0.0
        %1426 = vmatprep.subr.mxu0 0.0
        %1427 = vmatpush1.msra.mxu0 0.0
        %1428 = vmatprep.subr.mxu0 0.0
        %1429 = vmatpush1.msra.mxu0 0.0
        %1430 = vmatprep.subr.mxu0 0.0
        %1431 = vmatpush1.msra.mxu0 0.0
        %1432 = vmatprep.subr.mxu0 0.0
        %1433 = vmatpush1.msra.mxu0 0.0
        %1434 = vmatprep.subr.mxu0 0.0
        %1435 = vmatpush1.msra.mxu0 0.0
        %1436 = vmatprep.subr.mxu0 0.0
        %1437 = vmatpush1.msra.mxu0 0.0
        %1438 = vmatprep.subr.mxu0 0.0
        %1439 = vmatpush1.msra.mxu0 0.0
        %1440 = vmatprep.subr.mxu0 0.0
        %1441 = vmatpush1.msra.mxu0 0.0
        %1442 = vmatprep.subr.mxu0 0.0
        %1443 = vmatpush1.msra.mxu0 0.0
        %1444 = vmatprep.subr.mxu0 0.0
        %1445 = vmatpush1.msra.mxu0 0.0
        %1446 = vmatprep.subr.mxu0 0.0
        %1447 = vmatpush1.msra.mxu0 0.0
        %1448 = vmatprep.subr.mxu0 0.0
        %1449 = vmatpush1.msra.mxu0 0.0
        %1450 = vmatprep.subr.mxu0 0.0
        %1451 = vmatpush1.msra.mxu0 0.0
        %1452 = vmatprep.subr.mxu0 0.0
        %1453 = vmatpush1.msra.mxu0 0.0
        %1454 = vmatprep.subr.mxu0 0.0
        %1455 = vmatpush1.msra.mxu0 0.0
        %1456 = vmatprep.subr.mxu0 0.0
        %1457 = vmatpush1.msra.mxu0 0.0
        %1458 = vmatprep.subr.mxu0 0.0
        %1459 = vmatpush1.msra.mxu0 0.0
        %1460 = vmatprep.subr.mxu0 0.0
        %1461 = vmatpush1.msra.mxu0 0.0
        %1462 = vmatprep.subr.mxu0 0.0
        %1463 = vmatpush1.msra.mxu0 0.0
        %1464 = vmatprep.subr.mxu0 0.0
        %1465 = vmatpush1.msra.mxu0 0.0
        %1466 = vmatprep.subr.mxu0 0.0
        %1467 = vmatpush1.msra.mxu0 0.0
        %1468 = vmatprep.subr.mxu0 0.0
        %1469 = vmatpush1.msra.mxu0 0.0
        %1470 = vmatprep.mubr.f32.mxu0 0.0
        %1471 = vmatmul.mubr.f32.gmra.mrb[0].mxu0 %v1404
        %v1472 = vpop.f32.mrb[0].mxu0
        %v1473 = vadd.f32 %v1400, %v1472
        %v1474 = vpop.f32.mrb[0].mxu0
        %1475 = vdwg.mxu0
        %s1476 = scalar_lea.vmem %s1, 16
        %v1477 = vld [vmem:[%s1476] sm:$0xff]
        %v1479 = vsel %vm430, %v1477, 0
        %1481 = vmatprep.subr.mxu0 0.0
        %1482 = vmatpush1.msra.mxu0 %v671
        %1483 = vmatprep.subr.mxu0 0.0
        %1484 = vmatpush1.msra.mxu0 %v839
        %1485 = vmatprep.subr.mxu0 0.0
        %1486 = vmatpush1.msra.mxu0 %v1007
        %1487 = vmatprep.subr.mxu0 0.0
        %1488 = vmatpush1.msra.mxu0 %v1175
        %1489 = vmatprep.subr.mxu0 0.0
        %1490 = vmatpush1.msra.mxu0 0.0
        %1491 = vmatprep.subr.mxu0 0.0
        %1492 = vmatpush1.msra.mxu0 0.0
        %1493 = vmatprep.subr.mxu0 0.0
        %1494 = vmatpush1.msra.mxu0 0.0
        %1495 = vmatprep.subr.mxu0 0.0
        %1496 = vmatpush1.msra.mxu0 0.0
        %1497 = vmatprep.subr.mxu0 0.0
        %1498 = vmatpush1.msra.mxu0 0.0
        %1499 = vmatprep.subr.mxu0 0.0
        %1500 = vmatpush1.msra.mxu0 0.0
        %1501 = vmatprep.subr.mxu0 0.0
        %1502 = vmatpush1.msra.mxu0 0.0
        %1503 = vmatprep.subr.mxu0 0.0
        %1504 = vmatpush1.msra.mxu0 0.0
        %1505 = vmatprep.subr.mxu0 0.0
        %1506 = vmatpush1.msra.mxu0 0.0
        %1507 = vmatprep.subr.mxu0 0.0
        %1508 = vmatpush1.msra.mxu0 0.0
        %1509 = vmatprep.subr.mxu0 0.0
        %1510 = vmatpush1.msra.mxu0 0.0
        %1511 = vmatprep.subr.mxu0 0.0
        %1512 = vmatpush1.msra.mxu0 0.0
        %1513 = vmatprep.subr.mxu0 0.0
        %1514 = vmatpush1.msra.mxu0 0.0
        %1515 = vmatprep.subr.mxu0 0.0
        %1516 = vmatpush1.msra.mxu0 0.0
        %1517 = vmatprep.subr.mxu0 0.0
        %1518 = vmatpush1.msra.mxu0 0.0
        %1519 = vmatprep.subr.mxu0 0.0
        %1520 = vmatpush1.msra.mxu0 0.0
        %1521 = vmatprep.subr.mxu0 0.0
        %1522 = vmatpush1.msra.mxu0 0.0
        %1523 = vmatprep.subr.mxu0 0.0
        %1524 = vmatpush1.msra.mxu0 0.0
        %1525 = vmatprep.subr.mxu0 0.0
        %1526 = vmatpush1.msra.mxu0 0.0
        %1527 = vmatprep.subr.mxu0 0.0
        %1528 = vmatpush1.msra.mxu0 0.0
        %1529 = vmatprep.subr.mxu0 0.0
        %1530 = vmatpush1.msra.mxu0 0.0
        %1531 = vmatprep.subr.mxu0 0.0
        %1532 = vmatpush1.msra.mxu0 0.0
        %1533 = vmatprep.subr.mxu0 0.0
        %1534 = vmatpush1.msra.mxu0 0.0
        %1535 = vmatprep.subr.mxu0 0.0
        %1536 = vmatpush1.msra.mxu0 0.0
        %1537 = vmatprep.subr.mxu0 0.0
        %1538 = vmatpush1.msra.mxu0 0.0
        %1539 = vmatprep.subr.mxu0 0.0
        %1540 = vmatpush1.msra.mxu0 0.0
        %1541 = vmatprep.subr.mxu0 0.0
        %1542 = vmatpush1.msra.mxu0 0.0
        %1543 = vmatprep.subr.mxu0 0.0
        %1544 = vmatpush1.msra.mxu0 0.0
        %1545 = vmatprep.mubr.f32.mxu0 0.0
        %1546 = vmatmul.mubr.f32.gmra.mrb[0].mxu0 %v1479
        %v1547 = vpop.f32.mrb[0].mxu0
        %v1548 = vadd.f32 0.0, %v1547
        %v1549 = vpop.f32.mrb[0].mxu0
        %1550 = vdwg.mxu0
        %s1551 = scalar_lea.vmem %s2, 16
        %v1552 = vld [vmem:[%s1551] sm:$0xff]
        %v1554 = vsel %vm508, %v1548, 0
        %1556 = vmatprep.subr.mxu0 0.0
        %1557 = vmatpush1.msra.mxu0 %v1552
        %1558 = vmatprep.subr.mxu0 0.0
        %1559 = vmatpush1.msra.mxu0 0.0
        %1560 = vmatprep.subr.mxu0 0.0
        %1561 = vmatpush1.msra.mxu0 0.0
        %1562 = vmatprep.subr.mxu0 0.0
        %1563 = vmatpush1.msra.mxu0 0.0
        %1564 = vmatprep.subr.mxu0 0.0
        %1565 = vmatpush1.msra.mxu0 0.0
        %1566 = vmatprep.subr.mxu0 0.0
        %1567 = vmatpush1.msra.mxu0 0.0
        %1568 = vmatprep.subr.mxu0 0.0
        %1569 = vmatpush1.msra.mxu0 0.0
        %1570 = vmatprep.subr.mxu0 0.0
        %1571 = vmatpush1.msra.mxu0 0.0
        %1572 = vmatprep.subr.mxu0 0.0
        %1573 = vmatpush1.msra.mxu0 0.0
        %1574 = vmatprep.subr.mxu0 0.0
        %1575 = vmatpush1.msra.mxu0 0.0
        %1576 = vmatprep.subr.mxu0 0.0
        %1577 = vmatpush1.msra.mxu0 0.0
        %1578 = vmatprep.subr.mxu0 0.0
        %1579 = vmatpush1.msra.mxu0 0.0
        %1580 = vmatprep.subr.mxu0 0.0
        %1581 = vmatpush1.msra.mxu0 0.0
        %1582 = vmatprep.subr.mxu0 0.0
        %1583 = vmatpush1.msra.mxu0 0.0
        %1584 = vmatprep.subr.mxu0 0.0
        %1585 = vmatpush1.msra.mxu0 0.0
        %1586 = vmatprep.subr.mxu0 0.0
        %1587 = vmatpush1.msra.mxu0 0.0
        %1588 = vmatprep.subr.mxu0 0.0
        %1589 = vmatpush1.msra.mxu0 0.0
        %1590 = vmatprep.subr.mxu0 0.0
        %1591 = vmatpush1.msra.mxu0 0.0
        %1592 = vmatprep.subr.mxu0 0.0
        %1593 = vmatpush1.msra.mxu0 0.0
        %1594 = vmatprep.subr.mxu0 0.0
        %1595 = vmatpush1.msra.mxu0 0.0
        %1596 = vmatprep.subr.mxu0 0.0
        %1597 = vmatpush1.msra.mxu0 0.0
        %1598 = vmatprep.subr.mxu0 0.0
        %1599 = vmatpush1.msra.mxu0 0.0
        %1600 = vmatprep.subr.mxu0 0.0
        %1601 = vmatpush1.msra.mxu0 0.0
        %1602 = vmatprep.subr.mxu0 0.0
        %1603 = vmatpush1.msra.mxu0 0.0
        %1604 = vmatprep.subr.mxu0 0.0
        %1605 = vmatpush1.msra.mxu0 0.0
        %1606 = vmatprep.subr.mxu0 0.0
        %1607 = vmatpush1.msra.mxu0 0.0
        %1608 = vmatprep.subr.mxu0 0.0
        %1609 = vmatpush1.msra.mxu0 0.0
        %1610 = vmatprep.subr.mxu0 0.0
        %1611 = vmatpush1.msra.mxu0 0.0
        %1612 = vmatprep.subr.mxu0 0.0
        %1613 = vmatpush1.msra.mxu0 0.0
        %1614 = vmatprep.subr.mxu0 0.0
        %1615 = vmatpush1.msra.mxu0 0.0
        %1616 = vmatprep.subr.mxu0 0.0
        %1617 = vmatpush1.msra.mxu0 0.0
        %1618 = vmatprep.subr.mxu0 0.0
        %1619 = vmatpush1.msra.mxu0 0.0
        %1620 = vmatprep.mubr.f32.mxu0 0.0
        %1621 = vmatmul.mubr.f32.gmra.mrb[0].mxu0 %v1554
        %v1622 = vpop.f32.mrb[0].mxu0
        %v1623 = vadd.f32 0.0, %v1622
        %v1624 = vpop.f32.mrb[0].mxu0
        %1625 = vdwg.mxu0
        %v1626 = vadd.f32 %v1473, %v1623
        %s1627 = scalar_lea.vmem %s1, 24
        %v1628 = vld [vmem:[%s1627] sm:$0xff]
        %v1630 = vsel %vm430, %v1628, 0
        %1632 = vmatprep.subr.mxu0 0.0
        %1633 = vmatpush1.msra.mxu0 %v671
        %1634 = vmatprep.subr.mxu0 0.0
        %1635 = vmatpush1.msra.mxu0 %v839
        %1636 = vmatprep.subr.mxu0 0.0
        %1637 = vmatpush1.msra.mxu0 %v1007
        %1638 = vmatprep.subr.mxu0 0.0
        %1639 = vmatpush1.msra.mxu0 %v1175
        %1640 = vmatprep.subr.mxu0 0.0
        %1641 = vmatpush1.msra.mxu0 0.0
        %1642 = vmatprep.subr.mxu0 0.0
        %1643 = vmatpush1.msra.mxu0 0.0
        %1644 = vmatprep.subr.mxu0 0.0
        %1645 = vmatpush1.msra.mxu0 0.0
        %1646 = vmatprep.subr.mxu0 0.0
        %1647 = vmatpush1.msra.mxu0 0.0
        %1648 = vmatprep.subr.mxu0 0.0
        %1649 = vmatpush1.msra.mxu0 0.0
        %1650 = vmatprep.subr.mxu0 0.0
        %1651 = vmatpush1.msra.mxu0 0.0
        %1652 = vmatprep.subr.mxu0 0.0
        %1653 = vmatpush1.msra.mxu0 0.0
        %1654 = vmatprep.subr.mxu0 0.0
        %1655 = vmatpush1.msra.mxu0 0.0
        %1656 = vmatprep.subr.mxu0 0.0
        %1657 = vmatpush1.msra.mxu0 0.0
        %1658 = vmatprep.subr.mxu0 0.0
        %1659 = vmatpush1.msra.mxu0 0.0
        %1660 = vmatprep.subr.mxu0 0.0
        %1661 = vmatpush1.msra.mxu0 0.0
        %1662 = vmatprep.subr.mxu0 0.0
        %1663 = vmatpush1.msra.mxu0 0.0
        %1664 = vmatprep.subr.mxu0 0.0
        %1665 = vmatpush1.msra.mxu0 0.0
        %1666 = vmatprep.subr.mxu0 0.0
        %1667 = vmatpush1.msra.mxu0 0.0
        %1668 = vmatprep.subr.mxu0 0.0
        %1669 = vmatpush1.msra.mxu0 0.0
        %1670 = vmatprep.subr.mxu0 0.0
        %1671 = vmatpush1.msra.mxu0 0.0
        %1672 = vmatprep.subr.mxu0 0.0
        %1673 = vmatpush1.msra.mxu0 0.0
        %1674 = vmatprep.subr.mxu0 0.0
        %1675 = vmatpush1.msra.mxu0 0.0
        %1676 = vmatprep.subr.mxu0 0.0
        %1677 = vmatpush1.msra.mxu0 0.0
        %1678 = vmatprep.subr.mxu0 0.0
        %1679 = vmatpush1.msra.mxu0 0.0
        %1680 = vmatprep.subr.mxu0 0.0
        %1681 = vmatpush1.msra.mxu0 0.0
        %1682 = vmatprep.subr.mxu0 0.0
        %1683 = vmatpush1.msra.mxu0 0.0
        %1684 = vmatprep.subr.mxu0 0.0
        %1685 = vmatpush1.msra.mxu0 0.0
        %1686 = vmatprep.subr.mxu0 0.0
        %1687 = vmatpush1.msra.mxu0 0.0
        %1688 = vmatprep.subr.mxu0 0.0
        %1689 = vmatpush1.msra.mxu0 0.0
        %1690 = vmatprep.subr.mxu0 0.0
        %1691 = vmatpush1.msra.mxu0 0.0
        %1692 = vmatprep.subr.mxu0 0.0
        %1693 = vmatpush1.msra.mxu0 0.0
        %1694 = vmatprep.subr.mxu0 0.0
        %1695 = vmatpush1.msra.mxu0 0.0
        %1696 = vmatprep.mubr.f32.mxu0 0.0
        %1697 = vmatmul.mubr.f32.gmra.mrb[0].mxu0 %v1630
        %v1698 = vpop.f32.mrb[0].mxu0
        %v1699 = vadd.f32 0.0, %v1698
        %v1700 = vpop.f32.mrb[0].mxu0
        %1701 = vdwg.mxu0
        %s1702 = scalar_lea.vmem %s2, 24
        %v1703 = vld [vmem:[%s1702] sm:$0xff]
        %v1705 = vsel %vm508, %v1699, 0
        %1707 = vmatprep.subr.mxu0 0.0
        %1708 = vmatpush1.msra.mxu0 %v1703
        %1709 = vmatprep.subr.mxu0 0.0
        %1710 = vmatpush1.msra.mxu0 0.0
        %1711 = vmatprep.subr.mxu0 0.0
        %1712 = vmatpush1.msra.mxu0 0.0
        %1713 = vmatprep.subr.mxu0 0.0
        %1714 = vmatpush1.msra.mxu0 0.0
        %1715 = vmatprep.subr.mxu0 0.0
        %1716 = vmatpush1.msra.mxu0 0.0
        %1717 = vmatprep.subr.mxu0 0.0
        %1718 = vmatpush1.msra.mxu0 0.0
        %1719 = vmatprep.subr.mxu0 0.0
        %1720 = vmatpush1.msra.mxu0 0.0
        %1721 = vmatprep.subr.mxu0 0.0
        %1722 = vmatpush1.msra.mxu0 0.0
        %1723 = vmatprep.subr.mxu0 0.0
        %1724 = vmatpush1.msra.mxu0 0.0
        %1725 = vmatprep.subr.mxu0 0.0
        %1726 = vmatpush1.msra.mxu0 0.0
        %1727 = vmatprep.subr.mxu0 0.0
        %1728 = vmatpush1.msra.mxu0 0.0
        %1729 = vmatprep.subr.mxu0 0.0
        %1730 = vmatpush1.msra.mxu0 0.0
        %1731 = vmatprep.subr.mxu0 0.0
        %1732 = vmatpush1.msra.mxu0 0.0
        %1733 = vmatprep.subr.mxu0 0.0
        %1734 = vmatpush1.msra.mxu0 0.0
        %1735 = vmatprep.subr.mxu0 0.0
        %1736 = vmatpush1.msra.mxu0 0.0
        %1737 = vmatprep.subr.mxu0 0.0
        %1738 = vmatpush1.msra.mxu0 0.0
        %1739 = vmatprep.subr.mxu0 0.0
        %1740 = vmatpush1.msra.mxu0 0.0
        %1741 = vmatprep.subr.mxu0 0.0
        %1742 = vmatpush1.msra.mxu0 0.0
        %1743 = vmatprep.subr.mxu0 0.0
        %1744 = vmatpush1.msra.mxu0 0.0
        %1745 = vmatprep.subr.mxu0 0.0
        %1746 = vmatpush1.msra.mxu0 0.0
        %1747 = vmatprep.subr.mxu0 0.0
        %1748 = vmatpush1.msra.mxu0 0.0
        %1749 = vmatprep.subr.mxu0 0.0
        %1750 = vmatpush1.msra.mxu0 0.0
        %1751 = vmatprep.subr.mxu0 0.0
        %1752 = vmatpush1.msra.mxu0 0.0
        %1753 = vmatprep.subr.mxu0 0.0
        %1754 = vmatpush1.msra.mxu0 0.0
        %1755 = vmatprep.subr.mxu0 0.0
        %1756 = vmatpush1.msra.mxu0 0.0
        %1757 = vmatprep.subr.mxu0 0.0
        %1758 = vmatpush1.msra.mxu0 0.0
        %1759 = vmatprep.subr.mxu0 0.0
        %1760 = vmatpush1.msra.mxu0 0.0
        %1761 = vmatprep.subr.mxu0 0.0
        %1762 = vmatpush1.msra.mxu0 0.0
        %1763 = vmatprep.subr.mxu0 0.0
        %1764 = vmatpush1.msra.mxu0 0.0
        %1765 = vmatprep.subr.mxu0 0.0
        %1766 = vmatpush1.msra.mxu0 0.0
        %1767 = vmatprep.subr.mxu0 0.0
        %1768 = vmatpush1.msra.mxu0 0.0
        %1769 = vmatprep.subr.mxu0 0.0
        %1770 = vmatpush1.msra.mxu0 0.0
        %1771 = vmatprep.mubr.f32.mxu0 0.0
        %1772 = vmatmul.mubr.f32.gmra.mrb[0].mxu0 %v1705
        %v1773 = vpop.f32.mrb[0].mxu0
        %v1774 = vadd.f32 0.0, %v1773
        %v1775 = vpop.f32.mrb[0].mxu0
        %1776 = vdwg.mxu0
        %v1777 = vadd.f32 %v1626, %v1774
        %v1778 = vadd.f32 %v402, %v1777
        %v1779 = vsel %vm430, %v1778, 0.0
        %1780 = vadd.xlane.f32.xlu0 %v1779
        %v1781 = vpop.xlane.xlu0 %1780
        %v1782 = vrcp.pop 32.0
        %v1783 = vmul.f32 %v1781, %v1782
        %v1784 = vsub.f32 %v1778, %v1783
        %v1785 = vmul.f32 %v1784, %v1784
        %v1786 = vsel %vm430, %v1785, 0.0
        %1787 = vadd.xlane.f32.xlu0 %v1786
        %v1788 = vpop.xlane.xlu0 %1787
        %v1789 = vmul.f32 %v1788, %v1782
        %v1790 = vadd.f32 %v1789, 1e-05
        %v1791 = vrsqrt.pop %v1790
        %v1792 = vmul.f32 %v1784, %v1791
        %v1794 = vlaneseq
        %v1795 = vshrl.u32 %v1794, 7
        %v1796 = vsub.s32 0, %v1795
        %v1797 = vrot.slane %v422, %v1796
        %v1799 = vmul.f32 %v1797, %v1792
        %v1801 = vlaneseq
        %v1802 = vshrl.u32 %v1801, 7
        %v1803 = vsub.s32 0, %v1802
        %v1804 = vrot.slane %v423, %v1803
        %v1806 = vadd.f32 %v1799, %v1804
        %v1808 = vlaneseq
        %v1809 = vshrl.u32 %v1808, 7
        %v1810 = vsub.s32 0, %v1809
        %v1811 = vrot.slane %v412, %v1810
        %v1814 = vsel %vm430, %v1806, 0
        %1816 = vmatprep.subr.mxu0 0.0
        %1817 = vmatpush1.msra.mxu0 %v408
        %1818 = vmatprep.subr.mxu0 0.0
        %1819 = vmatpush1.msra.mxu0 %v409
        %1820 = vmatprep.subr.mxu0 0.0
        %1821 = vmatpush1.msra.mxu0 %v410
        %1822 = vmatprep.subr.mxu0 0.0
        %1823 = vmatpush1.msra.mxu0 %v411
        %1824 = vmatprep.subr.mxu0 0.0
        %1825 = vmatpush1.msra.mxu0 0.0
        %1826 = vmatprep.subr.mxu0 0.0
        %1827 = vmatpush1.msra.mxu0 0.0
        %1828 = vmatprep.subr.mxu0 0.0
        %1829 = vmatpush1.msra.mxu0 0.0
        %1830 = vmatprep.subr.mxu0 0.0
        %1831 = vmatpush1.msra.mxu0 0.0
        %1832 = vmatprep.subr.mxu0 0.0
        %1833 = vmatpush1.msra.mxu0 0.0
        %1834 = vmatprep.subr.mxu0 0.0
        %1835 = vmatpush1.msra.mxu0 0.0
        %1836 = vmatprep.subr.mxu0 0.0
        %1837 = vmatpush1.msra.mxu0 0.0
        %1838 = vmatprep.subr.mxu0 0.0
        %1839 = vmatpush1.msra.mxu0 0.0
        %1840 = vmatprep.subr.mxu0 0.0
        %1841 = vmatpush1.msra.mxu0 0.0
        %1842 = vmatprep.subr.mxu0 0.0
        %1843 = vmatpush1.msra.mxu0 0.0
        %1844 = vmatprep.subr.mxu0 0.0
        %1845 = vmatpush1.msra.mxu0 0.0
        %1846 = vmatprep.subr.mxu0 0.0
        %1847 = vmatpush1.msra.mxu0 0.0
        %1848 = vmatprep.subr.mxu0 0.0
        %1849 = vmatpush1.msra.mxu0 0.0
        %1850 = vmatprep.subr.mxu0 0.0
        %1851 = vmatpush1.msra.mxu0 0.0
        %1852 = vmatprep.subr.mxu0 0.0
        %1853 = vmatpush1.msra.mxu0 0.0
        %1854 = vmatprep.subr.mxu0 0.0
        %1855 = vmatpush1.msra.mxu0 0.0
        %1856 = vmatprep.subr.mxu0 0.0
        %1857 = vmatpush1.msra.mxu0 0.0
        %1858 = vmatprep.subr.mxu0 0.0
        %1859 = vmatpush1.msra.mxu0 0.0
        %1860 = vmatprep.subr.mxu0 0.0
        %1861 = vmatpush1.msra.mxu0 0.0
        %1862 = vmatprep.subr.mxu0 0.0
        %1863 = vmatpush1.msra.mxu0 0.0
        %1864 = vmatprep.subr.mxu0 0.0
        %1865 = vmatpush1.msra.mxu0 0.0
        %1866 = vmatprep.subr.mxu0 0.0
        %1867 = vmatpush1.msra.mxu0 0.0
        %1868 = vmatprep.subr.mxu0 0.0
        %1869 = vmatpush1.msra.mxu0 0.0
        %1870 = vmatprep.subr.mxu0 0.0
        %1871 = vmatpush1.msra.mxu0 0.0
        %1872 = vmatprep.subr.mxu0 0.0
        %1873 = vmatpush1.msra.mxu0 0.0
        %1874 = vmatprep.subr.mxu0 0.0
        %1875 = vmatpush1.msra.mxu0 0.0
        %1876 = vmatprep.subr.mxu0 0.0
        %1877 = vmatpush1.msra.mxu0 0.0
        %1878 = vmatprep.subr.mxu0 0.0
        %1879 = vmatpush1.msra.mxu0 0.0
        %1880 = vmatprep.mubr.f32.mxu0 0.0
        %1881 = vmatmul.mubr.f32.gmra.mrb[0].mxu0 %v1814
        %v1882 = vpop.f32.mrb[0].mxu0
        %v1883 = vadd.f32 %v1811, %v1882
        %v1884 = vpop.f32.mrb[0].mxu0
        %1885 = vdwg.mxu0
        %v1886 = vmax.f32 %v1883, 0.0
        %v1888 = vlaneseq
        %v1889 = vshrl.u32 %v1888, 7
        %v1890 = vsub.s32 0, %v1889
        %v1891 = vrot.slane %v421, %v1890
        %vm1893 = vcmask 523264
        %v1895 = vsel %vm1893, %v1886, 0
        %1897 = vmatprep.subr.mxu0 0.0
        %1898 = vmatpush1.msra.mxu0 %v413
        %1899 = vmatprep.subr.mxu0 0.0
        %1900 = vmatpush1.msra.mxu0 %v414
        %1901 = vmatprep.subr.mxu0 0.0
        %1902 = vmatpush1.msra.mxu0 %v415
        %1903 = vmatprep.subr.mxu0 0.0
        %1904 = vmatpush1.msra.mxu0 %v416
        %1905 = vmatprep.subr.mxu0 0.0
        %1906 = vmatpush1.msra.mxu0 %v417
        %1907 = vmatprep.subr.mxu0 0.0
        %1908 = vmatpush1.msra.mxu0 %v418
        %1909 = vmatprep.subr.mxu0 0.0
        %1910 = vmatpush1.msra.mxu0 %v419
        %1911 = vmatprep.subr.mxu0 0.0
        %1912 = vmatpush1.msra.mxu0 %v420
        %1913 = vmatprep.subr.mxu0 0.0
        %1914 = vmatpush1.msra.mxu0 0.0
        %1915 = vmatprep.subr.mxu0 0.0
        %1916 = vmatpush1.msra.mxu0 0.0
        %1917 = vmatprep.subr.mxu0 0.0
        %1918 = vmatpush1.msra.mxu0 0.0
        %1919 = vmatprep.subr.mxu0 0.0
        %1920 = vmatpush1.msra.mxu0 0.0
        %1921 = vmatprep.subr.mxu0 0.0
        %1922 = vmatpush1.msra.mxu0 0.0
        %1923 = vmatprep.subr.mxu0 0.0
        %1924 = vmatpush1.msra.mxu0 0.0
        %1925 = vmatprep.subr.mxu0 0.0
        %1926 = vmatpush1.msra.mxu0 0.0
        %1927 = vmatprep.subr.mxu0 0.0
        %1928 = vmatpush1.msra.mxu0 0.0
        %1929 = vmatprep.subr.mxu0 0.0
        %1930 = vmatpush1.msra.mxu0 0.0
        %1931 = vmatprep.subr.mxu0 0.0
        %1932 = vmatpush1.msra.mxu0 0.0
        %1933 = vmatprep.subr.mxu0 0.0
        %1934 = vmatpush1.msra.mxu0 0.0
        %1935 = vmatprep.subr.mxu0 0.0
        %1936 = vmatpush1.msra.mxu0 0.0
        %1937 = vmatprep.subr.mxu0 0.0
        %1938 = vmatpush1.msra.mxu0 0.0
        %1939 = vmatprep.subr.mxu0 0.0
        %1940 = vmatpush1.msra.mxu0 0.0
        %1941 = vmatprep.subr.mxu0 0.0
        %1942 = vmatpush1.msra.mxu0 0.0
        %1943 = vmatprep.subr.mxu0 0.0
        %1944 = vmatpush1.msra.mxu0 0.0
        %1945 = vmatprep.subr.mxu0 0.0
        %1946 = vmatpush1.msra.mxu0 0.0
        %1947 = vmatprep.subr.mxu0 0.0
        %1948 = vmatpush1.msra.mxu0 0.0
        %1949 = vmatprep.subr.mxu0 0.0
        %1950 = vmatpush1.msra.mxu0 0.0
        %1951 = vmatprep.subr.mxu0 0.0
        %1952 = vmatpush1.msra.mxu0 0.0
        %1953 = vmatprep.subr.mxu0 0.0
        %1954 = vmatpush1.msra.mxu0 0.0
        %1955 = vmatprep.subr.mxu0 0.0
        %1956 = vmatpush1.msra.mxu0 0.0
        %1957 = vmatprep.subr.mxu0 0.0
        %1958 = vmatpush1.msra.mxu0 0.0
        %1959 = vmatprep.subr.mxu0 0.0
        %1960 = vmatpush1.msra.mxu0 0.0
        %1961 = vmatprep.mubr.f32.mxu0 0.0
        %1962 = vmatmul.mubr.f32.gmra.mrb[0].mxu0 %v1895
        %v1963 = vpop.f32.mrb[0].mxu0
        %v1964 = vadd.f32 %v1891, %v1963
        %v1965 = vpop.f32.mrb[0].mxu0
        %1966 = vdwg.mxu0
        %v1967 = vadd.f32 %v1964, %v1806
        %v1968 = vsel %vm430, %v1967, 0.0
        %1969 = vadd.xlane.f32.xlu0 %v1968
        %v1970 = vpop.xlane.xlu0 %1969
        %v1971 = vmul.f32 %v1970, %v1782
        %v1972 = vsub.f32 %v1967, %v1971
        %v1973 = vmul.f32 %v1972, %v1972
        %v1974 = vsel %vm430, %v1973, 0.0
        %1975 = vadd.xlane.f32.xlu0 %v1974
        %v1976 = vpop.xlane.xlu0 %1975
        %v1977 = vmul.f32 %v1976, %v1782
        %v1978 = vadd.f32 %v1977, 1e-05
        %v1979 = vrsqrt.pop %v1978
        %v1980 = vmul.f32 %v1972, %v1979
        %v1981 = vmul.f32 %v1797, %v1980
        %v1982 = vadd.f32 %v1981, %v1804
        %s1983 = scalar_lea.vmem %s3, 32
        %v1984 = vld [vmem:[%s1983] sm:$0xff]
        %v1985 = vld [vmem:[%s1983 + $0x8] sm:$0xff]
        %v1986 = vld [vmem:[%s1983 + $0x10] sm:$0xff]
        %v1987 = vld [vmem:[%s1983 + $0x18] sm:$0xff]
        %s1988 = scalar_lea.vmem %s4, 1
        %v1989 = vld [vmem:[%s1988] sm:$0x1]
        %s1990 = scalar_lea.vmem %s5, 32
        %v1991 = vld [vmem:[%s1990] sm:$0xff]
        %v1992 = vld [vmem:[%s1990 + $0x8] sm:$0xff]
        %v1993 = vld [vmem:[%s1990 + $0x10] sm:$0xff]
        %v1994 = vld [vmem:[%s1990 + $0x18] sm:$0xff]
        %s1995 = scalar_lea.vmem %s6, 1
        %v1996 = vld [vmem:[%s1995] sm:$0x1]
        %s1997 = scalar_lea.vmem %s7, 64
        %v1998 = vld [vmem:[%s1997] sm:$0xff]
        %v1999 = vld [vmem:[%s1997 + $0x8] sm:$0xff]
        %v2000 = vld [vmem:[%s1997 + $0x10] sm:$0xff]
        %v2001 = vld [vmem:[%s1997 + $0x18] sm:$0xff]
        %v2002 = vld [vmem:[%s1997 + $0x20] sm:$0xff]
        %v2003 = vld [vmem:[%s1997 + $0x28] sm:$0xff]
        %v2004 = vld [vmem:[%s1997 + $0x30] sm:$0xff]
        %v2005 = vld [vmem:[%s1997 + $0x38] sm:$0xff]
        %s2006 = scalar_lea.vmem %s8, 1
        %v2007 = vld [vmem:[%s2006] sm:$0x1]
        %s2008 = scalar_lea.vmem %s9, 1
        %v2009 = vld [vmem:[%s2008] sm:$0x1]
        %s2010 = scalar_lea.vmem %s10, 1
        %v2011 = vld [vmem:[%s2010] sm:$0x1]
        %v2013 = vlaneseq
        %v2014 = vshrl.u32 %v2013, 7
        %v2015 = vsub.s32 0, %v2014
        %v2016 = vrot.slane %v1989, %v2015
        %v2019 = vsel %vm430, %v1982, 0
        %2021 = vmatprep.subr.mxu0 0.0
        %2022 = vmatpush1.msra.mxu0 %v1984
        %2023 = vmatprep.subr.mxu0 0.0
        %2024 = vmatpush1.msra.mxu0 %v1985
        %2025 = vmatprep.subr.mxu0 0.0
        %2026 = vmatpush1.msra.mxu0 %v1986
        %2027 = vmatprep.subr.mxu0 0.0
        %2028 = vmatpush1.msra.mxu0 %v1987
        %2029 = vmatprep.subr.mxu0 0.0
        %2030 = vmatpush1.msra.mxu0 0.0
        %2031 = vmatprep.subr.mxu0 0.0
        %2032 = vmatpush1.msra.mxu0 0.0
        %2033 = vmatprep.subr.mxu0 0.0
        %2034 = vmatpush1.msra.mxu0 0.0
        %2035 = vmatprep.subr.mxu0 0.0
        %2036 = vmatpush1.msra.mxu0 0.0
        %2037 = vmatprep.subr.mxu0 0.0
        %2038 = vmatpush1.msra.mxu0 0.0
        %2039 = vmatprep.subr.mxu0 0.0
        %2040 = vmatpush1.msra.mxu0 0.0
        %2041 = vmatprep.subr.mxu0 0.0
        %2042 = vmatpush1.msra.mxu0 0.0
        %2043 = vmatprep.subr.mxu0 0.0
        %2044 = vmatpush1.msra.mxu0 0.0
        %2045 = vmatprep.subr.mxu0 0.0
        %2046 = vmatpush1.msra.mxu0 0.0
        %2047 = vmatprep.subr.mxu0 0.0
        %2048 = vmatpush1.msra.mxu0 0.0
        %2049 = vmatprep.subr.mxu0 0.0
        %2050 = vmatpush1.msra.mxu0 0.0
        %2051 = vmatprep.subr.mxu0 0.0
        %2052 = vmatpush1.msra.mxu0 0.0
        %2053 = vmatprep.subr.mxu0 0.0
        %2054 = vmatpush1.msra.mxu0 0.0
        %2055 = vmatprep.subr.mxu0 0.0
        %2056 = vmatpush1.msra.mxu0 0.0
        %2057 = vmatprep.subr.mxu0 0.0
        %2058 = vmatpush1.msra.mxu0 0.0
        %2059 = vmatprep.subr.mxu0 0.0
        %2060 = vmatpush1.msra.mxu0 0.0
        %2061 = vmatprep.subr.mxu0 0.0
        %2062 = vmatpush1.msra.mxu0 0.0
        %2063 = vmatprep.subr.mxu0 0.0
        %2064 = vmatpush1.msra.mxu0 0.0
        %2065 = vmatprep.subr.mxu0 0.0
        %2066 = vmatpush1.msra.mxu0 0.0
        %2067 = vmatprep.subr.mxu0 0.0
        %2068 = vmatpush1.msra.mxu0 0.0
        %2069 = vmatprep.subr.mxu0 0.0
        %2070 = vmatpush1.msra.mxu0 0.0
        %2071 = vmatprep.subr.mxu0 0.0
        %2072 = vmatpush1.msra.mxu0 0.0
        %2073 = vmatprep.subr.mxu0 0.0
        %2074 = vmatpush1.msra.mxu0 0.0
        %2075 = vmatprep.subr.mxu0 0.0
        %2076 = vmatpush1.msra.mxu0 0.0
        %2077 = vmatprep.subr.mxu0 0.0
        %2078 = vmatpush1.msra.mxu0 0.0
        %2079 = vmatprep.subr.mxu0 0.0
        %2080 = vmatpush1.msra.mxu0 0.0
        %2081 = vmatprep.subr.mxu0 0.0
        %2082 = vmatpush1.msra.mxu0 0.0
        %2083 = vmatprep.subr.mxu0 0.0
        %2084 = vmatpush1.msra.mxu0 0.0
        %2085 = vmatprep.mubr.f32.mxu0 0.0
        %2086 = vmatmul.mubr.f32.gmra.mrb[0].mxu0 %v2019
        %v2087 = vpop.f32.mrb[0].mxu0
        %v2088 = vadd.f32 %v2016, %v2087
        %v2089 = vpop.f32.mrb[0].mxu0
        %2090 = vdwg.mxu0
        %v2091 = vmul.f32 %v2088, 0.35355338
        %2093 = vrot.lane.b32.xlu0 %v2088, 120
        %v2094 = vpop.permute.xlu0 %2093
        %v2096 = vsel %vm508, %v2091, 0
        %v2098 = vsel %vm508, %v2094, 0
        %2100 = vmatprep.subr.mxu0 0.0
        %2101 = vmatpush1.xpose.msra.mxu0 %v2098
        %2102 = vmatprep.subr.mxu0 0.0
        %2103 = vmatpush1.xpose.msra.mxu0 0.0
        %2104 = vmatprep.subr.mxu0 0.0
        %2105 = vmatpush1.xpose.msra.mxu0 0.0
        %2106 = vmatprep.subr.mxu0 0.0
        %2107 = vmatpush1.xpose.msra.mxu0 0.0
        %2108 = vmatprep.subr.mxu0 0.0
        %2109 = vmatpush1.xpose.msra.mxu0 0.0
        %2110 = vmatprep.subr.mxu0 0.0
        %2111 = vmatpush1.xpose.msra.mxu0 0.0
        %2112 = vmatprep.subr.mxu0 0.0
        %2113 = vmatpush1.xpose.msra.mxu0 0.0
        %2114 = vmatprep.subr.mxu0 0.0
        %2115 = vmatpush1.xpose.msra.mxu0 0.0
        %2116 = vmatprep.subr.mxu0 0.0
        %2117 = vmatpush1.xpose.msra.mxu0 0.0
        %2118 = vmatprep.subr.mxu0 0.0
        %2119 = vmatpush1.xpose.msra.mxu0 0.0
        %2120 = vmatprep.subr.mxu0 0.0
        %2121 = vmatpush1.xpose.msra.mxu0 0.0
        %2122 = vmatprep.subr.mxu0 0.0
        %2123 = vmatpush1.xpose.msra.mxu0 0.0
        %2124 = vmatprep.subr.mxu0 0.0
        %2125 = vmatpush1.xpose.msra.mxu0 0.0
        %2126 = vmatprep.subr.mxu0 0.0
        %2127 = vmatpush1.xpose.msra.mxu0 0.0
        %2128 = vmatprep.subr.mxu0 0.0
        %2129 = vmatpush1.xpose.msra.mxu0 0.0
        %2130 = vmatprep.subr.mxu0 0.0
        %2131 = vmatpush1.xpose.msra.mxu0 0.0
        %2132 = vmatprep.subr.mxu0 0.0
        %2133 = vmatpush1.xpose.msra.mxu0 0.0
        %2134 = vmatprep.subr.mxu0 0.0
        %2135 = vmatpush1.xpose.msra.mxu0 0.0
        %2136 = vmatprep.subr.mxu0 0.0
        %2137 = vmatpush1.xpose.msra.mxu0 0.0
        %2138 = vmatprep.subr.mxu0 0.0
        %2139 = vmatpush1.xpose.msra.mxu0 0.0
        %2140 = vmatprep.subr.mxu0 0.0
        %2141 = vmatpush1.xpose.msra.mxu0 0.0
        %2142 = vmatprep.subr.mxu0 0.0
        %2143 = vmatpush1.xpose.msra.mxu0 0.0
        %2144 = vmatprep.subr.mxu0 0.0
        %2145 = vmatpush1.xpose.msra.mxu0 0.0
        %2146 = vmatprep.subr.mxu0 0.0
        %2147 = vmatpush1.xpose.msra.mxu0 0.0
        %2148 = vmatprep.subr.mxu0 0.0
        %2149 = vmatpush1.xpose.msra.mxu0 0.0
        %2150 = vmatprep.subr.mxu0 0.0
        %2151 = vmatpush1.xpose.msra.mxu0 0.0
        %2152 = vmatprep.subr.mxu0 0.0
        %2153 = vmatpush1.xpose.msra.mxu0 0.0
        %2154 = vmatprep.subr.mxu0 0.0
        %2155 = vmatpush1.xpose.msra.mxu0 0.0
        %2156 = vmatprep.subr.mxu0 0.0
        %2157 = vmatpush1.xpose.msra.mxu0 0.0
        %2158 = vmatprep.subr.mxu0 0.0
        %2159 = vmatpush1.xpose.msra.mxu0 0.0
        %2160 = vmatprep.subr.mxu0 0.0
        %2161 = vmatpush1.xpose.msra.mxu0 0.0
        %2162 = vmatprep.subr.mxu0 0.0
        %2163 = vmatpush1.xpose.msra.mxu0 0.0
        %2164 = vmatprep.mubr.f32.mxu0 0.0
        %2165 = vmatmul.mubr.f32.gmra.mrb[0].mxu0 %v2096
        %v2166 = vpop.f32.mrb[0].mxu0
        %v2167 = vadd.f32 0.0, %v2166
        %v2168 = vpop.f32.mrb[0].mxu0
        %2169 = vdwg.mxu0
        %v2170 = vsel %vm508, %v2167, -inf
        %2171 = vmax.xlane.f32.xlu0 %v2170
        %v2172 = vpop.xlane.xlu0 %2171
        %v2173 = vsub.f32 %v2167, %v2172
        %v2174 = vmul.f32 %v2173, 1.442695
        %v2175 = vpow.pop %v2174
        %v2176 = vsel %vm508, %v2175, 0.0
        %2177 = vadd.xlane.f32.xlu0 %v2176
        %v2178 = vpop.xlane.xlu0 %2177
        %v2179 = vrcp.pop %v2178
        %v2180 = vmul.f32 %v2178, %v2179
        %v2181 = vsub.f32 2.0, %v2180
        %v2182 = vmul.f32 %v2179, %v2181
        %v2183 = vmul.f32 %v2175, %v2182
        %2184 = vrot.lane.b32.xlu0 %v2088, 112
        %v2185 = vpop.permute.xlu0 %2184
        %v2188 = vsel %vm508, %v2183, 0
        %2190 = vmatprep.subr.mxu0 0.0
        %2191 = vmatpush1.msra.mxu0 %v2185
        %2192 = vmatprep.subr.mxu0 0.0
        %2193 = vmatpush1.msra.mxu0 0.0
        %2194 = vmatprep.subr.mxu0 0.0
        %2195 = vmatpush1.msra.mxu0 0.0
        %2196 = vmatprep.subr.mxu0 0.0
        %2197 = vmatpush1.msra.mxu0 0.0
        %2198 = vmatprep.subr.mxu0 0.0
        %2199 = vmatpush1.msra.mxu0 0.0
        %2200 = vmatprep.subr.mxu0 0.0
        %2201 = vmatpush1.msra.mxu0 0.0
        %2202 = vmatprep.subr.mxu0 0.0
        %2203 = vmatpush1.msra.mxu0 0.0
        %2204 = vmatprep.subr.mxu0 0.0
        %2205 = vmatpush1.msra.mxu0 0.0
        %2206 = vmatprep.subr.mxu0 0.0
        %2207 = vmatpush1.msra.mxu0 0.0
        %2208 = vmatprep.subr.mxu0 0.0
        %2209 = vmatpush1.msra.mxu0 0.0
        %2210 = vmatprep.subr.mxu0 0.0
        %2211 = vmatpush1.msra.mxu0 0.0
        %2212 = vmatprep.subr.mxu0 0.0
        %2213 = vmatpush1.msra.mxu0 0.0
        %2214 = vmatprep.subr.mxu0 0.0
        %2215 = vmatpush1.msra.mxu0 0.0
        %2216 = vmatprep.subr.mxu0 0.0
        %2217 = vmatpush1.msra.mxu0 0.0
        %2218 = vmatprep.subr.mxu0 0.0
        %2219 = vmatpush1.msra.mxu0 0.0
        %2220 = vmatprep.subr.mxu0 0.0
        %2221 = vmatpush1.msra.mxu0 0.0
        %2222 = vmatprep.subr.mxu0 0.0
        %2223 = vmatpush1.msra.mxu0 0.0
        %2224 = vmatprep.subr.mxu0 0.0
        %2225 = vmatpush1.msra.mxu0 0.0
        %2226 = vmatprep.subr.mxu0 0.0
        %2227 = vmatpush1.msra.mxu0 0.0
        %2228 = vmatprep.subr.mxu0 0.0
        %2229 = vmatpush1.msra.mxu0 0.0
        %2230 = vmatprep.subr.mxu0 0.0
        %2231 = vmatpush1.msra.mxu0 0.0
        %2232 = vmatprep.subr.mxu0 0.0
        %2233 = vmatpush1.msra.mxu0 0.0
        %2234 = vmatprep.subr.mxu0 0.0
        %2235 = vmatpush1.msra.mxu0 0.0
        %2236 = vmatprep.subr.mxu0 0.0
        %2237 = vmatpush1.msra.mxu0 0.0
        %2238 = vmatprep.subr.mxu0 0.0
        %2239 = vmatpush1.msra.mxu0 0.0
        %2240 = vmatprep.subr.mxu0 0.0
        %2241 = vmatpush1.msra.mxu0 0.0
        %2242 = vmatprep.subr.mxu0 0.0
        %2243 = vmatpush1.msra.mxu0 0.0
        %2244 = vmatprep.subr.mxu0 0.0
        %2245 = vmatpush1.msra.mxu0 0.0
        %2246 = vmatprep.subr.mxu0 0.0
        %2247 = vmatpush1.msra.mxu0 0.0
        %2248 = vmatprep.subr.mxu0 0.0
        %2249 = vmatpush1.msra.mxu0 0.0
        %2250 = vmatprep.subr.mxu0 0.0
        %2251 = vmatpush1.msra.mxu0 0.0
        %2252 = vmatprep.subr.mxu0 0.0
        %2253 = vmatpush1.msra.mxu0 0.0
        %2254 = vmatprep.mubr.f32.mxu0 0.0
        %2255 = vmatmul.mubr.f32.gmra.mrb[0].mxu0 %v2188
        %v2256 = vpop.f32.mrb[0].mxu0
        %v2257 = vadd.f32 0.0, %v2256
        %v2258 = vpop.f32.mrb[0].mxu0
        %2259 = vdwg.mxu0
        %2260 = vrot.lane.b32.xlu0 %v2091, 104
        %v2261 = vpop.permute.xlu0 %2260
        %2262 = vrot.lane.b32.xlu0 %v2088, 96
        %v2263 = vpop.permute.xlu0 %2262
        %v2264 = vsel %vm508, %v2261, 0
        %v2266 = vsel %vm508, %v2263, 0
        %2268 = vmatprep.subr.mxu0 0.0
        %2269 = vmatpush1.xpose.msra.mxu0 %v2266
        %2270 = vmatprep.subr.mxu0 0.0
        %2271 = vmatpush1.xpose.msra.mxu0 0.0
        %2272 = vmatprep.subr.mxu0 0.0
        %2273 = vmatpush1.xpose.msra.mxu0 0.0
        %2274 = vmatprep.subr.mxu0 0.0
        %2275 = vmatpush1.xpose.msra.mxu0 0.0
        %2276 = vmatprep.subr.mxu0 0.0
        %2277 = vmatpush1.xpose.msra.mxu0 0.0
        %2278 = vmatprep.subr.mxu0 0.0
        %2279 = vmatpush1.xpose.msra.mxu0 0.0
        %2280 = vmatprep.subr.mxu0 0.0
        %2281 = vmatpush1.xpose.msra.mxu0 0.0
        %2282 = vmatprep.subr.mxu0 0.0
        %2283 = vmatpush1.xpose.msra.mxu0 0.0
        %2284 = vmatprep.subr.mxu0 0.0
        %2285 = vmatpush1.xpose.msra.mxu0 0.0
        %2286 = vmatprep.subr.mxu0 0.0
        %2287 = vmatpush1.xpose.msra.mxu0 0.0
        %2288 = vmatprep.subr.mxu0 0.0
        %2289 = vmatpush1.xpose.msra.mxu0 0.0
        %2290 = vmatprep.subr.mxu0 0.0
        %2291 = vmatpush1.xpose.msra.mxu0 0.0
        %2292 = vmatprep.subr.mxu0 0.0
        %2293 = vmatpush1.xpose.msra.mxu0 0.0
        %2294 = vmatprep.subr.mxu0 0.0
        %2295 = vmatpush1.xpose.msra.mxu0 0.0
        %2296 = vmatprep.subr.mxu0 0.0
        %2297 = vmatpush1.xpose.msra.mxu0 0.0
        %2298 = vmatprep.subr.mxu0 0.0
        %2299 = vmatpush1.xpose.msra.mxu0 0.0
        %2300 = vmatprep.subr.mxu0 0.0
        %2301 = vmatpush1.xpose.msra.mxu0 0.0
        %2302 = vmatprep.subr.mxu0 0.0
        %2303 = vmatpush1.xpose.msra.mxu0 0.0
        %2304 = vmatprep.subr.mxu0 0.0
        %2305 = vmatpush1.xpose.msra.mxu0 0.0
        %2306 = vmatprep.subr.mxu0 0.0
        %2307 = vmatpush1.xpose.msra.mxu0 0.0
        %2308 = vmatprep.subr.mxu0 0.0
        %2309 = vmatpush1.xpose.msra.mxu0 0.0
        %2310 = vmatprep.subr.mxu0 0.0
        %2311 = vmatpush1.xpose.msra.mxu0 0.0
        %2312 = vmatprep.subr.mxu0 0.0
        %2313 = vmatpush1.xpose.msra.mxu0 0.0
        %2314 = vmatprep.subr.mxu0 0.0
        %2315 = vmatpush1.xpose.msra.mxu0 0.0
        %2316 = vmatprep.subr.mxu0 0.0
        %2317 = vmatpush1.xpose.msra.mxu0 0.0
        %2318 = vmatprep.subr.mxu0 0.0
        %2319 = vmatpush1.xpose.msra.mxu0 0.0
        %2320 = vmatprep.subr.mxu0 0.0
        %2321 = vmatpush1.xpose.msra.mxu0 0.0
        %2322 = vmatprep.subr.mxu0 0.0
        %2323 = vmatpush1.xpose.msra.mxu0 0.0
        %2324 = vmatprep.subr.mxu0 0.0
        %2325 = vmatpush1.xpose.msra.mxu0 0.0
        %2326 = vmatprep.subr.mxu0 0.0
        %2327 = vmatpush1.xpose.msra.mxu0 0.0
        %2328 = vmatprep.subr.mxu0 0.0
        %2329 = vmatpush1.xpose.msra.mxu0 0.0
        %2330 = vmatprep.subr.mxu0 0.0
        %2331 = vmatpush1.xpose.msra.mxu0 0.0
        %2332 = vmatprep.mubr.f32.mxu0 0.0
        %2333 = vmatmul.mubr.f32.gmra.mrb[0].mxu0 %v2264
        %v2334 = vpop.f32.mrb[0].mxu0
        %v2335 = vadd.f32 0.0, %v2334
        %v2336 = vpop.f32.mrb[0].mxu0
        %2337 = vdwg.mxu0
        %v2338 = vsel %vm508, %v2335, -inf
        %2339 = vmax.xlane.f32.xlu0 %v2338
        %v2340 = vpop.xlane.xlu0 %2339
        %v2341 = vsub.f32 %v2335, %v2340
        %v2342 = vmul.f32 %v2341, 1.442695
        %v2343 = vpow.pop %v2342
        %v2344 = vsel %vm508, %v2343, 0.0
        %2345 = vadd.xlane.f32.xlu0 %v2344
        %v2346 = vpop.xlane.xlu0 %2345
        %v2347 = vrcp.pop %v2346
        %v2348 = vmul.f32 %v2346, %v2347
        %v2349 = vsub.f32 2.0, %v2348
        %v2350 = vmul.f32 %v2347, %v2349
        %v2351 = vmul.f32 %v2343, %v2350
        %2352 = vrot.lane.b32.xlu0 %v2088, 88
        %v2353 = vpop.permute.xlu0 %2352
        %v2356 = vsel %vm508, %v2351, 0
        %2358 = vmatprep.subr.mxu0 0.0
        %2359 = vmatpush1.msra.mxu0 %v2353
        %2360 = vmatprep.subr.mxu0 0.0
        %2361 = vmatpush1.msra.mxu0 0.0
        %2362 = vmatprep.subr.mxu0 0.0
        %2363 = vmatpush1.msra.mxu0 0.0
        %2364 = vmatprep.subr.mxu0 0.0
        %2365 = vmatpush1.msra.mxu0 0.0
        %2366 = vmatprep.subr.mxu0 0.0
        %2367 = vmatpush1.msra.mxu0 0.0
        %2368 = vmatprep.subr.mxu0 0.0
        %2369 = vmatpush1.msra.mxu0 0.0
        %2370 = vmatprep.subr.mxu0 0.0
        %2371 = vmatpush1.msra.mxu0 0.0
        %2372 = vmatprep.subr.mxu0 0.0
        %2373 = vmatpush1.msra.mxu0 0.0
        %2374 = vmatprep.subr.mxu0 0.0
        %2375 = vmatpush1.msra.mxu0 0.0
        %2376 = vmatprep.subr.mxu0 0.0
        %2377 = vmatpush1.msra.mxu0 0.0
        %2378 = vmatprep.subr.mxu0 0.0
        %2379 = vmatpush1.msra.mxu0 0.0
        %2380 = vmatprep.subr.mxu0 0.0
        %2381 = vmatpush1.msra.mxu0 0.0
        %2382 = vmatprep.subr.mxu0 0.0
        %2383 = vmatpush1.msra.mxu0 0.0
        %2384 = vmatprep.subr.mxu0 0.0
        %2385 = vmatpush1.msra.mxu0 0.0
        %2386 = vmatprep.subr.mxu0 0.0
        %2387 = vmatpush1.msra.mxu0 0.0
        %2388 = vmatprep.subr.mxu0 0.0
        %2389 = vmatpush1.msra.mxu0 0.0
        %2390 = vmatprep.subr.mxu0 0.0
        %2391 = vmatpush1.msra.mxu0 0.0
        %2392 = vmatprep.subr.mxu0 0.0
        %2393 = vmatpush1.msra.mxu0 0.0
        %2394 = vmatprep.subr.mxu0 0.0
        %2395 = vmatpush1.msra.mxu0 0.0
        %2396 = vmatprep.subr.mxu0 0.0
        %2397 = vmatpush1.msra.mxu0 0.0
        %2398 = vmatprep.subr.mxu0 0.0
        %2399 = vmatpush1.msra.mxu0 0.0
        %2400 = vmatprep.subr.mxu0 0.0
        %2401 = vmatpush1.msra.mxu0 0.0
        %2402 = vmatprep.subr.mxu0 0.0
        %2403 = vmatpush1.msra.mxu0 0.0
        %2404 = vmatprep.subr.mxu0 0.0
        %2405 = vmatpush1.msra.mxu0 0.0
        %2406 = vmatprep.subr.mxu0 0.0
        %2407 = vmatpush1.msra.mxu0 0.0
        %2408 = vmatprep.subr.mxu0 0.0
        %2409 = vmatpush1.msra.mxu0 0.0
        %2410 = vmatprep.subr.mxu0 0.0
        %2411 = vmatpush1.msra.mxu0 0.0
        %2412 = vmatprep.subr.mxu0 0.0
        %2413 = vmatpush1.msra.mxu0 0.0
        %2414 = vmatprep.subr.mxu0 0.0
        %2415 = vmatpush1.msra.mxu0 0.0
        %2416 = vmatprep.subr.mxu0 0.0
        %2417 = vmatpush1.msra.mxu0 0.0
        %2418 = vmatprep.subr.mxu0 0.0
        %2419 = vmatpush1.msra.mxu0 0.0
        %2420 = vmatprep.subr.mxu0 0.0
        %2421 = vmatpush1.msra.mxu0 0.0
        %2422 = vmatprep.mubr.f32.mxu0 0.0
        %2423 = vmatmul.mubr.f32.gmra.mrb[0].mxu0 %v2356
        %v2424 = vpop.f32.mrb[0].mxu0
        %v2425 = vadd.f32 0.0, %v2424
        %v2426 = vpop.f32.mrb[0].mxu0
        %2427 = vdwg.mxu0
        %2428 = vrot.lane.b32.xlu0 %v2091, 80
        %v2429 = vpop.permute.xlu0 %2428
        %2430 = vrot.lane.b32.xlu0 %v2088, 72
        %v2431 = vpop.permute.xlu0 %2430
        %v2432 = vsel %vm508, %v2429, 0
        %v2434 = vsel %vm508, %v2431, 0
        %2436 = vmatprep.subr.mxu0 0.0
        %2437 = vmatpush1.xpose.msra.mxu0 %v2434
        %2438 = vmatprep.subr.mxu0 0.0
        %2439 = vmatpush1.xpose.msra.mxu0 0.0
        %2440 = vmatprep.subr.mxu0 0.0
        %2441 = vmatpush1.xpose.msra.mxu0 0.0
        %2442 = vmatprep.subr.mxu0 0.0
        %2443 = vmatpush1.xpose.msra.mxu0 0.0
        %2444 = vmatprep.subr.mxu0 0.0
        %2445 = vmatpush1.xpose.msra.mxu0 0.0
        %2446 = vmatprep.subr.mxu0 0.0
        %2447 = vmatpush1.xpose.msra.mxu0 0.0
        %2448 = vmatprep.subr.mxu0 0.0
        %2449 = vmatpush1.xpose.msra.mxu0 0.0
        %2450 = vmatprep.subr.mxu0 0.0
        %2451 = vmatpush1.xpose.msra.mxu0 0.0
        %2452 = vmatprep.subr.mxu0 0.0
        %2453 = vmatpush1.xpose.msra.mxu0 0.0
        %2454 = vmatprep.subr.mxu0 0.0
        %2455 = vmatpush1.xpose.msra.mxu0 0.0
        %2456 = vmatprep.subr.mxu0 0.0
        %2457 = vmatpush1.xpose.msra.mxu0 0.0
        %2458 = vmatprep.subr.mxu0 0.0
        %2459 = vmatpush1.xpose.msra.mxu0 0.0
        %2460 = vmatprep.subr.mxu0 0.0
        %2461 = vmatpush1.xpose.msra.mxu0 0.0
        %2462 = vmatprep.subr.mxu0 0.0
        %2463 = vmatpush1.xpose.msra.mxu0 0.0
        %2464 = vmatprep.subr.mxu0 0.0
        %2465 = vmatpush1.xpose.msra.mxu0 0.0
        %2466 = vmatprep.subr.mxu0 0.0
        %2467 = vmatpush1.xpose.msra.mxu0 0.0
        %2468 = vmatprep.subr.mxu0 0.0
        %2469 = vmatpush1.xpose.msra.mxu0 0.0
        %2470 = vmatprep.subr.mxu0 0.0
        %2471 = vmatpush1.xpose.msra.mxu0 0.0
        %2472 = vmatprep.subr.mxu0 0.0
        %2473 = vmatpush1.xpose.msra.mxu0 0.0
        %2474 = vmatprep.subr.mxu0 0.0
        %2475 = vmatpush1.xpose.msra.mxu0 0.0
        %2476 = vmatprep.subr.mxu0 0.0
        %2477 = vmatpush1.xpose.msra.mxu0 0.0
        %2478 = vmatprep.subr.mxu0 0.0
        %2479 = vmatpush1.xpose.msra.mxu0 0.0
        %2480 = vmatprep.subr.mxu0 0.0
        %2481 = vmatpush1.xpose.msra.mxu0 0.0
        %2482 = vmatprep.subr.mxu0 0.0
        %2483 = vmatpush1.xpose.msra.mxu0 0.0
        %2484 = vmatprep.subr.mxu0 0.0
        %2485 = vmatpush1.xpose.msra.mxu0 0.0
        %2486 = vmatprep.subr.mxu0 0.0
        %2487 = vmatpush1.xpose.msra.mxu0 0.0
        %2488 = vmatprep.subr.mxu0 0.0
        %2489 = vmatpush1.xpose.msra.mxu0 0.0
        %2490 = vmatprep.subr.mxu0 0.0
        %2491 = vmatpush1.xpose.msra.mxu0 0.0
        %2492 = vmatprep.subr.mxu0 0.0
        %2493 = vmatpush1.xpose.msra.mxu0 0.0
        %2494 = vmatprep.subr.mxu0 0.0
        %2495 = vmatpush1.xpose.msra.mxu0 0.0
        %2496 = vmatprep.subr.mxu0 0.0
        %2497 = vmatpush1.xpose.msra.mxu0 0.0
        %2498 = vmatprep.subr.mxu0 0.0
        %2499 = vmatpush1.xpose.msra.mxu0 0.0
        %2500 = vmatprep.mubr.f32.mxu0 0.0
        %2501 = vmatmul.mubr.f32.gmra.mrb[0].mxu0 %v2432
        %v2502 = vpop.f32.mrb[0].mxu0
        %v2503 = vadd.f32 0.0, %v2502
        %v2504 = vpop.f32.mrb[0].mxu0
        %2505 = vdwg.mxu0
        %v2506 = vsel %vm508, %v2503, -inf
        %2507 = vmax.xlane.f32.xlu0 %v2506
        %v2508 = vpop.xlane.xlu0 %2507
        %v2509 = vsub.f32 %v2503, %v2508
        %v2510 = vmul.f32 %v2509, 1.442695
        %v2511 = vpow.pop %v2510
        %v2512 = vsel %vm508, %v2511, 0.0
        %2513 = vadd.xlane.f32.xlu0 %v2512
        %v2514 = vpop.xlane.xlu0 %2513
        %v2515 = vrcp.pop %v2514
        %v2516 = vmul.f32 %v2514, %v2515
        %v2517 = vsub.f32 2.0, %v2516
        %v2518 = vmul.f32 %v2515, %v2517
        %v2519 = vmul.f32 %v2511, %v2518
        %2520 = vrot.lane.b32.xlu0 %v2088, 64
        %v2521 = vpop.permute.xlu0 %2520
        %v2524 = vsel %vm508, %v2519, 0
        %2526 = vmatprep.subr.mxu0 0.0
        %2527 = vmatpush1.msra.mxu0 %v2521
        %2528 = vmatprep.subr.mxu0 0.0
        %2529 = vmatpush1.msra.mxu0 0.0
        %2530 = vmatprep.subr.mxu0 0.0
        %2531 = vmatpush1.msra.mxu0 0.0
        %2532 = vmatprep.subr.mxu0 0.0
        %2533 = vmatpush1.msra.mxu0 0.0
        %2534 = vmatprep.subr.mxu0 0.0
        %2535 = vmatpush1.msra.mxu0 0.0
        %2536 = vmatprep.subr.mxu0 0.0
        %2537 = vmatpush1.msra.mxu0 0.0
        %2538 = vmatprep.subr.mxu0 0.0
        %2539 = vmatpush1.msra.mxu0 0.0
        %2540 = vmatprep.subr.mxu0 0.0
        %2541 = vmatpush1.msra.mxu0 0.0
        %2542 = vmatprep.subr.mxu0 0.0
        %2543 = vmatpush1.msra.mxu0 0.0
        %2544 = vmatprep.subr.mxu0 0.0
        %2545 = vmatpush1.msra.mxu0 0.0
        %2546 = vmatprep.subr.mxu0 0.0
        %2547 = vmatpush1.msra.mxu0 0.0
        %2548 = vmatprep.subr.mxu0 0.0
        %2549 = vmatpush1.msra.mxu0 0.0
        %2550 = vmatprep.subr.mxu0 0.0
        %2551 = vmatpush1.msra.mxu0 0.0
        %2552 = vmatprep.subr.mxu0 0.0
        %2553 = vmatpush1.msra.mxu0 0.0
        %2554 = vmatprep.subr.mxu0 0.0
        %2555 = vmatpush1.msra.mxu0 0.0
        %2556 = vmatprep.subr.mxu0 0.0
        %2557 = vmatpush1.msra.mxu0 0.0
        %2558 = vmatprep.subr.mxu0 0.0
        %2559 = vmatpush1.msra.mxu0 0.0
        %2560 = vmatprep.subr.mxu0 0.0
        %2561 = vmatpush1.msra.mxu0 0.0
        %2562 = vmatprep.subr.mxu0 0.0
        %2563 = vmatpush1.msra.mxu0 0.0
        %2564 = vmatprep.subr.mxu0 0.0
        %2565 = vmatpush1.msra.mxu0 0.0
        %2566 = vmatprep.subr.mxu0 0.0
        %2567 = vmatpush1.msra.mxu0 0.0
        %2568 = vmatprep.subr.mxu0 0.0
        %2569 = vmatpush1.msra.mxu0 0.0
        %2570 = vmatprep.subr.mxu0 0.0
        %2571 = vmatpush1.msra.mxu0 0.0
        %2572 = vmatprep.subr.mxu0 0.0
        %2573 = vmatpush1.msra.mxu0 0.0
        %2574 = vmatprep.subr.mxu0 0.0
        %2575 = vmatpush1.msra.mxu0 0.0
        %2576 = vmatprep.subr.mxu0 0.0
        %2577 = vmatpush1.msra.mxu0 0.0
        %2578 = vmatprep.subr.mxu0 0.0
        %2579 = vmatpush1.msra.mxu0 0.0
        %2580 = vmatprep.subr.mxu0 0.0
        %2581 = vmatpush1.msra.mxu0 0.0
        %2582 = vmatprep.subr.mxu0 0.0
        %2583 = vmatpush1.msra.mxu0 0.0
        %2584 = vmatprep.subr.mxu0 0.0
        %2585 = vmatpush1.msra.mxu0 0.0
        %2586 = vmatprep.subr.mxu0 0.0
        %2587 = vmatpush1.msra.mxu0 0.0
        %2588 = vmatprep.subr.mxu0 0.0
        %2589 = vmatpush1.msra.mxu0 0.0
        %2590 = vmatprep.mubr.f32.mxu0 0.0
        %2591 = vmatmul.mubr.f32.gmra.mrb[0].mxu0 %v2524
        %v2592 = vpop.f32.mrb[0].mxu0
        %v2593 = vadd.f32 0.0, %v2592
        %v2594 = vpop.f32.mrb[0].mxu0
        %2595 = vdwg.mxu0
        %2596 = vrot.lane.b32.xlu0 %v2091, 56
        %v2597 = vpop.permute.xlu0 %2596
        %2598 = vrot.lane.b32.xlu0 %v2088, 48
        %v2599 = vpop.permute.xlu0 %2598
        %v2600 = vsel %vm508, %v2597, 0
        %v2602 = vsel %vm508, %v2599, 0
        %2604 = vmatprep.subr.mxu0 0.0
        %2605 = vmatpush1.xpose.msra.mxu0 %v2602
        %2606 = vmatprep.subr.mxu0 0.0
        %2607 = vmatpush1.xpose.msra.mxu0 0.0
        %2608 = vmatprep.subr.mxu0 0.0
        %2609 = vmatpush1.xpose.msra.mxu0 0.0
        %2610 = vmatprep.subr.mxu0 0.0
        %2611 = vmatpush1.xpose.msra.mxu0 0.0
        %2612 = vmatprep.subr.mxu0 0.0
        %2613 = vmatpush1.xpose.msra.mxu0 0.0
        %2614 = vmatprep.subr.mxu0 0.0
        %2615 = vmatpush1.xpose.msra.mxu0 0.0
        %2616 = vmatprep.subr.mxu0 0.0
        %2617 = vmatpush1.xpose.msra.mxu0 0.0
        %2618 = vmatprep.subr.mxu0 0.0
        %2619 = vmatpush1.xpose.msra.mxu0 0.0
        %2620 = vmatprep.subr.mxu0 0.0
        %2621 = vmatpush1.xpose.msra.mxu0 0.0
        %2622 = vmatprep.subr.mxu0 0.0
        %2623 = vmatpush1.xpose.msra.mxu0 0.0
        %2624 = vmatprep.subr.mxu0 0.0
        %2625 = vmatpush1.xpose.msra.mxu0 0.0
        %2626 = vmatprep.subr.mxu0 0.0
        %2627 = vmatpush1.xpose.msra.mxu0 0.0
        %2628 = vmatprep.subr.mxu0 0.0
        %2629 = vmatpush1.xpose.msra.mxu0 0.0
        %2630 = vmatprep.subr.mxu0 0.0
        %2631 = vmatpush1.xpose.msra.mxu0 0.0
        %2632 = vmatprep.subr.mxu0 0.0
        %2633 = vmatpush1.xpose.msra.mxu0 0.0
        %2634 = vmatprep.subr.mxu0 0.0
        %2635 = vmatpush1.xpose.msra.mxu0 0.0
        %2636 = vmatprep.subr.mxu0 0.0
        %2637 = vmatpush1.xpose.msra.mxu0 0.0
        %2638 = vmatprep.subr.mxu0 0.0
        %2639 = vmatpush1.xpose.msra.mxu0 0.0
        %2640 = vmatprep.subr.mxu0 0.0
        %2641 = vmatpush1.xpose.msra.mxu0 0.0
        %2642 = vmatprep.subr.mxu0 0.0
        %2643 = vmatpush1.xpose.msra.mxu0 0.0
        %2644 = vmatprep.subr.mxu0 0.0
        %2645 = vmatpush1.xpose.msra.mxu0 0.0
        %2646 = vmatprep.subr.mxu0 0.0
        %2647 = vmatpush1.xpose.msra.mxu0 0.0
        %2648 = vmatprep.subr.mxu0 0.0
        %2649 = vmatpush1.xpose.msra.mxu0 0.0
        %2650 = vmatprep.subr.mxu0 0.0
        %2651 = vmatpush1.xpose.msra.mxu0 0.0
        %2652 = vmatprep.subr.mxu0 0.0
        %2653 = vmatpush1.xpose.msra.mxu0 0.0
        %2654 = vmatprep.subr.mxu0 0.0
        %2655 = vmatpush1.xpose.msra.mxu0 0.0
        %2656 = vmatprep.subr.mxu0 0.0
        %2657 = vmatpush1.xpose.msra.mxu0 0.0
        %2658 = vmatprep.subr.mxu0 0.0
        %2659 = vmatpush1.xpose.msra.mxu0 0.0
        %2660 = vmatprep.subr.mxu0 0.0
        %2661 = vmatpush1.xpose.msra.mxu0 0.0
        %2662 = vmatprep.subr.mxu0 0.0
        %2663 = vmatpush1.xpose.msra.mxu0 0.0
        %2664 = vmatprep.subr.mxu0 0.0
        %2665 = vmatpush1.xpose.msra.mxu0 0.0
        %2666 = vmatprep.subr.mxu0 0.0
        %2667 = vmatpush1.xpose.msra.mxu0 0.0
        %2668 = vmatprep.mubr.f32.mxu0 0.0
        %2669 = vmatmul.mubr.f32.gmra.mrb[0].mxu0 %v2600
        %v2670 = vpop.f32.mrb[0].mxu0
        %v2671 = vadd.f32 0.0, %v2670
        %v2672 = vpop.f32.mrb[0].mxu0
        %2673 = vdwg.mxu0
        %v2674 = vsel %vm508, %v2671, -inf
        %2675 = vmax.xlane.f32.xlu0 %v2674
        %v2676 = vpop.xlane.xlu0 %2675
        %v2677 = vsub.f32 %v2671, %v2676
        %v2678 = vmul.f32 %v2677, 1.442695
        %v2679 = vpow.pop %v2678
        %v2680 = vsel %vm508, %v2679, 0.0
        %2681 = vadd.xlane.f32.xlu0 %v2680
        %v2682 = vpop.xlane.xlu0 %2681
        %v2683 = vrcp.pop %v2682
        %v2684 = vmul.f32 %v2682, %v2683
        %v2685 = vsub.f32 2.0, %v2684
        %v2686 = vmul.f32 %v2683, %v2685
        %v2687 = vmul.f32 %v2679, %v2686
        %2688 = vrot.lane.b32.xlu0 %v2088, 40
        %v2689 = vpop.permute.xlu0 %2688
        %v2692 = vsel %vm508, %v2687, 0
        %2694 = vmatprep.subr.mxu0 0.0
        %2695 = vmatpush1.msra.mxu0 %v2689
        %2696 = vmatprep.subr.mxu0 0.0
        %2697 = vmatpush1.msra.mxu0 0.0
        %2698 = vmatprep.subr.mxu0 0.0
        %2699 = vmatpush1.msra.mxu0 0.0
        %2700 = vmatprep.subr.mxu0 0.0
        %2701 = vmatpush1.msra.mxu0 0.0
        %2702 = vmatprep.subr.mxu0 0.0
        %2703 = vmatpush1.msra.mxu0 0.0
        %2704 = vmatprep.subr.mxu0 0.0
        %2705 = vmatpush1.msra.mxu0 0.0
        %2706 = vmatprep.subr.mxu0 0.0
        %2707 = vmatpush1.msra.mxu0 0.0
        %2708 = vmatprep.subr.mxu0 0.0
        %2709 = vmatpush1.msra.mxu0 0.0
        %2710 = vmatprep.subr.mxu0 0.0
        %2711 = vmatpush1.msra.mxu0 0.0
        %2712 = vmatprep.subr.mxu0 0.0
        %2713 = vmatpush1.msra.mxu0 0.0
        %2714 = vmatprep.subr.mxu0 0.0
        %2715 = vmatpush1.msra.mxu0 0.0
        %2716 = vmatprep.subr.mxu0 0.0
        %2717 = vmatpush1.msra.mxu0 0.0
        %2718 = vmatprep.subr.mxu0 0.0
        %2719 = vmatpush1.msra.mxu0 0.0
        %2720 = vmatprep.subr.mxu0 0.0
        %2721 = vmatpush1.msra.mxu0 0.0
        %2722 = vmatprep.subr.mxu0 0.0
        %2723 = vmatpush1.msra.mxu0 0.0
        %2724 = vmatprep.subr.mxu0 0.0
        %2725 = vmatpush1.msra.mxu0 0.0
        %2726 = vmatprep.subr.mxu0 0.0
        %2727 = vmatpush1.msra.mxu0 0.0
        %2728 = vmatprep.subr.mxu0 0.0
        %2729 = vmatpush1.msra.mxu0 0.0
        %2730 = vmatprep.subr.mxu0 0.0
        %2731 = vmatpush1.msra.mxu0 0.0
        %2732 = vmatprep.subr.mxu0 0.0
        %2733 = vmatpush1.msra.mxu0 0.0
        %2734 = vmatprep.subr.mxu0 0.0
        %2735 = vmatpush1.msra.mxu0 0.0
        %2736 = vmatprep.subr.mxu0 0.0
        %2737 = vmatpush1.msra.mxu0 0.0
        %2738 = vmatprep.subr.mxu0 0.0
        %2739 = vmatpush1.msra.mxu0 0.0
        %2740 = vmatprep.subr.mxu0 0.0
        %2741 = vmatpush1.msra.mxu0 0.0
        %2742 = vmatprep.subr.mxu0 0.0
        %2743 = vmatpush1.msra.mxu0 0.0
        %2744 = vmatprep.subr.mxu0 0.0
        %2745 = vmatpush1.msra.mxu0 0.0
        %2746 = vmatprep.subr.mxu0 0.0
        %2747 = vmatpush1.msra.mxu0 0.0
        %2748 = vmatprep.subr.mxu0 0.0
        %2749 = vmatpush1.msra.mxu0 0.0
        %2750 = vmatprep.subr.mxu0 0.0
        %2751 = vmatpush1.msra.mxu0 0.0
        %2752 = vmatprep.subr.mxu0 0.0
        %2753 = vmatpush1.msra.mxu0 0.0
        %2754 = vmatprep.subr.mxu0 0.0
        %2755 = vmatpush1.msra.mxu0 0.0
        %2756 = vmatprep.subr.mxu0 0.0
        %2757 = vmatpush1.msra.mxu0 0.0
        %2758 = vmatprep.mubr.f32.mxu0 0.0
        %2759 = vmatmul.mubr.f32.gmra.mrb[0].mxu0 %v2692
        %v2760 = vpop.f32.mrb[0].mxu0
        %v2761 = vadd.f32 0.0, %v2760
        %v2762 = vpop.f32.mrb[0].mxu0
        %2763 = vdwg.mxu0
        %2764 = vmatprep.subr.mxu0 0.0
        %2765 = vmatpush1.msra.mxu0 %v2257
        %2766 = vmatprep.subr.mxu0 0.0
        %2767 = vmatpush1.msra.mxu0 %v2425
        %2768 = vmatprep.subr.mxu0 0.0
        %2769 = vmatpush1.msra.mxu0 %v2593
        %2770 = vmatprep.subr.mxu0 0.0
        %2771 = vmatpush1.msra.mxu0 %v2761
        %2772 = vmatprep.subr.mxu0 0.0
        %2773 = vmatpush1.msra.mxu0 0.0
        %2774 = vmatprep.subr.mxu0 0.0
        %2775 = vmatpush1.msra.mxu0 0.0
        %2776 = vmatprep.subr.mxu0 0.0
        %2777 = vmatpush1.msra.mxu0 0.0
        %2778 = vmatprep.subr.mxu0 0.0
        %2779 = vmatpush1.msra.mxu0 0.0
        %2780 = vmatprep.subr.mxu0 0.0
        %2781 = vmatpush1.msra.mxu0 0.0
        %2782 = vmatprep.subr.mxu0 0.0
        %2783 = vmatpush1.msra.mxu0 0.0
        %2784 = vmatprep.subr.mxu0 0.0
        %2785 = vmatpush1.msra.mxu0 0.0
        %2786 = vmatprep.subr.mxu0 0.0
        %2787 = vmatpush1.msra.mxu0 0.0
        %2788 = vmatprep.subr.mxu0 0.0
        %2789 = vmatpush1.msra.mxu0 0.0
        %2790 = vmatprep.subr.mxu0 0.0
        %2791 = vmatpush1.msra.mxu0 0.0
        %2792 = vmatprep.subr.mxu0 0.0
        %2793 = vmatpush1.msra.mxu0 0.0
        %2794 = vmatprep.subr.mxu0 0.0
        %2795 = vmatpush1.msra.mxu0 0.0
        %2796 = vmatprep.subr.mxu0 0.0
        %2797 = vmatpush1.msra.mxu0 0.0
        %2798 = vmatprep.subr.mxu0 0.0
        %2799 = vmatpush1.msra.mxu0 0.0
        %2800 = vmatprep.subr.mxu0 0.0
        %2801 = vmatpush1.msra.mxu0 0.0
        %2802 = vmatprep.subr.mxu0 0.0
        %2803 = vmatpush1.msra.mxu0 0.0
        %2804 = vmatprep.subr.mxu0 0.0
        %2805 = vmatpush1.msra.mxu0 0.0
        %2806 = vmatprep.subr.mxu0 0.0
        %2807 = vmatpush1.msra.mxu0 0.0
        %2808 = vmatprep.subr.mxu0 0.0
        %2809 = vmatpush1.msra.mxu0 0.0
        %2810 = vmatprep.subr.mxu0 0.0
        %2811 = vmatpush1.msra.mxu0 0.0
        %2812 = vmatprep.subr.mxu0 0.0
        %2813 = vmatpush1.msra.mxu0 0.0
        %2814 = vmatprep.subr.mxu0 0.0
        %2815 = vmatpush1.msra.mxu0 0.0
        %2816 = vmatprep.subr.mxu0 0.0
        %2817 = vmatpush1.msra.mxu0 0.0
        %2818 = vmatprep.subr.mxu0 0.0
        %2819 = vmatpush1.msra.mxu0 0.0
        %2820 = vmatprep.subr.mxu0 0.0
        %2821 = vmatpush1.msra.mxu0 0.0
        %2822 = vmatprep.subr.mxu0 0.0
        %2823 = vmatpush1.msra.mxu0 0.0
        %2824 = vmatprep.subr.mxu0 0.0
        %2825 = vmatpush1.msra.mxu0 0.0
        %2826 = vmatprep.subr.mxu0 0.0
        %2827 = vmatpush1.msra.mxu0 0.0
        %2828 = vmatprep.mubr.f32.mxu0 0.0
        %2829 = vmatmul.mubr.f32.gmra.mrb[0].mxu0 %v1180
        %v2830 = vpop.f32.mrb[0].mxu0
        %v2831 = vadd.f32 0.0, %v2830
        %v2832 = vpop.f32.mrb[0].mxu0
        %2833 = vdwg.mxu0
        %2834 = vmatprep.subr.mxu0 0.0
        %2835 = vmatpush1.msra.mxu0 %v2257
        %2836 = vmatprep.subr.mxu0 0.0
        %2837 = vmatpush1.msra.mxu0 %v2425
        %2838 = vmatprep.subr.mxu0 0.0
        %2839 = vmatpush1.msra.mxu0 %v2593
        %2840 = vmatprep.subr.mxu0 0.0
        %2841 = vmatpush1.msra.mxu0 %v2761
        %2842 = vmatprep.subr.mxu0 0.0
        %2843 = vmatpush1.msra.mxu0 0.0
        %2844 = vmatprep.subr.mxu0 0.0
        %2845 = vmatpush1.msra.mxu0 0.0
        %2846 = vmatprep.subr.mxu0 0.0
        %2847 = vmatpush1.msra.mxu0 0.0
        %2848 = vmatprep.subr.mxu0 0.0
        %2849 = vmatpush1.msra.mxu0 0.0
        %2850 = vmatprep.subr.mxu0 0.0
        %2851 = vmatpush1.msra.mxu0 0.0
        %2852 = vmatprep.subr.mxu0 0.0
        %2853 = vmatpush1.msra.mxu0 0.0
        %2854 = vmatprep.subr.mxu0 0.0
        %2855 = vmatpush1.msra.mxu0 0.0
        %2856 = vmatprep.subr.mxu0 0.0
        %2857 = vmatpush1.msra.mxu0 0.0
        %2858 = vmatprep.subr.mxu0 0.0
        %2859 = vmatpush1.msra.mxu0 0.0
        %2860 = vmatprep.subr.mxu0 0.0
        %2861 = vmatpush1.msra.mxu0 0.0
        %2862 = vmatprep.subr.mxu0 0.0
        %2863 = vmatpush1.msra.mxu0 0.0
        %2864 = vmatprep.subr.mxu0 0.0
        %2865 = vmatpush1.msra.mxu0 0.0
        %2866 = vmatprep.subr.mxu0 0.0
        %2867 = vmatpush1.msra.mxu0 0.0
        %2868 = vmatprep.subr.mxu0 0.0
        %2869 = vmatpush1.msra.mxu0 0.0
        %2870 = vmatprep.subr.mxu0 0.0
        %2871 = vmatpush1.msra.mxu0 0.0
        %2872 = vmatprep.subr.mxu0 0.0
        %2873 = vmatpush1.msra.mxu0 0.0
        %2874 = vmatprep.subr.mxu0 0.0
        %2875 = vmatpush1.msra.mxu0 0.0
        %2876 = vmatprep.subr.mxu0 0.0
        %2877 = vmatpush1.msra.mxu0 0.0
        %2878 = vmatprep.subr.mxu0 0.0
        %2879 = vmatpush1.msra.mxu0 0.0
        %2880 = vmatprep.subr.mxu0 0.0
        %2881 = vmatpush1.msra.mxu0 0.0
        %2882 = vmatprep.subr.mxu0 0.0
        %2883 = vmatpush1.msra.mxu0 0.0
        %2884 = vmatprep.subr.mxu0 0.0
        %2885 = vmatpush1.msra.mxu0 0.0
        %2886 = vmatprep.subr.mxu0 0.0
        %2887 = vmatpush1.msra.mxu0 0.0
        %2888 = vmatprep.subr.mxu0 0.0
        %2889 = vmatpush1.msra.mxu0 0.0
        %2890 = vmatprep.subr.mxu0 0.0
        %2891 = vmatpush1.msra.mxu0 0.0
        %2892 = vmatprep.subr.mxu0 0.0
        %2893 = vmatpush1.msra.mxu0 0.0
        %2894 = vmatprep.subr.mxu0 0.0
        %2895 = vmatpush1.msra.mxu0 0.0
        %2896 = vmatprep.subr.mxu0 0.0
        %2897 = vmatpush1.msra.mxu0 0.0
        %2898 = vmatprep.mubr.f32.mxu0 0.0
        %2899 = vmatmul.mubr.f32.gmra.mrb[0].mxu0 %v1256
        %v2900 = vpop.f32.mrb[0].mxu0
        %v2901 = vadd.f32 0.0, %v2900
        %v2902 = vpop.f32.mrb[0].mxu0
        %2903 = vdwg.mxu0
        %v2905 = vsel %vm508, %v2901, 0
        %2907 = vmatprep.subr.mxu0 0.0
        %2908 = vmatpush1.msra.mxu0 %v1329
        %2909 = vmatprep.subr.mxu0 0.0
        %2910 = vmatpush1.msra.mxu0 0.0
        %2911 = vmatprep.subr.mxu0 0.0
        %2912 = vmatpush1.msra.mxu0 0.0
        %2913 = vmatprep.subr.mxu0 0.0
        %2914 = vmatpush1.msra.mxu0 0.0
        %2915 = vmatprep.subr.mxu0 0.0
        %2916 = vmatpush1.msra.mxu0 0.0
        %2917 = vmatprep.subr.mxu0 0.0
        %2918 = vmatpush1.msra.mxu0 0.0
        %2919 = vmatprep.subr.mxu0 0.0
        %2920 = vmatpush1.msra.mxu0 0.0
        %2921 = vmatprep.subr.mxu0 0.0
        %2922 = vmatpush1.msra.mxu0 0.0
        %2923 = vmatprep.subr.mxu0 0.0
        %2924 = vmatpush1.msra.mxu0 0.0
        %2925 = vmatprep.subr.mxu0 0.0
        %2926 = vmatpush1.msra.mxu0 0.0
        %2927 = vmatprep.subr.mxu0 0.0
        %2928 = vmatpush1.msra.mxu0 0.0
        %2929 = vmatprep.subr.mxu0 0.0
        %2930 = vmatpush1.msra.mxu0 0.0
        %2931 = vmatprep.subr.mxu0 0.0
        %2932 = vmatpush1.msra.mxu0 0.0
        %2933 = vmatprep.subr.mxu0 0.0
        %2934 = vmatpush1.msra.mxu0 0.0
        %2935 = vmatprep.subr.mxu0 0.0
        %2936 = vmatpush1.msra.mxu0 0.0
        %2937 = vmatprep.subr.mxu0 0.0
        %2938 = vmatpush1.msra.mxu0 0.0
        %2939 = vmatprep.subr.mxu0 0.0
        %2940 = vmatpush1.msra.mxu0 0.0
        %2941 = vmatprep.subr.mxu0 0.0
        %2942 = vmatpush1.msra.mxu0 0.0
        %2943 = vmatprep.subr.mxu0 0.0
        %2944 = vmatpush1.msra.mxu0 0.0
        %2945 = vmatprep.subr.mxu0 0.0
        %2946 = vmatpush1.msra.mxu0 0.0
        %2947 = vmatprep.subr.mxu0 0.0
        %2948 = vmatpush1.msra.mxu0 0.0
        %2949 = vmatprep.subr.mxu0 0.0
        %2950 = vmatpush1.msra.mxu0 0.0
        %2951 = vmatprep.subr.mxu0 0.0
        %2952 = vmatpush1.msra.mxu0 0.0
        %2953 = vmatprep.subr.mxu0 0.0
        %2954 = vmatpush1.msra.mxu0 0.0
        %2955 = vmatprep.subr.mxu0 0.0
        %2956 = vmatpush1.msra.mxu0 0.0
        %2957 = vmatprep.subr.mxu0 0.0
        %2958 = vmatpush1.msra.mxu0 0.0
        %2959 = vmatprep.subr.mxu0 0.0
        %2960 = vmatpush1.msra.mxu0 0.0
        %2961 = vmatprep.subr.mxu0 0.0
        %2962 = vmatpush1.msra.mxu0 0.0
        %2963 = vmatprep.subr.mxu0 0.0
        %2964 = vmatpush1.msra.mxu0 0.0
        %2965 = vmatprep.subr.mxu0 0.0
        %2966 = vmatpush1.msra.mxu0 0.0
        %2967 = vmatprep.subr.mxu0 0.0
        %2968 = vmatpush1.msra.mxu0 0.0
        %2969 = vmatprep.subr.mxu0 0.0
        %2970 = vmatpush1.msra.mxu0 0.0
        %2971 = vmatprep.mubr.f32.mxu0 0.0
        %2972 = vmatmul.mubr.f32.gmra.mrb[0].mxu0 %v2905
        %v2973 = vpop.f32.mrb[0].mxu0
        %v2974 = vadd.f32 0.0, %v2973
        %v2975 = vpop.f32.mrb[0].mxu0
        %2976 = vdwg.mxu0
        %v2978 = vsel %vm508, %v2831, 0
        %2980 = vmatprep.subr.mxu0 0.0
        %2981 = vmatpush1.msra.mxu0 %v1252
        %2982 = vmatprep.subr.mxu0 0.0
        %2983 = vmatpush1.msra.mxu0 0.0
        %2984 = vmatprep.subr.mxu0 0.0
        %2985 = vmatpush1.msra.mxu0 0.0
        %2986 = vmatprep.subr.mxu0 0.0
        %2987 = vmatpush1.msra.mxu0 0.0
        %2988 = vmatprep.subr.mxu0 0.0
        %2989 = vmatpush1.msra.mxu0 0.0
        %2990 = vmatprep.subr.mxu0 0.0
        %2991 = vmatpush1.msra.mxu0 0.0
        %2992 = vmatprep.subr.mxu0 0.0
        %2993 = vmatpush1.msra.mxu0 0.0
        %2994 = vmatprep.subr.mxu0 0.0
        %2995 = vmatpush1.msra.mxu0 0.0
        %2996 = vmatprep.subr.mxu0 0.0
        %2997 = vmatpush1.msra.mxu0 0.0
        %2998 = vmatprep.subr.mxu0 0.0
        %2999 = vmatpush1.msra.mxu0 0.0
        %3000 = vmatprep.subr.mxu0 0.0
        %3001 = vmatpush1.msra.mxu0 0.0
        %3002 = vmatprep.subr.mxu0 0.0
        %3003 = vmatpush1.msra.mxu0 0.0
        %3004 = vmatprep.subr.mxu0 0.0
        %3005 = vmatpush1.msra.mxu0 0.0
        %3006 = vmatprep.subr.mxu0 0.0
        %3007 = vmatpush1.msra.mxu0 0.0
        %3008 = vmatprep.subr.mxu0 0.0
        %3009 = vmatpush1.msra.mxu0 0.0
        %3010 = vmatprep.subr.mxu0 0.0
        %3011 = vmatpush1.msra.mxu0 0.0
        %3012 = vmatprep.subr.mxu0 0.0
        %3013 = vmatpush1.msra.mxu0 0.0
        %3014 = vmatprep.subr.mxu0 0.0
        %3015 = vmatpush1.msra.mxu0 0.0
        %3016 = vmatprep.subr.mxu0 0.0
        %3017 = vmatpush1.msra.mxu0 0.0
        %3018 = vmatprep.subr.mxu0 0.0
        %3019 = vmatpush1.msra.mxu0 0.0
        %3020 = vmatprep.subr.mxu0 0.0
        %3021 = vmatpush1.msra.mxu0 0.0
        %3022 = vmatprep.subr.mxu0 0.0
        %3023 = vmatpush1.msra.mxu0 0.0
        %3024 = vmatprep.subr.mxu0 0.0
        %3025 = vmatpush1.msra.mxu0 0.0
        %3026 = vmatprep.subr.mxu0 0.0
        %3027 = vmatpush1.msra.mxu0 0.0
        %3028 = vmatprep.subr.mxu0 0.0
        %3029 = vmatpush1.msra.mxu0 0.0
        %3030 = vmatprep.subr.mxu0 0.0
        %3031 = vmatpush1.msra.mxu0 0.0
        %3032 = vmatprep.subr.mxu0 0.0
        %3033 = vmatpush1.msra.mxu0 0.0
        %3034 = vmatprep.subr.mxu0 0.0
        %3035 = vmatpush1.msra.mxu0 0.0
        %3036 = vmatprep.subr.mxu0 0.0
        %3037 = vmatpush1.msra.mxu0 0.0
        %3038 = vmatprep.subr.mxu0 0.0
        %3039 = vmatpush1.msra.mxu0 0.0
        %3040 = vmatprep.subr.mxu0 0.0
        %3041 = vmatpush1.msra.mxu0 0.0
        %3042 = vmatprep.subr.mxu0 0.0
        %3043 = vmatpush1.msra.mxu0 0.0
        %3044 = vmatprep.mubr.f32.mxu0 0.0
        %3045 = vmatmul.mubr.f32.gmra.mrb[0].mxu0 %v2978
        %v3046 = vpop.f32.mrb[0].mxu0
        %v3047 = vadd.f32 %v2974, %v3046
        %v3048 = vpop.f32.mrb[0].mxu0
        %3049 = vdwg.mxu0
        %3050 = vmatprep.subr.mxu0 0.0
        %3051 = vmatpush1.msra.mxu0 %v2257
        %3052 = vmatprep.subr.mxu0 0.0
        %3053 = vmatpush1.msra.mxu0 %v2425
        %3054 = vmatprep.subr.mxu0 0.0
        %3055 = vmatpush1.msra.mxu0 %v2593
        %3056 = vmatprep.subr.mxu0 0.0
        %3057 = vmatpush1.msra.mxu0 %v2761
        %3058 = vmatprep.subr.mxu0 0.0
        %3059 = vmatpush1.msra.mxu0 0.0
        %3060 = vmatprep.subr.mxu0 0.0
        %3061 = vmatpush1.msra.mxu0 0.0
        %3062 = vmatprep.subr.mxu0 0.0
        %3063 = vmatpush1.msra.mxu0 0.0
        %3064 = vmatprep.subr.mxu0 0.0
        %3065 = vmatpush1.msra.mxu0 0.0
        %3066 = vmatprep.subr.mxu0 0.0
        %3067 = vmatpush1.msra.mxu0 0.0
        %3068 = vmatprep.subr.mxu0 0.0
        %3069 = vmatpush1.msra.mxu0 0.0
        %3070 = vmatprep.subr.mxu0 0.0
        %3071 = vmatpush1.msra.mxu0 0.0
        %3072 = vmatprep.subr.mxu0 0.0
        %3073 = vmatpush1.msra.mxu0 0.0
        %3074 = vmatprep.subr.mxu0 0.0
        %3075 = vmatpush1.msra.mxu0 0.0
        %3076 = vmatprep.subr.mxu0 0.0
        %3077 = vmatpush1.msra.mxu0 0.0
        %3078 = vmatprep.subr.mxu0 0.0
        %3079 = vmatpush1.msra.mxu0 0.0
        %3080 = vmatprep.subr.mxu0 0.0
        %3081 = vmatpush1.msra.mxu0 0.0
        %3082 = vmatprep.subr.mxu0 0.0
        %3083 = vmatpush1.msra.mxu0 0.0
        %3084 = vmatprep.subr.mxu0 0.0
        %3085 = vmatpush1.msra.mxu0 0.0
        %3086 = vmatprep.subr.mxu0 0.0
        %3087 = vmatpush1.msra.mxu0 0.0
        %3088 = vmatprep.subr.mxu0 0.0
        %3089 = vmatpush1.msra.mxu0 0.0
        %3090 = vmatprep.subr.mxu0 0.0
        %3091 = vmatpush1.msra.mxu0 0.0
        %3092 = vmatprep.subr.mxu0 0.0
        %3093 = vmatpush1.msra.mxu0 0.0
        %3094 = vmatprep.subr.mxu0 0.0
        %3095 = vmatpush1.msra.mxu0 0.0
        %3096 = vmatprep.subr.mxu0 0.0
        %3097 = vmatpush1.msra.mxu0 0.0
        %3098 = vmatprep.subr.mxu0 0.0
        %3099 = vmatpush1.msra.mxu0 0.0
        %3100 = vmatprep.subr.mxu0 0.0
        %3101 = vmatpush1.msra.mxu0 0.0
        %3102 = vmatprep.subr.mxu0 0.0
        %3103 = vmatpush1.msra.mxu0 0.0
        %3104 = vmatprep.subr.mxu0 0.0
        %3105 = vmatpush1.msra.mxu0 0.0
        %3106 = vmatprep.subr.mxu0 0.0
        %3107 = vmatpush1.msra.mxu0 0.0
        %3108 = vmatprep.subr.mxu0 0.0
        %3109 = vmatpush1.msra.mxu0 0.0
        %3110 = vmatprep.subr.mxu0 0.0
        %3111 = vmatpush1.msra.mxu0 0.0
        %3112 = vmatprep.subr.mxu0 0.0
        %3113 = vmatpush1.msra.mxu0 0.0
        %3114 = vmatprep.mubr.f32.mxu0 0.0
        %3115 = vmatmul.mubr.f32.gmra.mrb[0].mxu0 %v1479
        %v3116 = vpop.f32.mrb[0].mxu0
        %v3117 = vadd.f32 0.0, %v3116
        %v3118 = vpop.f32.mrb[0].mxu0
        %3119 = vdwg.mxu0
        %v3121 = vsel %vm508, %v3117, 0
        %3123 = vmatprep.subr.mxu0 0.0
        %3124 = vmatpush1.msra.mxu0 %v1552
        %3125 = vmatprep.subr.mxu0 0.0
        %3126 = vmatpush1.msra.mxu0 0.0
        %3127 = vmatprep.subr.mxu0 0.0
        %3128 = vmatpush1.msra.mxu0 0.0
        %3129 = vmatprep.subr.mxu0 0.0
        %3130 = vmatpush1.msra.mxu0 0.0
        %3131 = vmatprep.subr.mxu0 0.0
        %3132 = vmatpush1.msra.mxu0 0.0
        %3133 = vmatprep.subr.mxu0 0.0
        %3134 = vmatpush1.msra.mxu0 0.0
        %3135 = vmatprep.subr.mxu0 0.0
        %3136 = vmatpush1.msra.mxu0 0.0
        %3137 = vmatprep.subr.mxu0 0.0
        %3138 = vmatpush1.msra.mxu0 0.0
        %3139 = vmatprep.subr.mxu0 0.0
        %3140 = vmatpush1.msra.mxu0 0.0
        %3141 = vmatprep.subr.mxu0 0.0
        %3142 = vmatpush1.msra.mxu0 0.0
        %3143 = vmatprep.subr.mxu0 0.0
        %3144 = vmatpush1.msra.mxu0 0.0
        %3145 = vmatprep.subr.mxu0 0.0
        %3146 = vmatpush1.msra.mxu0 0.0
        %3147 = vmatprep.subr.mxu0 0.0
        %3148 = vmatpush1.msra.mxu0 0.0
        %3149 = vmatprep.subr.mxu0 0.0
        %3150 = vmatpush1.msra.mxu0 0.0
        %3151 = vmatprep.subr.mxu0 0.0
        %3152 = vmatpush1.msra.mxu0 0.0
        %3153 = vmatprep.subr.mxu0 0.0
        %3154 = vmatpush1.msra.mxu0 0.0
        %3155 = vmatprep.subr.mxu0 0.0
        %3156 = vmatpush1.msra.mxu0 0.0
        %3157 = vmatprep.subr.mxu0 0.0
        %3158 = vmatpush1.msra.mxu0 0.0
        %3159 = vmatprep.subr.mxu0 0.0
        %3160 = vmatpush1.msra.mxu0 0.0
        %3161 = vmatprep.subr.mxu0 0.0
        %3162 = vmatpush1.msra.mxu0 0.0
        %3163 = vmatprep.subr.mxu0 0.0
        %3164 = vmatpush1.msra.mxu0 0.0
        %3165 = vmatprep.subr.mxu0 0.0
        %3166 = vmatpush1.msra.mxu0 0.0
        %3167 = vmatprep.subr.mxu0 0.0
        %3168 = vmatpush1.msra.mxu0 0.0
        %3169 = vmatprep.subr.mxu0 0.0
        %3170 = vmatpush1.msra.mxu0 0.0
        %3171 = vmatprep.subr.mxu0 0.0
        %3172 = vmatpush1.msra.mxu0 0.0
        %3173 = vmatprep.subr.mxu0 0.0
        %3174 = vmatpush1.msra.mxu0 0.0
        %3175 = vmatprep.subr.mxu0 0.0
        %3176 = vmatpush1.msra.mxu0 0.0
        %3177 = vmatprep.subr.mxu0 0.0
        %3178 = vmatpush1.msra.mxu0 0.0
        %3179 = vmatprep.subr.mxu0 0.0
        %3180 = vmatpush1.msra.mxu0 0.0
        %3181 = vmatprep.subr.mxu0 0.0
        %3182 = vmatpush1.msra.mxu0 0.0
        %3183 = vmatprep.subr.mxu0 0.0
        %3184 = vmatpush1.msra.mxu0 0.0
        %3185 = vmatprep.subr.mxu0 0.0
        %3186 = vmatpush1.msra.mxu0 0.0
        %3187 = vmatprep.mubr.f32.mxu0 0.0
        %3188 = vmatmul.mubr.f32.gmra.mrb[0].mxu0 %v3121
        %v3189 = vpop.f32.mrb[0].mxu0
        %v3190 = vadd.f32 0.0, %v3189
        %v3191 = vpop.f32.mrb[0].mxu0
        %3192 = vdwg.mxu0
        %v3193 = vadd.f32 %v3047, %v3190
        %3194 = vmatprep.subr.mxu0 0.0
        %3195 = vmatpush1.msra.mxu0 %v2257
        %3196 = vmatprep.subr.mxu0 0.0
        %3197 = vmatpush1.msra.mxu0 %v2425
        %3198 = vmatprep.subr.mxu0 0.0
        %3199 = vmatpush1.msra.mxu0 %v2593
        %3200 = vmatprep.subr.mxu0 0.0
        %3201 = vmatpush1.msra.mxu0 %v2761
        %3202 = vmatprep.subr.mxu0 0.0
        %3203 = vmatpush1.msra.mxu0 0.0
        %3204 = vmatprep.subr.mxu0 0.0
        %3205 = vmatpush1.msra.mxu0 0.0
        %3206 = vmatprep.subr.mxu0 0.0
        %3207 = vmatpush1.msra.mxu0 0.0
        %3208 = vmatprep.subr.mxu0 0.0
        %3209 = vmatpush1.msra.mxu0 0.0
        %3210 = vmatprep.subr.mxu0 0.0
        %3211 = vmatpush1.msra.mxu0 0.0
        %3212 = vmatprep.subr.mxu0 0.0
        %3213 = vmatpush1.msra.mxu0 0.0
        %3214 = vmatprep.subr.mxu0 0.0
        %3215 = vmatpush1.msra.mxu0 0.0
        %3216 = vmatprep.subr.mxu0 0.0
        %3217 = vmatpush1.msra.mxu0 0.0
        %3218 = vmatprep.subr.mxu0 0.0
        %3219 = vmatpush1.msra.mxu0 0.0
        %3220 = vmatprep.subr.mxu0 0.0
        %3221 = vmatpush1.msra.mxu0 0.0
        %3222 = vmatprep.subr.mxu0 0.0
        %3223 = vmatpush1.msra.mxu0 0.0
        %3224 = vmatprep.subr.mxu0 0.0
        %3225 = vmatpush1.msra.mxu0 0.0
        %3226 = vmatprep.subr.mxu0 0.0
        %3227 = vmatpush1.msra.mxu0 0.0
        %3228 = vmatprep.subr.mxu0 0.0
        %3229 = vmatpush1.msra.mxu0 0.0
        %3230 = vmatprep.subr.mxu0 0.0
        %3231 = vmatpush1.msra.mxu0 0.0
        %3232 = vmatprep.subr.mxu0 0.0
        %3233 = vmatpush1.msra.mxu0 0.0
        %3234 = vmatprep.subr.mxu0 0.0
        %3235 = vmatpush1.msra.mxu0 0.0
        %3236 = vmatprep.subr.mxu0 0.0
        %3237 = vmatpush1.msra.mxu0 0.0
        %3238 = vmatprep.subr.mxu0 0.0
        %3239 = vmatpush1.msra.mxu0 0.0
        %3240 = vmatprep.subr.mxu0 0.0
        %3241 = vmatpush1.msra.mxu0 0.0
        %3242 = vmatprep.subr.mxu0 0.0
        %3243 = vmatpush1.msra.mxu0 0.0
        %3244 = vmatprep.subr.mxu0 0.0
        %3245 = vmatpush1.msra.mxu0 0.0
        %3246 = vmatprep.subr.mxu0 0.0
        %3247 = vmatpush1.msra.mxu0 0.0
        %3248 = vmatprep.subr.mxu0 0.0
        %3249 = vmatpush1.msra.mxu0 0.0
        %3250 = vmatprep.subr.mxu0 0.0
        %3251 = vmatpush1.msra.mxu0 0.0
        %3252 = vmatprep.subr.mxu0 0.0
        %3253 = vmatpush1.msra.mxu0 0.0
        %3254 = vmatprep.subr.mxu0 0.0
        %3255 = vmatpush1.msra.mxu0 0.0
        %3256 = vmatprep.subr.mxu0 0.0
        %3257 = vmatpush1.msra.mxu0 0.0
        %3258 = vmatprep.mubr.f32.mxu0 0.0
        %3259 = vmatmul.mubr.f32.gmra.mrb[0].mxu0 %v1630
        %v3260 = vpop.f32.mrb[0].mxu0
        %v3261 = vadd.f32 0.0, %v3260
        %v3262 = vpop.f32.mrb[0].mxu0
        %3263 = vdwg.mxu0
        %v3265 = vsel %vm508, %v3261, 0
        %3267 = vmatprep.subr.mxu0 0.0
        %3268 = vmatpush1.msra.mxu0 %v1703
        %3269 = vmatprep.subr.mxu0 0.0
        %3270 = vmatpush1.msra.mxu0 0.0
        %3271 = vmatprep.subr.mxu0 0.0
        %3272 = vmatpush1.msra.mxu0 0.0
        %3273 = vmatprep.subr.mxu0 0.0
        %3274 = vmatpush1.msra.mxu0 0.0
        %3275 = vmatprep.subr.mxu0 0.0
        %3276 = vmatpush1.msra.mxu0 0.0
        %3277 = vmatprep.subr.mxu0 0.0
        %3278 = vmatpush1.msra.mxu0 0.0
        %3279 = vmatprep.subr.mxu0 0.0
        %3280 = vmatpush1.msra.mxu0 0.0
        %3281 = vmatprep.subr.mxu0 0.0
        %3282 = vmatpush1.msra.mxu0 0.0
        %3283 = vmatprep.subr.mxu0 0.0
        %3284 = vmatpush1.msra.mxu0 0.0
        %3285 = vmatprep.subr.mxu0 0.0
        %3286 = vmatpush1.msra.mxu0 0.0
        %3287 = vmatprep.subr.mxu0 0.0
        %3288 = vmatpush1.msra.mxu0 0.0
        %3289 = vmatprep.subr.mxu0 0.0
        %3290 = vmatpush1.msra.mxu0 0.0
        %3291 = vmatprep.subr.mxu0 0.0
        %3292 = vmatpush1.msra.mxu0 0.0
        %3293 = vmatprep.subr.mxu0 0.0
        %3294 = vmatpush1.msra.mxu0 0.0
        %3295 = vmatprep.subr.mxu0 0.0
        %3296 = vmatpush1.msra.mxu0 0.0
        %3297 = vmatprep.subr.mxu0 0.0
        %3298 = vmatpush1.msra.mxu0 0.0
        %3299 = vmatprep.subr.mxu0 0.0
        %3300 = vmatpush1.msra.mxu0 0.0
        %3301 = vmatprep.subr.mxu0 0.0
        %3302 = vmatpush1.msra.mxu0 0.0
        %3303 = vmatprep.subr.mxu0 0.0
        %3304 = vmatpush1.msra.mxu0 0.0
        %3305 = vmatprep.subr.mxu0 0.0
        %3306 = vmatpush1.msra.mxu0 0.0
        %3307 = vmatprep.subr.mxu0 0.0
        %3308 = vmatpush1.msra.mxu0 0.0
        %3309 = vmatprep.subr.mxu0 0.0
        %3310 = vmatpush1.msra.mxu0 0.0
        %3311 = vmatprep.subr.mxu0 0.0
        %3312 = vmatpush1.msra.mxu0 0.0
        %3313 = vmatprep.subr.mxu0 0.0
        %3314 = vmatpush1.msra.mxu0 0.0
        %3315 = vmatprep.subr.mxu0 0.0
        %3316 = vmatpush1.msra.mxu0 0.0
        %3317 = vmatprep.subr.mxu0 0.0
        %3318 = vmatpush1.msra.mxu0 0.0
        %3319 = vmatprep.subr.mxu0 0.0
        %3320 = vmatpush1.msra.mxu0 0.0
        %3321 = vmatprep.subr.mxu0 0.0
        %3322 = vmatpush1.msra.mxu0 0.0
        %3323 = vmatprep.subr.mxu0 0.0
        %3324 = vmatpush1.msra.mxu0 0.0
        %3325 = vmatprep.subr.mxu0 0.0
        %3326 = vmatpush1.msra.mxu0 0.0
        %3327 = vmatprep.subr.mxu0 0.0
        %3328 = vmatpush1.msra.mxu0 0.0
        %3329 = vmatprep.subr.mxu0 0.0
        %3330 = vmatpush1.msra.mxu0 0.0
        %3331 = vmatprep.mubr.f32.mxu0 0.0
        %3332 = vmatmul.mubr.f32.gmra.mrb[0].mxu0 %v3265
        %v3333 = vpop.f32.mrb[0].mxu0
        %v3334 = vadd.f32 0.0, %v3333
        %v3335 = vpop.f32.mrb[0].mxu0
        %3336 = vdwg.mxu0
        %v3337 = vadd.f32 %v3193, %v3334
        %v3338 = vadd.f32 %v1982, %v3337
        %v3339 = vsel %vm430, %v3338, 0.0
        %3340 = vadd.xlane.f32.xlu0 %v3339
        %v3341 = vpop.xlane.xlu0 %3340
        %v3342 = vmul.f32 %v3341, %v1782
        %v3343 = vsub.f32 %v3338, %v3342
        %v3344 = vmul.f32 %v3343, %v3343
        %v3345 = vsel %vm430, %v3344, 0.0
        %3346 = vadd.xlane.f32.xlu0 %v3345
        %v3347 = vpop.xlane.xlu0 %3346
        %v3348 = vmul.f32 %v3347, %v1782
        %v3349 = vadd.f32 %v3348, 1e-05
        %v3350 = vrsqrt.pop %v3349
        %v3351 = vmul.f32 %v3343, %v3350
        %v3353 = vlaneseq
        %v3354 = vshrl.u32 %v3353, 7
        %v3355 = vsub.s32 0, %v3354
        %v3356 = vrot.slane %v2009, %v3355
        %v3358 = vmul.f32 %v3356, %v3351
        %v3360 = vlaneseq
        %v3361 = vshrl.u32 %v3360, 7
        %v3362 = vsub.s32 0, %v3361
        %v3363 = vrot.slane %v2011, %v3362
        %v3365 = vadd.f32 %v3358, %v3363
        %v3367 = vlaneseq
        %v3368 = vshrl.u32 %v3367, 7
        %v3369 = vsub.s32 0, %v3368
        %v3370 = vrot.slane %v1996, %v3369
        %v3373 = vsel %vm430, %v3365, 0
        %3375 = vmatprep.subr.mxu0 0.0
        %3376 = vmatpush1.msra.mxu0 %v1991
        %3377 = vmatprep.subr.mxu0 0.0
        %3378 = vmatpush1.msra.mxu0 %v1992
        %3379 = vmatprep.subr.mxu0 0.0
        %3380 = vmatpush1.msra.mxu0 %v1993
        %3381 = vmatprep.subr.mxu0 0.0
        %3382 = vmatpush1.msra.mxu0 %v1994
        %3383 = vmatprep.subr.mxu0 0.0
        %3384 = vmatpush1.msra.mxu0 0.0
        %3385 = vmatprep.subr.mxu0 0.0
        %3386 = vmatpush1.msra.mxu0 0.0
        %3387 = vmatprep.subr.mxu0 0.0
        %3388 = vmatpush1.msra.mxu0 0.0
        %3389 = vmatprep.subr.mxu0 0.0
        %3390 = vmatpush1.msra.mxu0 0.0
        %3391 = vmatprep.subr.mxu0 0.0
        %3392 = vmatpush1.msra.mxu0 0.0
        %3393 = vmatprep.subr.mxu0 0.0
        %3394 = vmatpush1.msra.mxu0 0.0
        %3395 = vmatprep.subr.mxu0 0.0
        %3396 = vmatpush1.msra.mxu0 0.0
        %3397 = vmatprep.subr.mxu0 0.0
        %3398 = vmatpush1.msra.mxu0 0.0
        %3399 = vmatprep.subr.mxu0 0.0
        %3400 = vmatpush1.msra.mxu0 0.0
        %3401 = vmatprep.subr.mxu0 0.0
        %3402 = vmatpush1.msra.mxu0 0.0
        %3403 = vmatprep.subr.mxu0 0.0
        %3404 = vmatpush1.msra.mxu0 0.0
        %3405 = vmatprep.subr.mxu0 0.0
        %3406 = vmatpush1.msra.mxu0 0.0
        %3407 = vmatprep.subr.mxu0 0.0
        %3408 = vmatpush1.msra.mxu0 0.0
        %3409 = vmatprep.subr.mxu0 0.0
        %3410 = vmatpush1.msra.mxu0 0.0
        %3411 = vmatprep.subr.mxu0 0.0
        %3412 = vmatpush1.msra.mxu0 0.0
        %3413 = vmatprep.subr.mxu0 0.0
        %3414 = vmatpush1.msra.mxu0 0.0
        %3415 = vmatprep.subr.mxu0 0.0
        %3416 = vmatpush1.msra.mxu0 0.0
        %3417 = vmatprep.subr.mxu0 0.0
        %3418 = vmatpush1.msra.mxu0 0.0
        %3419 = vmatprep.subr.mxu0 0.0
        %3420 = vmatpush1.msra.mxu0 0.0
        %3421 = vmatprep.subr.mxu0 0.0
        %3422 = vmatpush1.msra.mxu0 0.0
        %3423 = vmatprep.subr.mxu0 0.0
        %3424 = vmatpush1.msra.mxu0 0.0
        %3425 = vmatprep.subr.mxu0 0.0
        %3426 = vmatpush1.msra.mxu0 0.0
        %3427 = vmatprep.subr.mxu0 0.0
        %3428 = vmatpush1.msra.mxu0 0.0
        %3429 = vmatprep.subr.mxu0 0.0
        %3430 = vmatpush1.msra.mxu0 0.0
        %3431 = vmatprep.subr.mxu0 0.0
        %3432 = vmatpush1.msra.mxu0 0.0
        %3433 = vmatprep.subr.mxu0 0.0
        %3434 = vmatpush1.msra.mxu0 0.0
        %3435 = vmatprep.subr.mxu0 0.0
        %3436 = vmatpush1.msra.mxu0 0.0
        %3437 = vmatprep.subr.mxu0 0.0
        %3438 = vmatpush1.msra.mxu0 0.0
        %3439 = vmatprep.mubr.f32.mxu0 0.0
        %3440 = vmatmul.mubr.f32.gmra.mrb[0].mxu0 %v3373
        %v3441 = vpop.f32.mrb[0].mxu0
        %v3442 = vadd.f32 %v3370, %v3441
        %v3443 = vpop.f32.mrb[0].mxu0
        %3444 = vdwg.mxu0
        %v3445 = vmax.f32 %v3442, 0.0
        %v3447 = vlaneseq
        %v3448 = vshrl.u32 %v3447, 7
        %v3449 = vsub.s32 0, %v3448
        %v3450 = vrot.slane %v2007, %v3449
        %v3453 = vsel %vm1893, %v3445, 0
        %3455 = vmatprep.subr.mxu0 0.0
        %3456 = vmatpush1.msra.mxu0 %v1998
        %3457 = vmatprep.subr.mxu0 0.0
        %3458 = vmatpush1.msra.mxu0 %v1999
        %3459 = vmatprep.subr.mxu0 0.0
        %3460 = vmatpush1.msra.mxu0 %v2000
        %3461 = vmatprep.subr.mxu0 0.0
        %3462 = vmatpush1.msra.mxu0 %v2001
        %3463 = vmatprep.subr.mxu0 0.0
        %3464 = vmatpush1.msra.mxu0 %v2002
        %3465 = vmatprep.subr.mxu0 0.0
        %3466 = vmatpush1.msra.mxu0 %v2003
        %3467 = vmatprep.subr.mxu0 0.0
        %3468 = vmatpush1.msra.mxu0 %v2004
        %3469 = vmatprep.subr.mxu0 0.0
        %3470 = vmatpush1.msra.mxu0 %v2005
        %3471 = vmatprep.subr.mxu0 0.0
        %3472 = vmatpush1.msra.mxu0 0.0
        %3473 = vmatprep.subr.mxu0 0.0
        %3474 = vmatpush1.msra.mxu0 0.0
        %3475 = vmatprep.subr.mxu0 0.0
        %3476 = vmatpush1.msra.mxu0 0.0
        %3477 = vmatprep.subr.mxu0 0.0
        %3478 = vmatpush1.msra.mxu0 0.0
        %3479 = vmatprep.subr.mxu0 0.0
        %3480 = vmatpush1.msra.mxu0 0.0
        %3481 = vmatprep.subr.mxu0 0.0
        %3482 = vmatpush1.msra.mxu0 0.0
        %3483 = vmatprep.subr.mxu0 0.0
        %3484 = vmatpush1.msra.mxu0 0.0
        %3485 = vmatprep.subr.mxu0 0.0
        %3486 = vmatpush1.msra.mxu0 0.0
        %3487 = vmatprep.subr.mxu0 0.0
        %3488 = vmatpush1.msra.mxu0 0.0
        %3489 = vmatprep.subr.mxu0 0.0
        %3490 = vmatpush1.msra.mxu0 0.0
        %3491 = vmatprep.subr.mxu0 0.0
        %3492 = vmatpush1.msra.mxu0 0.0
        %3493 = vmatprep.subr.mxu0 0.0
        %3494 = vmatpush1.msra.mxu0 0.0
        %3495 = vmatprep.subr.mxu0 0.0
        %3496 = vmatpush1.msra.mxu0 0.0
        %3497 = vmatprep.subr.mxu0 0.0
        %3498 = vmatpush1.msra.mxu0 0.0
        %3499 = vmatprep.subr.mxu0 0.0
        %3500 = vmatpush1.msra.mxu0 0.0
        %3501 = vmatprep.subr.mxu0 0.0
        %3502 = vmatpush1.msra.mxu0 0.0
        %3503 = vmatprep.subr.mxu0 0.0
        %3504 = vmatpush1.msra.mxu0 0.0
        %3505 = vmatprep.subr.mxu0 0.0
        %3506 = vmatpush1.msra.mxu0 0.0
        %3507 = vmatprep.subr.mxu0 0.0
        %3508 = vmatpush1.msra.mxu0 0.0
        %3509 = vmatprep.subr.mxu0 0.0
        %3510 = vmatpush1.msra.mxu0 0.0
        %3511 = vmatprep.subr.mxu0 0.0
        %3512 = vmatpush1.msra.mxu0 0.0
        %3513 = vmatprep.subr.mxu0 0.0
        %3514 = vmatpush1.msra.mxu0 0.0
        %3515 = vmatprep.subr.mxu0 0.0
        %3516 = vmatpush1.msra.mxu0 0.0
        %3517 = vmatprep.subr.mxu0 0.0
        %3518 = vmatpush1.msra.mxu0 0.0
        %3519 = vmatprep.mubr.f32.mxu0 0.0
        %3520 = vmatmul.mubr.f32.gmra.mrb[0].mxu0 %v3453
        %v3521 = vpop.f32.mrb[0].mxu0
        %v3522 = vadd.f32 %v3450, %v3521
        %v3523 = vpop.f32.mrb[0].mxu0
        %3524 = vdwg.mxu0
        %v3525 = vadd.f32 %v3522, %v3365
        %v3526 = vsel %vm430, %v3525, 0.0
        %3527 = vadd.xlane.f32.xlu0 %v3526
        %v3528 = vpop.xlane.xlu0 %3527
        %v3529 = vmul.f32 %v3528, %v1782
        %v3530 = vsub.f32 %v3525, %v3529
        %v3531 = vmul.f32 %v3530, %v3530
        %v3532 = vsel %vm430, %v3531, 0.0
        %3533 = vadd.xlane.f32.xlu0 %v3532
        %v3534 = vpop.xlane.xlu0 %3533
        %v3535 = vmul.f32 %v3534, %v1782
        %v3536 = vadd.f32 %v3535, 1e-05
        %v3537 = vrsqrt.pop %v3536
        %v3538 = vmul.f32 %v3530, %v3537
        %v3539 = vmul.f32 %v3356, %v3538
        %v3540 = vadd.f32 %v3539, %v3363
        %3541 = vst.msk [vmem:[%s401] sm:$0xff] %vm430, %v3540
        %s3542 = sand.u32 %s272, 1
        %s3543 = scalar_lea.sflag [#allocation4], %s3542
        %s3544 = sand.u32 %s272, 1
        %s3545 = smul.addr %s3544, 8
        %s3546 = scalar_lea.vmem [#allocation5], %s3545
        // Predicated region
        $region69: #{tpu_custom_call.1} parent=63 // pred_check
          %p3547 = pneg %p282
        $region70: #{tpu_custom_call.1} parent=63 // pred_check_branch
          %3549 = sbr.rel (%p3547) target = $region72
        $region71: #{tpu_custom_call.1} parent=63 // pred_region
          %s3551 = ssub.s32 128, 128
          %3552 = vsyncadd %s3543, %s3551
          %s3553 = smul.addr %s28, 128
          %s3554 = scalar_lea.hbm %s11, %s3553
          %s3556 = sshll.u32 %s3546, 4
          %s3557 = int_to_ptr.vmem [resolvable:$true] %s3556
          %3559 = dma.vmem_to_hbm [thread:$0]  %s3557, 128, %s3554, %s3543
        $region72: #{tpu_custom_call.1} parent=63 // pred_fallthru
          _
      $region64: #{tpu_custom_call.1} parent=5 // pred_fallthru
        _
      %p3560 = scmp.le.s32.totalorder 2, %s23
      // Predicated region
      $region73: #{tpu_custom_call.1} parent=5 // pred_check
        %p3561 = pneg %p3560
      $region74: #{tpu_custom_call.1} parent=5 // pred_check_branch
        %3563 = sbr.rel (%p3561) target = $region76
      $region75: #{tpu_custom_call.1} parent=5 // pred_region
        %s3564 = ssub.s32 %s23, 2
        // Predicated region
        $region77: #{tpu_custom_call.1} parent=75 // pred_check
          %p3565 = pneg %p288
        $region78: #{tpu_custom_call.1} parent=75 // pred_check_branch
          %3567 = sbr.rel (%p3565) target = $region80
        $region79: #{tpu_custom_call.1} parent=75 // pred_region
          %s3568 = sand.u32 %s273, 1
          %s3569 = scalar_lea.sflag [#allocation4], %s3568
          %s3570 = sand.u32 %s273, 1
          %s3571 = smul.addr %s3570, 8
          %s3572 = scalar_lea.vmem [#allocation5], %s3571
          %3573 = dma.done %s3569, 128
        $region80: #{tpu_custom_call.1} parent=75 // pred_fallthru
          _
      $region76: #{tpu_custom_call.1} parent=5 // pred_fallthru
        _
    $region6: #{tpu_custom_call.1} parent=1 // loop_footer
      %s27 = sadd.s32 1, %s23
    $region7: #{tpu_custom_call.1} parent=1 // loop_footer_branch
      %22 = sbr.rel target = $region3
    $region8: #{tpu_custom_call.1} parent=1 // loop_exit
      _
    %3574 = vsyncpa [#allocation3], 1
    %s3575 = scalar_lea.sflag [#allocation3], 1
    %3576 = vsyncpa %s3575, 1
    %3577 = vsyncpa [#allocation4], 1
    %s3578 = scalar_lea.sflag [#allocation4], 1
    %3579 = vsyncpa %s3578, 1

</llo_original>
